<compile_context>
chip_gen: v5e
topology: v5e:2x2
jax: 0.10.0
libtpu: 0.0.40
codegen_flags: <defaults>
</compile_context>

<pallas_src>
from functools import partial

import numpy as np
import jax
import jax.numpy as jnp
from jax.experimental import pallas as pl
from jax.experimental.pallas import tpu as pltpu


TOKEN_PAD = 16  # pad token counts to a multiple of this (bf16 sublane tile)


# ----------------------------------------------------------------------------
# sin-cos positional embedding (same math as the PyTorch reference, host-side)
# ----------------------------------------------------------------------------
def _get_1d_sincos(embed_dim, pos):
    omega = np.arange(embed_dim // 2, dtype=np.float64)
    omega /= embed_dim / 2.0
    omega = 1.0 / 10000 ** omega
    pos = pos.reshape(-1)
    out = np.einsum("m,d->md", pos, omega)
    return np.concatenate([np.sin(out), np.cos(out)], axis=1)


def get_2d_sincos_pos_embed(embed_dim, grid_size, cls_token=False):
    gH, gW = grid_size
    grid_h = np.arange(gH, dtype=np.float32)
    grid_w = np.arange(gW, dtype=np.float32)
    grid = np.meshgrid(grid_w, grid_h)
    grid = np.stack(grid, axis=0).reshape([2, 1, gH, gW])
    emb_h = _get_1d_sincos(embed_dim // 2, grid[0])
    emb_w = _get_1d_sincos(embed_dim // 2, grid[1])
    pos = np.concatenate([emb_h, emb_w], axis=1)
    if cls_token:
        pos = np.concatenate([np.zeros([1, embed_dim]), pos], axis=0)
    return pos.astype(np.float32)


# ----------------------------------------------------------------------------
# small helpers
# ----------------------------------------------------------------------------
def _round_up(n, m):
    return ((n + m - 1) // m) * m


def _row_tile(m, target=512):
    """Pick a row-tile that divides m; full m when small, multiple of 8 when big."""
    if m <= target:
        return m
    t = (target // 8) * 8
    while t >= 8:
        if m % t == 0:
            return t
        t -= 8
    return m


def _ln_f32(x, g, b, eps=1e-5):
    """LayerNorm in f32 (torch.nn.LayerNorm default eps)."""
    mean = jnp.mean(x, axis=-1, keepdims=True)
    xc = x - mean
    var = jnp.mean(xc * xc, axis=-1, keepdims=True)
    return xc * jax.lax.rsqrt(var + eps) * g + b


# ----------------------------------------------------------------------------
# Pallas kernels
# ----------------------------------------------------------------------------
def _patch_embed_kernel(x_ref, w_ref, b_ref, pos_ref, o_ref):
    # patchified pixels (1, L, P) @ (P, D) + bias + pos_embed -> (1, L, D)
    x = x_ref[0].astype(w_ref.dtype)                       # bf16 (L, P)
    y = jnp.dot(x, w_ref[...], preferred_element_type=jnp.float32)
    y = y + b_ref[...] + pos_ref[0]
    o_ref[0] = y.astype(o_ref.dtype)


def pallas_patch_embed(patches, w, b, pos):
    B, L, P = patches.shape
    D = w.shape[1]
    return pl.pallas_call(
        _patch_embed_kernel,
        out_shape=jax.ShapeDtypeStruct((B, L, D), jnp.bfloat16),
        grid=(B,),
        in_specs=[pl.BlockSpec((1, L, P), lambda i: (i, 0, 0)),
                  pl.BlockSpec((P, D), lambda i: (0, 0)),
                  pl.BlockSpec((1, D), lambda i: (0, 0)),
                  pl.BlockSpec((1, L, D), lambda i: (0, 0, 0))],
        out_specs=pl.BlockSpec((1, L, D), lambda i: (i, 0, 0)),
        compiler_params=pltpu.CompilerParams(dimension_semantics=("parallel",)),
    )(patches, w, b, pos)


def _fused_block_kernel(x_ref, ln1g_ref, ln1b_ref, qkvw_ref, qkvb_ref,
                        projw_ref, projb_ref, ln2g_ref, ln2b_ref,
                        fc1w_ref, fc1b_ref, fc2w_ref, fc2b_ref, o_ref,
                        *, num_heads, head_dim, n_valid, scale):
    """One full timm-style ViT block for one batch element, fully VMEM-resident."""
    x = x_ref[0].astype(jnp.float32)                       # (Lp, D) f32
    Lp, D = x.shape
    cdt = qkvw_ref.dtype                                   # compute dtype (bf16)

    # --- LN1 -> QKV (bf16 MXU, f32 accumulate) --------------------------------
    h = _ln_f32(x, ln1g_ref[...], ln1b_ref[...])
    qkv = jnp.dot(h.astype(cdt), qkvw_ref[...],
                  preferred_element_type=jnp.float32) + qkvb_ref[...]   # (Lp, 3D)

    # scale folded into Q (O(Lp*D) instead of O(Lp*Lp)); single cast per operand
    qs = (qkv[:, :D] * jnp.float32(scale)).astype(cdt)     # (Lp, D) bf16
    kc = qkv[:, D:2 * D].astype(cdt)                       # (Lp, D) bf16
    vc = qkv[:, 2 * D:3 * D].astype(cdt)                   # (Lp, D) bf16

    # additive key-mask bias (only materialised when padding exists)
    if n_valid < Lp:
        key_ok = jax.lax.broadcasted_iota(jnp.int32, (1, Lp), 1) < n_valid
        neg_bias = jnp.where(key_ok, jnp.float32(0.0), jnp.float32(-1e30))
    else:
        neg_bias = None

    # --- multi-head attention (static unroll over heads) ----------------------
    heads = []
    for hh in range(num_heads):
        q = qs[:, hh * head_dim:(hh + 1) * head_dim]
        k = kc[:, hh * head_dim:(hh + 1) * head_dim]
        v = vc[:, hh * head_dim:(hh + 1) * head_dim]
        s = jax.lax.dot_general(q, k, (((1,), (1,)), ((), ())),
                                preferred_element_type=jnp.float32)     # (Lp, Lp)
        if neg_bias is not None:
            s = s + neg_bias
        s = s - jnp.max(s, axis=-1, keepdims=True)
        e = jnp.exp(s)
        pr = e * pl.reciprocal(jnp.sum(e, axis=-1, keepdims=True), approx=True)
        heads.append(jnp.dot(pr.astype(cdt), v,
                             preferred_element_type=jnp.float32))
    attn = jnp.concatenate(heads, axis=-1)                 # lane-dense (Lp, D)

    # --- attention proj + residual (fused epilogue) ----------------------------
    x = x + jnp.dot(attn.astype(cdt), projw_ref[...],
                    preferred_element_type=jnp.float32) + projb_ref[...]

    # --- LN2 -> MLP (exact-erf GELU) + residual --------------------------------
    h2 = _ln_f32(x, ln2g_ref[...], ln2b_ref[...])
    hid = jnp.dot(h2.astype(cdt), fc1w_ref[...],
                  preferred_element_type=jnp.float32) + fc1b_ref[...]
    hid = 0.5 * hid * (1.0 + jax.lax.erf(hid * jnp.float32(0.7071067811865476)))
    x = x + jnp.dot(hid.astype(cdt), fc2w_ref[...],
                    preferred_element_type=jnp.float32) + fc2b_ref[...]

    o_ref[0] = x.astype(o_ref.dtype)


def pallas_vit_block(x, p, num_heads, n_valid):
    """x: (B, Lp, D) bf16 -> (B, Lp, D) bf16; one pallas_call per block."""
    B, Lp, D = x.shape
    Dh = D // num_heads

    def wspec(arr):
        nd = arr.ndim
        return pl.BlockSpec(arr.shape, lambda b, _nd=nd: (0,) * _nd)

    tok_spec = pl.BlockSpec((1, Lp, D), lambda b: (b, 0, 0))
    args = (x, p["ln1_g"], p["ln1_b"], p["qkv_w"], p["qkv_b"],
            p["proj_w"], p["proj_b"], p["ln2_g"], p["ln2_b"],
            p["fc1_w"], p["fc1_b"], p["fc2_w"], p["fc2_b"])
    kern = partial(_fused_block_kernel, num_heads=num_heads, head_dim=Dh,
                   n_valid=n_valid, scale=float(Dh) ** -0.5)
    return pl.pallas_call(
        kern,
        out_shape=jax.ShapeDtypeStruct((B, Lp, D), x.dtype),
        grid=(B,),
        in_specs=[tok_spec] + [wspec(a) for a in args[1:]],
        out_specs=tok_spec,
        compiler_params=pltpu.CompilerParams(
            dimension_semantics=("parallel",),
            vmem_limit_bytes=32 * 1024 * 1024),   # fits the v7x 64 MiB budget
    )(*args)


def _ln_linear_kernel(x_ref, g_ref, b_ref, w_ref, bias_ref, o_ref):
    # fused LayerNorm -> Linear  (used for enc.norm+decoder_embed and
    # dec.norm+decoder_pred), LN stats in f32, bf16 MXU matmul, f32 accumulate.
    x = x_ref[...].astype(jnp.float32)
    h = _ln_f32(x, g_ref[...], b_ref[...])
    y = jnp.dot(h.astype(w_ref.dtype), w_ref[...],
                preferred_element_type=jnp.float32) + bias_ref[...]
    o_ref[...] = y.astype(o_ref.dtype)


def pallas_ln_linear(x2d, g, b, w, bias, out_dtype):
    M, K = x2d.shape
    N = w.shape[1]
    tm = _row_tile(M)
    return pl.pallas_call(
        _ln_linear_kernel,
        out_shape=jax.ShapeDtypeStruct((M, N), out_dtype),
        grid=(M // tm,),
        in_specs=[pl.BlockSpec((tm, K), lambda i: (i, 0)),
                  pl.BlockSpec((1, K), lambda i: (0, 0)),
                  pl.BlockSpec((1, K), lambda i: (0, 0)),
                  pl.BlockSpec((K, N), lambda i: (0, 0)),
                  pl.BlockSpec((1, N), lambda i: (0, 0))],
        out_specs=pl.BlockSpec((tm, N), lambda i: (i, 0)),
        compiler_params=pltpu.CompilerParams(dimension_semantics=("parallel",)),
    )(x2d, g, b, w, bias)


def _layernorm_kernel(x_ref, g_ref, b_ref, o_ref):
    x = x_ref[...].astype(jnp.float32)
    o_ref[...] = _ln_f32(x, g_ref[...], b_ref[...]).astype(o_ref.dtype)


def pallas_layernorm(x2d, g, b, out_dtype=jnp.float32):
    M, K = x2d.shape
    tm = _row_tile(M)
    return pl.pallas_call(
        _layernorm_kernel,
        out_shape=jax.ShapeDtypeStruct((M, K), out_dtype),
        grid=(M // tm,),
        in_specs=[pl.BlockSpec((tm, K), lambda i: (i, 0)),
                  pl.BlockSpec((1, K), lambda i: (0, 0)),
                  pl.BlockSpec((1, K), lambda i: (0, 0))],
        out_specs=pl.BlockSpec((tm, K), lambda i: (i, 0)),
        compiler_params=pltpu.CompilerParams(dimension_semantics=("parallel",)),
    )(x2d, g, b)


# ----------------------------------------------------------------------------
# Parameter initialization (deterministic, synthetic). Matmul weights in bf16.
# ----------------------------------------------------------------------------
def _init_block(key, D, hidden):
    ks = jax.random.split(key, 4)
    std = 0.02
    f32, bf16 = jnp.float32, jnp.bfloat16
    return dict(
        ln1_g=jnp.ones((1, D), f32), ln1_b=jnp.zeros((1, D), f32),
        qkv_w=(jax.random.normal(ks[0], (D, 3 * D), f32) * std).astype(bf16),
        qkv_b=jnp.zeros((1, 3 * D), f32),
        proj_w=(jax.random.normal(ks[1], (D, D), f32) * std).astype(bf16),
        proj_b=jnp.zeros((1, D), f32),
        ln2_g=jnp.ones((1, D), f32), ln2_b=jnp.zeros((1, D), f32),
        fc1_w=(jax.random.normal(ks[2], (D, hidden), f32) * std).astype(bf16),
        fc1_b=jnp.zeros((1, hidden), f32),
        fc2_w=(jax.random.normal(ks[3], (hidden, D), f32) * std).astype(bf16),
        fc2_b=jnp.zeros((1, D), f32),
    )


def init_params(key, cfg):
    D = cfg["embed_dim"]
    Dd = cfg["decoder_embed_dim"]
    gH, gW = cfg["grid_size"]
    P = cfg["patch_size"][0] * cfg["patch_size"][1] * cfg["in_chans"]
    hidden = int(D * cfg["mlp_ratio"])
    dhidden = int(Dd * cfg["mlp_ratio"])
    n_keys = 5 + cfg["depth"] * 2 + cfg["decoder_depth"]
    ks = list(jax.random.split(key, n_keys))
    std = 0.02
    f32, bf16 = jnp.float32, jnp.bfloat16

    params = dict(
        # patch-embed conv (kernel==stride) as a linear layer on (ph,pw,C) patches
        patch_w=(jax.random.normal(ks[0], (P, D), f32) * std).astype(bf16),
        patch_b=jnp.zeros((1, D), f32),
        cls_token=(jax.random.normal(ks[1], (1, 1, D), f32) * std),
        mask_token=(jax.random.normal(ks[2], (1, 1, Dd), f32) * std),
        pos_embed=jnp.asarray(
            get_2d_sincos_pos_embed(D, (gH, gW), cls_token=True))[None],
        dec_pos_embed=jnp.asarray(
            get_2d_sincos_pos_embed(Dd, (gH, gW), cls_token=True))[None],
        norm_g=jnp.ones((1, D), f32), norm_b=jnp.zeros((1, D), f32),
        dec_embed_w=(jax.random.normal(ks[3], (D, Dd), f32) * std).astype(bf16),
        dec_embed_b=jnp.zeros((1, Dd), f32),
        dec_norm_g=jnp.ones((1, Dd), f32), dec_norm_b=jnp.zeros((1, Dd), f32),
        # M2D overrides decoder_pred to project back to embed_dim
        dec_pred_w=(jax.random.normal(ks[4], (Dd, D), f32) * std).astype(bf16),
        dec_pred_b=jnp.zeros((1, D), f32),
        targ_norm_g=jnp.ones((1, D), f32), targ_norm_b=jnp.zeros((1, D), f32),
    )
    idx = 5
    params["enc_blocks"] = [_init_block(ks[idx + i], D, hidden)
                            for i in range(cfg["depth"])]
    idx += cfg["depth"]
    params["dec_blocks"] = [_init_block(ks[idx + i], Dd, dhidden)
                            for i in range(cfg["decoder_depth"])]
    idx += cfg["decoder_depth"]
    params["targ_blocks"] = [_init_block(ks[idx + i], D, hidden)
                             for i in range(cfg["depth"])]
    return params


# ----------------------------------------------------------------------------
# M2DViT forward
# ----------------------------------------------------------------------------
def _l2_normalize(x, eps=1e-12):
    n = jnp.sqrt(jnp.sum(x * x, axis=-1, keepdims=True))
    return x / jnp.maximum(n, eps)


def m2d_forward(params, imgs, noise, cfg, mask_ratio=0.5):
    B, C, H, W = imgs.shape
    ph, pw = cfg["patch_size"]
    gH, gW = cfg["grid_size"]
    L = gH * gW
    D = cfg["embed_dim"]
    Dd = cfg["decoder_embed_dim"]

    # --- patch embed: conv(kernel==stride) == patchify + fused linear + pos ----
    patches = imgs.reshape(B, C, gH, ph, gW, pw).transpose(0, 2, 4, 3, 5, 1)
    patches = patches.reshape(B, L, ph * pw * C)
    x = pallas_patch_embed(patches, params["patch_w"], params["patch_b"],
                           params["pos_embed"][:, 1:, :])          # (B, L, D) bf16

    # --- random unstructured masking (noise argsort, as in the reference) ------
    len_keep = int(L * (1 - mask_ratio))
    ids_shuffle = jnp.argsort(noise, axis=1)
    ids_restore = jnp.argsort(ids_shuffle, axis=1)
    ids_keep = ids_shuffle[:, :len_keep]
    x_masked = jnp.take_along_axis(x, ids_keep[..., None], axis=1)
    ids_rem = ids_shuffle[:, len_keep:]
    x_targ = jnp.take_along_axis(x, ids_rem[..., None], axis=1)
    mask = jnp.ones((B, L), jnp.float32).at[:, :len_keep].set(0.0)
    mask = jnp.take_along_axis(mask, ids_restore, axis=1)

    cls = (params["cls_token"] + params["pos_embed"][:, :1, :]).astype(jnp.bfloat16)
    cls = jnp.broadcast_to(cls, (B, 1, D))

    # --- encoder (tokens padded once to a multiple of 16, keys masked) ---------
    n_enc = 1 + len_keep
    Lp_enc = _round_up(n_enc, TOKEN_PAD)
    xe = jnp.concatenate(
        [cls, x_masked, jnp.zeros((B, Lp_enc - n_enc, D), jnp.bfloat16)], axis=1)
    for bp in params["enc_blocks"]:
        xe = pallas_vit_block(xe, bp, cfg["num_heads"], n_enc)
    # fused: encoder final norm + decoder_embed
    xd = pallas_ln_linear(xe.reshape(B * Lp_enc, D),
                          params["norm_g"], params["norm_b"],
                          params["dec_embed_w"], params["dec_embed_b"],
                          out_dtype=jnp.bfloat16).reshape(B, Lp_enc, Dd)
    xd = xd[:, :n_enc, :]

    # --- decoder ----------------------------------------------------------------
    n_mask = L + 1 - n_enc
    mask_tokens = jnp.broadcast_to(params["mask_token"].astype(jnp.bfloat16),
                                   (B, n_mask, Dd))
    x_ = jnp.concatenate([xd[:, 1:, :], mask_tokens], axis=1)
    x_ = jnp.take_along_axis(x_, ids_restore[..., None], axis=1)
    xdec = jnp.concatenate([xd[:, :1, :], x_], axis=1)
    xdec = xdec + params["dec_pos_embed"].astype(jnp.bfloat16)
    n_dec = L + 1
    Lp_dec = _round_up(n_dec, TOKEN_PAD)
    xdec = jnp.concatenate(
        [xdec, jnp.zeros((B, Lp_dec - n_dec, Dd), jnp.bfloat16)], axis=1)
    for bp in params["dec_blocks"]:
        xdec = pallas_vit_block(xdec, bp, cfg["decoder_num_heads"], n_dec)
    # fused: decoder final norm + decoder_pred
    y = pallas_ln_linear(xdec.reshape(B * Lp_dec, Dd),
                         params["dec_norm_g"], params["dec_norm_b"],
                         params["dec_pred_w"], params["dec_pred_b"],
                         out_dtype=jnp.float32).reshape(B, Lp_dec, D)
    y = y[:, 1:n_dec, :]                                     # drop cls + pad
    # argsort(ids_restore) == ids_shuffle for a permutation; reuse (saves a sort)
    y = jnp.take_along_axis(y, ids_shuffle[..., None], axis=1)
    pred = y[:, len_keep:, :]

    # --- target encoder (EMA branch, no grad in reference) ----------------------
    n_t = 1 + (L - len_keep)
    Lp_t = _round_up(n_t, TOKEN_PAD)
    xt = jnp.concatenate(
        [cls, x_targ, jnp.zeros((B, Lp_t - n_t, D), jnp.bfloat16)], axis=1)
    for bp in params["targ_blocks"]:
        xt = pallas_vit_block(xt, bp, cfg["num_heads"], n_t)
    xt = pallas_layernorm(xt.reshape(B * Lp_t, D),
                          params["targ_norm_g"], params["targ_norm_b"],
                          out_dtype=jnp.float32).reshape(B, Lp_t, D)
    target = jax.lax.stop_gradient(xt[:, 1:n_t, :])          # mirrors torch.no_grad

    # --- norm_mse loss (norm_pix_loss=False, loss_type='norm_mse'), f32 ---------
    t = _l2_normalize(target.astype(jnp.float32))
    p_ = _l2_normalize(pred.astype(jnp.float32))
    loss = jnp.mean(2.0 - 2.0 * jnp.sum(t * p_, axis=-1))
    return loss, pred, (ids_restore, mask)


# ----------------------------------------------------------------------------
# main
# ----------------------------------------------------------------------------
if __name__ == "__main__":
    cfg = dict(
        img_size=(16, 16),
        patch_size=(8, 8),
        in_chans=3,
        embed_dim=32,
        depth=2,
        num_heads=4,
        decoder_embed_dim=32,
        decoder_depth=2,
        decoder_num_heads=4,
        mlp_ratio=4.0,
    )
    cfg["grid_size"] = (cfg["img_size"][0] // cfg["patch_size"][0],
                        cfg["img_size"][1] // cfg["patch_size"][1])
    B = 2
    L = cfg["grid_size"][0] * cfg["grid_size"][1]

    key = jax.random.PRNGKey(0)
    pkey, ikey, nkey = jax.random.split(key, 3)
    params = init_params(pkey, cfg)
    imgs = jax.random.normal(
        ikey, (B, cfg["in_chans"], cfg["img_size"][0], cfg["img_size"][1]),
        jnp.float32)
    noise = jax.random.uniform(nkey, (B, L), jnp.float32)

    fwd = jax.jit(partial(m2d_forward, cfg=cfg, mask_ratio=0.5))
    loss, pred, (ids_restore, mask) = fwd(params, imgs, noise)
    jax.block_until_ready((loss, pred, mask))
    print("KERNEL_OK")
</pallas_src>

<mosaic_0001>
module attributes {stable_mosaic.version = 11 : i64} {
  func.func @_patch_embed_kernel(%arg0: i32, %arg1: memref<1x4x192xf32, #tpu.memory_space<vmem>>, %arg2: memref<192x32xbf16, #tpu.memory_space<vmem>>, %arg3: memref<1x32xf32, #tpu.memory_space<vmem>>, %arg4: memref<1x4x32xf32, #tpu.memory_space<vmem>>, %arg5: memref<1x4x32xbf16, #tpu.memory_space<vmem>>) attributes {dimension_semantics = [#tpu.dimension_semantics<parallel>], iteration_bounds = array<i64: 2>, scalar_prefetch = 0 : i64, scratch_operands = 0 : i64, tpu.core_type = #tpu.core_type<tc>, window_params = [{transform_indices = @transform_0, window_bounds = array<i64: 1, 4, 192>}, {pipeline_mode = #tpu.pipeline_mode<synchronous>, transform_indices = @transform_1, window_bounds = array<i64: 192, 32>}, {pipeline_mode = #tpu.pipeline_mode<synchronous>, transform_indices = @transform_2, window_bounds = array<i64: 1, 32>}, {pipeline_mode = #tpu.pipeline_mode<synchronous>, transform_indices = @transform_3, window_bounds = array<i64: 1, 4, 32>}, {transform_indices = @transform_4, window_bounds = array<i64: 1, 4, 32>}]} {
    %c0 = arith.constant 0 : index
    %c0_0 = arith.constant 0 : index
    %c0_1 = arith.constant 0 : index
    %0 = vector.load %arg1[%c0, %c0_0, %c0_1] : memref<1x4x192xf32, #tpu.memory_space<vmem>>, vector<1x4x192xf32>
    %1 = vector.shape_cast %0 : vector<1x4x192xf32> to vector<4x192xf32>
    %2 = arith.truncf %1 : vector<4x192xf32> to vector<4x192xbf16>
    %c0_2 = arith.constant 0 : index
    %c0_3 = arith.constant 0 : index
    %3 = vector.load %arg2[%c0_2, %c0_3] : memref<192x32xbf16, #tpu.memory_space<vmem>>, vector<192x32xbf16>
    %cst = arith.constant dense<0.000000e+00> : vector<4x32xf32>
    %4 = tpu.matmul %2, %3, %cst {dimension_numbers = #tpu.dot_dimension_numbers<[1], [0], [0], [1], [0, 0, 1, 1], [], []>} : vector<4x192xbf16>, vector<192x32xbf16>, vector<4x32xf32> -> vector<4x32xf32>
    %c0_4 = arith.constant 0 : index
    %c0_5 = arith.constant 0 : index
    %5 = vector.load %arg3[%c0_4, %c0_5] : memref<1x32xf32, #tpu.memory_space<vmem>>, vector<1x32xf32>
    %6 = vector.broadcast %5 : vector<1x32xf32> to vector<4x32xf32>
    %7 = arith.addf %4, %6 : vector<4x32xf32>
    %c0_6 = arith.constant 0 : index
    %c0_7 = arith.constant 0 : index
    %c0_8 = arith.constant 0 : index
    %8 = vector.load %arg4[%c0_6, %c0_7, %c0_8] : memref<1x4x32xf32, #tpu.memory_space<vmem>>, vector<1x4x32xf32>
    %9 = vector.shape_cast %8 : vector<1x4x32xf32> to vector<4x32xf32>
    %10 = arith.addf %7, %9 : vector<4x32xf32>
    %11 = arith.truncf %10 : vector<4x32xf32> to vector<4x32xbf16>
    %c0_9 = arith.constant 0 : index
    %c0_10 = arith.constant 0 : index
    %c0_11 = arith.constant 0 : index
    %12 = vector.load %arg5[%c0_9, %c0_10, %c0_11] : memref<1x4x32xbf16, #tpu.memory_space<vmem>>, vector<1x4x32xbf16>
    %13 = vector.shape_cast %12 : vector<1x4x32xbf16> to vector<4x32xbf16>
    %14 = vector.shape_cast %11 : vector<4x32xbf16> to vector<1x4x32xbf16>
    tpu.vector_store %arg5[%c0_9, %c0_10, %c0_11], %14 {strides = array<i32>} : memref<1x4x32xbf16, #tpu.memory_space<vmem>>, vector<1x4x32xbf16>,
    return
  }
  func.func @transform_0(%arg0: i32) -> (i32, i32, i32) {
    %c0_i32 = arith.constant 0 : i32
    %c0_i32_0 = arith.constant 0 : i32
    %c0_i32_1 = arith.constant 0 : i32
    return %arg0, %c0_i32, %c0_i32_0 : i32, i32, i32
  }
  func.func @transform_1(%arg0: i32) -> (i32, i32) {
    %c0_i32 = arith.constant 0 : i32
    %c0_i32_0 = arith.constant 0 : i32
    %c0_i32_1 = arith.constant 0 : i32
    return %c0_i32, %c0_i32_0 : i32, i32
  }
  func.func @transform_2(%arg0: i32) -> (i32, i32) {
    %c0_i32 = arith.constant 0 : i32
    %c0_i32_0 = arith.constant 0 : i32
    %c0_i32_1 = arith.constant 0 : i32
    return %c0_i32, %c0_i32_0 : i32, i32
  }
  func.func @transform_3(%arg0: i32) -> (i32, i32, i32) {
    %c0_i32 = arith.constant 0 : i32
    %c0_i32_0 = arith.constant 0 : i32
    %c0_i32_1 = arith.constant 0 : i32
    %c0_i32_2 = arith.constant 0 : i32
    return %c0_i32, %c0_i32_0, %c0_i32_1 : i32, i32, i32
  }
  func.func @transform_4(%arg0: i32) -> (i32, i32, i32) {
    %c0_i32 = arith.constant 0 : i32
    %c0_i32_0 = arith.constant 0 : i32
    %c0_i32_1 = arith.constant 0 : i32
    return %arg0, %c0_i32, %c0_i32_0 : i32, i32, i32
  }
}

module attributes {stable_mosaic.version = 11 : i64} {
  func.func @_fused_block_kernel(%arg0: i32, %arg1: memref<1x16x32xbf16, #tpu.memory_space<vmem>>, %arg2: memref<1x32xf32, #tpu.memory_space<vmem>>, %arg3: memref<1x32xf32, #tpu.memory_space<vmem>>, %arg4: memref<32x96xbf16, #tpu.memory_space<vmem>>, %arg5: memref<1x96xf32, #tpu.memory_space<vmem>>, %arg6: memref<32x32xbf16, #tpu.memory_space<vmem>>, %arg7: memref<1x32xf32, #tpu.memory_space<vmem>>, %arg8: memref<1x32xf32, #tpu.memory_space<vmem>>, %arg9: memref<1x32xf32, #tpu.memory_space<vmem>>, %arg10: memref<32x128xbf16, #tpu.memory_space<vmem>>, %arg11: memref<1x128xf32, #tpu.memory_space<vmem>>, %arg12: memref<128x32xbf16, #tpu.memory_space<vmem>>, %arg13: memref<1x32xf32, #tpu.memory_space<vmem>>, %arg14: memref<1x16x32xbf16, #tpu.memory_space<vmem>>) attributes {dimension_semantics = [#tpu.dimension_semantics<parallel>], iteration_bounds = array<i64: 2>, scalar_prefetch = 0 : i64, scratch_operands = 0 : i64, tpu.core_type = #tpu.core_type<tc>, window_params = [{transform_indices = @transform_0, window_bounds = array<i64: 1, 16, 32>}, {pipeline_mode = #tpu.pipeline_mode<synchronous>, transform_indices = @transform_1, window_bounds = array<i64: 1, 32>}, {pipeline_mode = #tpu.pipeline_mode<synchronous>, transform_indices = @transform_2, window_bounds = array<i64: 1, 32>}, {pipeline_mode = #tpu.pipeline_mode<synchronous>, transform_indices = @transform_3, window_bounds = array<i64: 32, 96>}, {pipeline_mode = #tpu.pipeline_mode<synchronous>, transform_indices = @transform_4, window_bounds = array<i64: 1, 96>}, {pipeline_mode = #tpu.pipeline_mode<synchronous>, transform_indices = @transform_5, window_bounds = array<i64: 32, 32>}, {pipeline_mode = #tpu.pipeline_mode<synchronous>, transform_indices = @transform_6, window_bounds = array<i64: 1, 32>}, {pipeline_mode = #tpu.pipeline_mode<synchronous>, transform_indices = @transform_7, window_bounds = array<i64: 1, 32>}, {pipeline_mode = #tpu.pipeline_mode<synchronous>, transform_indices = @transform_8, window_bounds = array<i64: 1, 32>}, {pipeline_mode = #tpu.pipeline_mode<synchronous>, transform_indices = @transform_9, window_bounds = array<i64: 32, 128>}, {pipeline_mode = #tpu.pipeline_mode<synchronous>, transform_indices = @transform_10, window_bounds = array<i64: 1, 128>}, {pipeline_mode = #tpu.pipeline_mode<synchronous>, transform_indices = @transform_11, window_bounds = array<i64: 128, 32>}, {pipeline_mode = #tpu.pipeline_mode<synchronous>, transform_indices = @transform_12, window_bounds = array<i64: 1, 32>}, {transform_indices = @transform_13, window_bounds = array<i64: 1, 16, 32>}]} {
    %c0 = arith.constant 0 : index
    %c0_0 = arith.constant 0 : index
    %c0_1 = arith.constant 0 : index
    %0 = vector.load %arg1[%c0, %c0_0, %c0_1] : memref<1x16x32xbf16, #tpu.memory_space<vmem>>, vector<1x16x32xbf16>
    %1 = vector.shape_cast %0 : vector<1x16x32xbf16> to vector<16x32xbf16>
    %2 = arith.extf %1 : vector<16x32xbf16> to vector<16x32xf32>
    %c0_2 = arith.constant 0 : index
    %c0_3 = arith.constant 0 : index
    %3 = vector.load %arg2[%c0_2, %c0_3] : memref<1x32xf32, #tpu.memory_space<vmem>>, vector<1x32xf32>
    %c0_4 = arith.constant 0 : index
    %c0_5 = arith.constant 0 : index
    %4 = vector.load %arg3[%c0_4, %c0_5] : memref<1x32xf32, #tpu.memory_space<vmem>>, vector<1x32xf32>
    %cst = arith.constant dense<0.000000e+00> : vector<16xf32>
    %5 = vector.multi_reduction <add>, %2, %cst [1] : vector<16x32xf32> to vector<16xf32>
    %6 = vector.shape_cast %5 : vector<16xf32> to vector<16x1xf32>
    %cst_6 = arith.constant 3.200000e+01 : f32
    %7 = vector.broadcast %cst_6 : f32 to vector<16x1xf32>
    %8 = arith.divf %6, %7 : vector<16x1xf32>
    %9 = vector.broadcast %8 : vector<16x1xf32> to vector<16x32xf32>
    %10 = arith.subf %2, %9 : vector<16x32xf32>
    %11 = arith.mulf %10, %10 : vector<16x32xf32>
    %cst_7 = arith.constant dense<0.000000e+00> : vector<16xf32>
    %12 = vector.multi_reduction <add>, %11, %cst_7 [1] : vector<16x32xf32> to vector<16xf32>
    %13 = vector.shape_cast %12 : vector<16xf32> to vector<16x1xf32>
    %cst_8 = arith.constant 3.200000e+01 : f32
    %14 = vector.broadcast %cst_8 : f32 to vector<16x1xf32>
    %15 = arith.divf %13, %14 : vector<16x1xf32>
    %cst_9 = arith.constant 9.99999974E-6 : f32
    %16 = vector.broadcast %cst_9 : f32 to vector<16x1xf32>
    %17 = arith.addf %15, %16 : vector<16x1xf32>
    %18 = math.rsqrt %17 : vector<16x1xf32>
    %19 = vector.broadcast %18 : vector<16x1xf32> to vector<16x32xf32>
    %20 = arith.mulf %10, %19 : vector<16x32xf32>
    %21 = vector.broadcast %3 : vector<1x32xf32> to vector<16x32xf32>
    %22 = arith.mulf %20, %21 : vector<16x32xf32>
    %23 = vector.broadcast %4 : vector<1x32xf32> to vector<16x32xf32>
    %24 = arith.addf %22, %23 : vector<16x32xf32>
    %25 = arith.truncf %24 : vector<16x32xf32> to vector<16x32xbf16>
    %c0_10 = arith.constant 0 : index
    %c0_11 = arith.constant 0 : index
    %26 = vector.load %arg4[%c0_10, %c0_11] : memref<32x96xbf16, #tpu.memory_space<vmem>>, vector<32x96xbf16>
    %cst_12 = arith.constant dense<0.000000e+00> : vector<16x96xf32>
    %27 = tpu.matmul %25, %26, %cst_12 {dimension_numbers = #tpu.dot_dimension_numbers<[1], [0], [0], [1], [0, 0, 1, 1], [], []>} : vector<16x32xbf16>, vector<32x96xbf16>, vector<16x96xf32> -> vector<16x96xf32>
    %c0_13 = arith.constant 0 : index
    %c0_14 = arith.constant 0 : index
    %28 = vector.load %arg5[%c0_13, %c0_14] : memref<1x96xf32, #tpu.memory_space<vmem>>, vector<1x96xf32>
    %29 = vector.broadcast %28 : vector<1x96xf32> to vector<16x96xf32>
    %30 = arith.addf %27, %29 : vector<16x96xf32>
    %31 = vector.extract_strided_slice %30 {offsets = [0, 0], sizes = [16, 32], strides = [1, 1]} : vector<16x96xf32> to vector<16x32xf32>
    %cst_15 = arith.constant 0.353553385 : f32
    %32 = vector.broadcast %cst_15 : f32 to vector<16x32xf32>
    %33 = arith.mulf %31, %32 : vector<16x32xf32>
    %34 = arith.truncf %33 : vector<16x32xf32> to vector<16x32xbf16>
    %35 = vector.extract_strided_slice %30 {offsets = [0, 32], sizes = [16, 32], strides = [1, 1]} : vector<16x96xf32> to vector<16x32xf32>
    %36 = arith.truncf %35 : vector<16x32xf32> to vector<16x32xbf16>
    %37 = vector.extract_strided_slice %30 {offsets = [0, 64], sizes = [16, 32], strides = [1, 1]} : vector<16x96xf32> to vector<16x32xf32>
    %38 = arith.truncf %37 : vector<16x32xf32> to vector<16x32xbf16>
    %39 = tpu.iota {dimensions = array<i32: 1>} : vector<1x16xi32>
    %c3_i32 = arith.constant 3 : i32
    %40 = vector.broadcast %c3_i32 : i32 to vector<1x16xi32>
    %41 = arith.cmpi slt, %39, %40 : vector<1x16xi32>
    %cst_16 = arith.constant 0.000000e+00 : f32
    %cst_17 = arith.constant -1.000000e+30 : f32
    %42 = vector.broadcast %cst_16 : f32 to vector<1x16xf32>
    %43 = vector.broadcast %cst_17 : f32 to vector<1x16xf32>
    %44 = arith.select %41, %42, %43 : vector<1x16xi1>, vector<1x16xf32>
    %45 = vector.extract_strided_slice %34 {offsets = [0, 0], sizes = [16, 8], strides = [1, 1]} : vector<16x32xbf16> to vector<16x8xbf16>
    %46 = vector.extract_strided_slice %36 {offsets = [0, 0], sizes = [16, 8], strides = [1, 1]} : vector<16x32xbf16> to vector<16x8xbf16>
    %47 = vector.extract_strided_slice %38 {offsets = [0, 0], sizes = [16, 8], strides = [1, 1]} : vector<16x32xbf16> to vector<16x8xbf16>
    %cst_18 = arith.constant dense<0.000000e+00> : vector<16x16xf32>
    %48 = tpu.matmul %45, %46, %cst_18 {dimension_numbers = #tpu.dot_dimension_numbers<[1], [1], [0], [0], [0, 0, 1, 0], [], []>} : vector<16x8xbf16>, vector<16x8xbf16>, vector<16x16xf32> -> vector<16x16xf32>
    %49 = vector.broadcast %44 : vector<1x16xf32> to vector<16x16xf32>
    %50 = arith.addf %48, %49 : vector<16x16xf32>
    %cst_19 = arith.constant dense<0xFF800000> : vector<16xf32>
    %51 = vector.multi_reduction <maximumf>, %50, %cst_19 [1] : vector<16x16xf32> to vector<16xf32>
    %52 = vector.shape_cast %51 : vector<16xf32> to vector<16x1xf32>
    %53 = vector.broadcast %52 : vector<16x1xf32> to vector<16x16xf32>
    %54 = arith.subf %50, %53 : vector<16x16xf32>
    %55 = math.exp %54 : vector<16x16xf32>
    %cst_20 = arith.constant dense<0.000000e+00> : vector<16xf32>
    %56 = vector.multi_reduction <add>, %55, %cst_20 [1] : vector<16x16xf32> to vector<16xf32>
    %57 = vector.shape_cast %56 : vector<16xf32> to vector<16x1xf32>
    %58 = tpu.reciprocal %57 {approx = true} : vector<16x1xf32> -> vector<16x1xf32>
    %59 = vector.broadcast %58 : vector<16x1xf32> to vector<16x16xf32>
    %60 = arith.mulf %55, %59 : vector<16x16xf32>
    %61 = arith.truncf %60 : vector<16x16xf32> to vector<16x16xbf16>
    %cst_21 = arith.constant dense<0.000000e+00> : vector<16x8xf32>
    %62 = tpu.matmul %61, %47, %cst_21 {dimension_numbers = #tpu.dot_dimension_numbers<[1], [0], [0], [1], [0, 0, 1, 1], [], []>} : vector<16x16xbf16>, vector<16x8xbf16>, vector<16x8xf32> -> vector<16x8xf32>
    %63 = vector.extract_strided_slice %34 {offsets = [0, 8], sizes = [16, 8], strides = [1, 1]} : vector<16x32xbf16> to vector<16x8xbf16>
    %64 = vector.extract_strided_slice %36 {offsets = [0, 8], sizes = [16, 8], strides = [1, 1]} : vector<16x32xbf16> to vector<16x8xbf16>
    %65 = vector.extract_strided_slice %38 {offsets = [0, 8], sizes = [16, 8], strides = [1, 1]} : vector<16x32xbf16> to vector<16x8xbf16>
    %cst_22 = arith.constant dense<0.000000e+00> : vector<16x16xf32>
    %66 = tpu.matmul %63, %64, %cst_22 {dimension_numbers = #tpu.dot_dimension_numbers<[1], [1], [0], [0], [0, 0, 1, 0], [], []>} : vector<16x8xbf16>, vector<16x8xbf16>, vector<16x16xf32> -> vector<16x16xf32>
    %67 = vector.broadcast %44 : vector<1x16xf32> to vector<16x16xf32>
    %68 = arith.addf %66, %67 : vector<16x16xf32>
    %cst_23 = arith.constant dense<0xFF800000> : vector<16xf32>
    %69 = vector.multi_reduction <maximumf>, %68, %cst_23 [1] : vector<16x16xf32> to vector<16xf32>
    %70 = vector.shape_cast %69 : vector<16xf32> to vector<16x1xf32>
    %71 = vector.broadcast %70 : vector<16x1xf32> to vector<16x16xf32>
    %72 = arith.subf %68, %71 : vector<16x16xf32>
    %73 = math.exp %72 : vector<16x16xf32>
    %cst_24 = arith.constant dense<0.000000e+00> : vector<16xf32>
    %74 = vector.multi_reduction <add>, %73, %cst_24 [1] : vector<16x16xf32> to vector<16xf32>
    %75 = vector.shape_cast %74 : vector<16xf32> to vector<16x1xf32>
    %76 = tpu.reciprocal %75 {approx = true} : vector<16x1xf32> -> vector<16x1xf32>
    %77 = vector.broadcast %76 : vector<16x1xf32> to vector<16x16xf32>
    %78 = arith.mulf %73, %77 : vector<16x16xf32>
    %79 = arith.truncf %78 : vector<16x16xf32> to vector<16x16xbf16>
    %cst_25 = arith.constant dense<0.000000e+00> : vector<16x8xf32>
    %80 = tpu.matmul %79, %65, %cst_25 {dimension_numbers = #tpu.dot_dimension_numbers<[1], [0], [0], [1], [0, 0, 1, 1], [], []>} : vector<16x16xbf16>, vector<16x8xbf16>, vector<16x8xf32> -> vector<16x8xf32>
    %81 = vector.extract_strided_slice %34 {offsets = [0, 16], sizes = [16, 8], strides = [1, 1]} : vector<16x32xbf16> to vector<16x8xbf16>
    %82 = vector.extract_strided_slice %36 {offsets = [0, 16], sizes = [16, 8], strides = [1, 1]} : vector<16x32xbf16> to vector<16x8xbf16>
    %83 = vector.extract_strided_slice %38 {offsets = [0, 16], sizes = [16, 8], strides = [1, 1]} : vector<16x32xbf16> to vector<16x8xbf16>
    %cst_26 = arith.constant dense<0.000000e+00> : vector<16x16xf32>
    %84 = tpu.matmul %81, %82, %cst_26 {dimension_numbers = #tpu.dot_dimension_numbers<[1], [1], [0], [0], [0, 0, 1, 0], [], []>} : vector<16x8xbf16>, vector<16x8xbf16>, vector<16x16xf32> -> vector<16x16xf32>
    %85 = vector.broadcast %44 : vector<1x16xf32> to vector<16x16xf32>
    %86 = arith.addf %84, %85 : vector<16x16xf32>
    %cst_27 = arith.constant dense<0xFF800000> : vector<16xf32>
    %87 = vector.multi_reduction <maximumf>, %86, %cst_27 [1] : vector<16x16xf32> to vector<16xf32>
    %88 = vector.shape_cast %87 : vector<16xf32> to vector<16x1xf32>
    %89 = vector.broadcast %88 : vector<16x1xf32> to vector<16x16xf32>
    %90 = arith.subf %86, %89 : vector<16x16xf32>
    %91 = math.exp %90 : vector<16x16xf32>
    %cst_28 = arith.constant dense<0.000000e+00> : vector<16xf32>
    %92 = vector.multi_reduction <add>, %91, %cst_28 [1] : vector<16x16xf32> to vector<16xf32>
    %93 = vector.shape_cast %92 : vector<16xf32> to vector<16x1xf32>
    %94 = tpu.reciprocal %93 {approx = true} : vector<16x1xf32> -> vector<16x1xf32>
    %95 = vector.broadcast %94 : vector<16x1xf32> to vector<16x16xf32>
    %96 = arith.mulf %91, %95 : vector<16x16xf32>
    %97 = arith.truncf %96 : vector<16x16xf32> to vector<16x16xbf16>
    %cst_29 = arith.constant dense<0.000000e+00> : vector<16x8xf32>
    %98 = tpu.matmul %97, %83, %cst_29 {dimension_numbers = #tpu.dot_dimension_numbers<[1], [0], [0], [1], [0, 0, 1, 1], [], []>} : vector<16x16xbf16>, vector<16x8xbf16>, vector<16x8xf32> -> vector<16x8xf32>
    %99 = vector.extract_strided_slice %34 {offsets = [0, 24], sizes = [16, 8], strides = [1, 1]} : vector<16x32xbf16> to vector<16x8xbf16>
    %100 = vector.extract_strided_slice %36 {offsets = [0, 24], sizes = [16, 8], strides = [1, 1]} : vector<16x32xbf16> to vector<16x8xbf16>
    %101 = vector.extract_strided_slice %38 {offsets = [0, 24], sizes = [16, 8], strides = [1, 1]} : vector<16x32xbf16> to vector<16x8xbf16>
    %cst_30 = arith.constant dense<0.000000e+00> : vector<16x16xf32>
    %102 = tpu.matmul %99, %100, %cst_30 {dimension_numbers = #tpu.dot_dimension_numbers<[1], [1], [0], [0], [0, 0, 1, 0], [], []>} : vector<16x8xbf16>, vector<16x8xbf16>, vector<16x16xf32> -> vector<16x16xf32>
    %103 = vector.broadcast %44 : vector<1x16xf32> to vector<16x16xf32>
    %104 = arith.addf %102, %103 : vector<16x16xf32>
    %cst_31 = arith.constant dense<0xFF800000> : vector<16xf32>
    %105 = vector.multi_reduction <maximumf>, %104, %cst_31 [1] : vector<16x16xf32> to vector<16xf32>
    %106 = vector.shape_cast %105 : vector<16xf32> to vector<16x1xf32>
    %107 = vector.broadcast %106 : vector<16x1xf32> to vector<16x16xf32>
    %108 = arith.subf %104, %107 : vector<16x16xf32>
    %109 = math.exp %108 : vector<16x16xf32>
    %cst_32 = arith.constant dense<0.000000e+00> : vector<16xf32>
    %110 = vector.multi_reduction <add>, %109, %cst_32 [1] : vector<16x16xf32> to vector<16xf32>
    %111 = vector.shape_cast %110 : vector<16xf32> to vector<16x1xf32>
    %112 = tpu.reciprocal %111 {approx = true} : vector<16x1xf32> -> vector<16x1xf32>
    %113 = vector.broadcast %112 : vector<16x1xf32> to vector<16x16xf32>
    %114 = arith.mulf %109, %113 : vector<16x16xf32>
    %115 = arith.truncf %114 : vector<16x16xf32> to vector<16x16xbf16>
    %cst_33 = arith.constant dense<0.000000e+00> : vector<16x8xf32>
    %116 = tpu.matmul %115, %101, %cst_33 {dimension_numbers = #tpu.dot_dimension_numbers<[1], [0], [0], [1], [0, 0, 1, 1], [], []>} : vector<16x16xbf16>, vector<16x8xbf16>, vector<16x8xf32> -> vector<16x8xf32>
    %117 = tpu.concatenate %62, %80, %98, %116 in 1 : vector<16x8xf32>, vector<16x8xf32>, vector<16x8xf32>, vector<16x8xf32> -> vector<16x32xf32>
    %118 = arith.truncf %117 : vector<16x32xf32> to vector<16x32xbf16>
    %c0_34 = arith.constant 0 : index
    %c0_35 = arith.constant 0 : index
    %119 = vector.load %arg6[%c0_34, %c0_35] : memref<32x32xbf16, #tpu.memory_space<vmem>>, vector<32x32xbf16>
    %cst_36 = arith.constant dense<0.000000e+00> : vector<16x32xf32>
    %120 = tpu.matmul %118, %119, %cst_36 {dimension_numbers = #tpu.dot_dimension_numbers<[1], [0], [0], [1], [0, 0, 1, 1], [], []>} : vector<16x32xbf16>, vector<32x32xbf16>, vector<16x32xf32> -> vector<16x32xf32>
    %121 = arith.addf %2, %120 : vector<16x32xf32>
    %c0_37 = arith.constant 0 : index
    %c0_38 = arith.constant 0 : index
    %122 = vector.load %arg7[%c0_37, %c0_38] : memref<1x32xf32, #tpu.memory_space<vmem>>, vector<1x32xf32>
    %123 = vector.broadcast %122 : vector<1x32xf32> to vector<16x32xf32>
    %124 = arith.addf %121, %123 : vector<16x32xf32>
    %c0_39 = arith.constant 0 : index
    %c0_40 = arith.constant 0 : index
    %125 = vector.load %arg8[%c0_39, %c0_40] : memref<1x32xf32, #tpu.memory_space<vmem>>, vector<1x32xf32>
    %c0_41 = arith.constant 0 : index
    %c0_42 = arith.constant 0 : index
    %126 = vector.load %arg9[%c0_41, %c0_42] : memref<1x32xf32, #tpu.memory_space<vmem>>, vector<1x32xf32>
    %cst_43 = arith.constant dense<0.000000e+00> : vector<16xf32>
    %127 = vector.multi_reduction <add>, %124, %cst_43 [1] : vector<16x32xf32> to vector<16xf32>
    %128 = vector.shape_cast %127 : vector<16xf32> to vector<16x1xf32>
    %cst_44 = arith.constant 3.200000e+01 : f32
    %129 = vector.broadcast %cst_44 : f32 to vector<16x1xf32>
    %130 = arith.divf %128, %129 : vector<16x1xf32>
    %131 = vector.broadcast %130 : vector<16x1xf32> to vector<16x32xf32>
    %132 = arith.subf %124, %131 : vector<16x32xf32>
    %133 = arith.mulf %132, %132 : vector<16x32xf32>
    %cst_45 = arith.constant dense<0.000000e+00> : vector<16xf32>
    %134 = vector.multi_reduction <add>, %133, %cst_45 [1] : vector<16x32xf32> to vector<16xf32>
    %135 = vector.shape_cast %134 : vector<16xf32> to vector<16x1xf32>
    %cst_46 = arith.constant 3.200000e+01 : f32
    %136 = vector.broadcast %cst_46 : f32 to vector<16x1xf32>
    %137 = arith.divf %135, %136 : vector<16x1xf32>
    %cst_47 = arith.constant 9.99999974E-6 : f32
    %138 = vector.broadcast %cst_47 : f32 to vector<16x1xf32>
    %139 = arith.addf %137, %138 : vector<16x1xf32>
    %140 = math.rsqrt %139 : vector<16x1xf32>
    %141 = vector.broadcast %140 : vector<16x1xf32> to vector<16x32xf32>
    %142 = arith.mulf %132, %141 : vector<16x32xf32>
    %143 = vector.broadcast %125 : vector<1x32xf32> to vector<16x32xf32>
    %144 = arith.mulf %142, %143 : vector<16x32xf32>
    %145 = vector.broadcast %126 : vector<1x32xf32> to vector<16x32xf32>
    %146 = arith.addf %144, %145 : vector<16x32xf32>
    %147 = arith.truncf %146 : vector<16x32xf32> to vector<16x32xbf16>
    %c0_48 = arith.constant 0 : index
    %c0_49 = arith.constant 0 : index
    %148 = vector.load %arg10[%c0_48, %c0_49] : memref<32x128xbf16, #tpu.memory_space<vmem>>, vector<32x128xbf16>
    %cst_50 = arith.constant dense<0.000000e+00> : vector<16x128xf32>
    %149 = tpu.matmul %147, %148, %cst_50 {dimension_numbers = #tpu.dot_dimension_numbers<[1], [0], [0], [1], [0, 0, 1, 1], [], []>} : vector<16x32xbf16>, vector<32x128xbf16>, vector<16x128xf32> -> vector<16x128xf32>
    %c0_51 = arith.constant 0 : index
    %c0_52 = arith.constant 0 : index
    %150 = vector.load %arg11[%c0_51, %c0_52] : memref<1x128xf32, #tpu.memory_space<vmem>>, vector<1x128xf32>
    %151 = vector.broadcast %150 : vector<1x128xf32> to vector<16x128xf32>
    %152 = arith.addf %149, %151 : vector<16x128xf32>
    %cst_53 = arith.constant 5.000000e-01 : f32
    %153 = vector.broadcast %cst_53 : f32 to vector<16x128xf32>
    %154 = arith.mulf %153, %152 : vector<16x128xf32>
    %cst_54 = arith.constant 0.707106769 : f32
    %155 = vector.broadcast %cst_54 : f32 to vector<16x128xf32>
    %156 = arith.mulf %152, %155 : vector<16x128xf32>
    %157 = math.erf %156 : vector<16x128xf32>
    %cst_55 = arith.constant 1.000000e+00 : f32
    %158 = vector.broadcast %cst_55 : f32 to vector<16x128xf32>
    %159 = arith.addf %158, %157 : vector<16x128xf32>
    %160 = arith.mulf %154, %159 : vector<16x128xf32>
    %161 = arith.truncf %160 : vector<16x128xf32> to vector<16x128xbf16>
    %c0_56 = arith.constant 0 : index
    %c0_57 = arith.constant 0 : index
    %162 = vector.load %arg12[%c0_56, %c0_57] : memref<128x32xbf16, #tpu.memory_space<vmem>>, vector<128x32xbf16>
    %cst_58 = arith.constant dense<0.000000e+00> : vector<16x32xf32>
    %163 = tpu.matmul %161, %162, %cst_58 {dimension_numbers = #tpu.dot_dimension_numbers<[1], [0], [0], [1], [0, 0, 1, 1], [], []>} : vector<16x128xbf16>, vector<128x32xbf16>, vector<16x32xf32> -> vector<16x32xf32>
    %164 = arith.addf %124, %163 : vector<16x32xf32>
    %c0_59 = arith.constant 0 : index
    %c0_60 = arith.constant 0 : index
    %165 = vector.load %arg13[%c0_59, %c0_60] : memref<1x32xf32, #tpu.memory_space<vmem>>, vector<1x32xf32>
    %166 = vector.broadcast %165 : vector<1x32xf32> to vector<16x32xf32>
    %167 = arith.addf %164, %166 : vector<16x32xf32>
    %168 = arith.truncf %167 : vector<16x32xf32> to vector<16x32xbf16>
    %c0_61 = arith.constant 0 : index
    %c0_62 = arith.constant 0 : index
    %c0_63 = arith.constant 0 : index
    %169 = vector.load %arg14[%c0_61, %c0_62, %c0_63] : memref<1x16x32xbf16, #tpu.memory_space<vmem>>, vector<1x16x32xbf16>
    %170 = vector.shape_cast %169 : vector<1x16x32xbf16> to vector<16x32xbf16>
    %171 = vector.shape_cast %168 : vector<16x32xbf16> to vector<1x16x32xbf16>
    tpu.vector_store %arg14[%c0_61, %c0_62, %c0_63], %171 {strides = array<i32>} : memref<1x16x32xbf16, #tpu.memory_space<vmem>>, vector<1x16x32xbf16>,
    return
  }
  func.func @transform_0(%arg0: i32) -> (i32, i32, i32) {
    %c0_i32 = arith.constant 0 : i32
    %c0_i32_0 = arith.constant 0 : i32
    %c0_i32_1 = arith.constant 0 : i32
    return %arg0, %c0_i32, %c0_i32_0 : i32, i32, i32
  }
  func.func @transform_1(%arg0: i32) -> (i32, i32) {
    %c0_i32 = arith.constant 0 : i32
    %c0_i32_0 = arith.constant 0 : i32
    %c0_i32_1 = arith.constant 0 : i32
    return %c0_i32, %c0_i32_0 : i32, i32
  }
  func.func @transform_2(%arg0: i32) -> (i32, i32) {
    %c0_i32 = arith.constant 0 : i32
    %c0_i32_0 = arith.constant 0 : i32
    %c0_i32_1 = arith.constant 0 : i32
    return %c0_i32, %c0_i32_0 : i32, i32
  }
  func.func @transform_3(%arg0: i32) -> (i32, i32) {
    %c0_i32 = arith.constant 0 : i32
    %c0_i32_0 = arith.constant 0 : i32
    %c0_i32_1 = arith.constant 0 : i32
    return %c0_i32, %c0_i32_0 : i32, i32
  }
  func.func @transform_4(%arg0: i32) -> (i32, i32) {
    %c0_i32 = arith.constant 0 : i32
    %c0_i32_0 = arith.constant 0 : i32
    %c0_i32_1 = arith.constant 0 : i32
    return %c0_i32, %c0_i32_0 : i32, i32
  }
  func.func @transform_5(%arg0: i32) -> (i32, i32) {
    %c0_i32 = arith.constant 0 : i32
    %c0_i32_0 = arith.constant 0 : i32
    %c0_i32_1 = arith.constant 0 : i32
    return %c0_i32, %c0_i32_0 : i32, i32
  }
  func.func @transform_6(%arg0: i32) -> (i32, i32) {
    %c0_i32 = arith.constant 0 : i32
    %c0_i32_0 = arith.constant 0 : i32
    %c0_i32_1 = arith.constant 0 : i32
    return %c0_i32, %c0_i32_0 : i32, i32
  }
  func.func @transform_7(%arg0: i32) -> (i32, i32) {
    %c0_i32 = arith.constant 0 : i32
    %c0_i32_0 = arith.constant 0 : i32
    %c0_i32_1 = arith.constant 0 : i32
    return %c0_i32, %c0_i32_0 : i32, i32
  }
  func.func @transform_8(%arg0: i32) -> (i32, i32) {
    %c0_i32 = arith.constant 0 : i32
    %c0_i32_0 = arith.constant 0 : i32
    %c0_i32_1 = arith.constant 0 : i32
    return %c0_i32, %c0_i32_0 : i32, i32
  }
  func.func @transform_9(%arg0: i32) -> (i32, i32) {
    %c0_i32 = arith.constant 0 : i32
    %c0_i32_0 = arith.constant 0 : i32
    %c0_i32_1 = arith.constant 0 : i32
    return %c0_i32, %c0_i32_0 : i32, i32
  }
  func.func @transform_10(%arg0: i32) -> (i32, i32) {
    %c0_i32 = arith.constant 0 : i32
    %c0_i32_0 = arith.constant 0 : i32
    %c0_i32_1 = arith.constant 0 : i32
    return %c0_i32, %c0_i32_0 : i32, i32
  }
  func.func @transform_11(%arg0: i32) -> (i32, i32) {
    %c0_i32 = arith.constant 0 : i32
    %c0_i32_0 = arith.constant 0 : i32
    %c0_i32_1 = arith.constant 0 : i32
    return %c0_i32, %c0_i32_0 : i32, i32
  }
  func.func @transform_12(%arg0: i32) -> (i32, i32) {
    %c0_i32 = arith.constant 0 : i32
    %c0_i32_0 = arith.constant 0 : i32
    %c0_i32_1 = arith.constant 0 : i32
    return %c0_i32, %c0_i32_0 : i32, i32
  }
  func.func @transform_13(%arg0: i32) -> (i32, i32, i32) {
    %c0_i32 = arith.constant 0 : i32
    %c0_i32_0 = arith.constant 0 : i32
    %c0_i32_1 = arith.constant 0 : i32
    return %arg0, %c0_i32, %c0_i32_0 : i32, i32, i32
  }
}

module attributes {stable_mosaic.version = 11 : i64} {
  func.func @_ln_linear_kernel(%arg0: i32, %arg1: memref<32x32xbf16, #tpu.memory_space<vmem>>, %arg2: memref<1x32xf32, #tpu.memory_space<vmem>>, %arg3: memref<1x32xf32, #tpu.memory_space<vmem>>, %arg4: memref<32x32xbf16, #tpu.memory_space<vmem>>, %arg5: memref<1x32xf32, #tpu.memory_space<vmem>>, %arg6: memref<32x32xbf16, #tpu.memory_space<vmem>>) attributes {dimension_semantics = [#tpu.dimension_semantics<parallel>], iteration_bounds = array<i64: 1>, scalar_prefetch = 0 : i64, scratch_operands = 0 : i64, tpu.core_type = #tpu.core_type<tc>, window_params = [{transform_indices = @transform_0, window_bounds = array<i64: 32, 32>}, {pipeline_mode = #tpu.pipeline_mode<synchronous>, transform_indices = @transform_1, window_bounds = array<i64: 1, 32>}, {pipeline_mode = #tpu.pipeline_mode<synchronous>, transform_indices = @transform_2, window_bounds = array<i64: 1, 32>}, {pipeline_mode = #tpu.pipeline_mode<synchronous>, transform_indices = @transform_3, window_bounds = array<i64: 32, 32>}, {pipeline_mode = #tpu.pipeline_mode<synchronous>, transform_indices = @transform_4, window_bounds = array<i64: 1, 32>}, {transform_indices = @transform_5, window_bounds = array<i64: 32, 32>}]} {
    %c0 = arith.constant 0 : index
    %c0_0 = arith.constant 0 : index
    %0 = vector.load %arg1[%c0, %c0_0] : memref<32x32xbf16, #tpu.memory_space<vmem>>, vector<32x32xbf16>
    %1 = arith.extf %0 : vector<32x32xbf16> to vector<32x32xf32>
    %c0_1 = arith.constant 0 : index
    %c0_2 = arith.constant 0 : index
    %2 = vector.load %arg2[%c0_1, %c0_2] : memref<1x32xf32, #tpu.memory_space<vmem>>, vector<1x32xf32>
    %c0_3 = arith.constant 0 : index
    %c0_4 = arith.constant 0 : index
    %3 = vector.load %arg3[%c0_3, %c0_4] : memref<1x32xf32, #tpu.memory_space<vmem>>, vector<1x32xf32>
    %cst = arith.constant dense<0.000000e+00> : vector<32xf32>
    %4 = vector.multi_reduction <add>, %1, %cst [1] : vector<32x32xf32> to vector<32xf32>
    %5 = vector.shape_cast %4 : vector<32xf32> to vector<32x1xf32>
    %cst_5 = arith.constant 3.200000e+01 : f32
    %6 = vector.broadcast %cst_5 : f32 to vector<32x1xf32>
    %7 = arith.divf %5, %6 : vector<32x1xf32>
    %8 = vector.broadcast %7 : vector<32x1xf32> to vector<32x32xf32>
    %9 = arith.subf %1, %8 : vector<32x32xf32>
    %10 = arith.mulf %9, %9 : vector<32x32xf32>
    %cst_6 = arith.constant dense<0.000000e+00> : vector<32xf32>
    %11 = vector.multi_reduction <add>, %10, %cst_6 [1] : vector<32x32xf32> to vector<32xf32>
    %12 = vector.shape_cast %11 : vector<32xf32> to vector<32x1xf32>
    %cst_7 = arith.constant 3.200000e+01 : f32
    %13 = vector.broadcast %cst_7 : f32 to vector<32x1xf32>
    %14 = arith.divf %12, %13 : vector<32x1xf32>
    %cst_8 = arith.constant 9.99999974E-6 : f32
    %15 = vector.broadcast %cst_8 : f32 to vector<32x1xf32>
    %16 = arith.addf %14, %15 : vector<32x1xf32>
    %17 = math.rsqrt %16 : vector<32x1xf32>
    %18 = vector.broadcast %17 : vector<32x1xf32> to vector<32x32xf32>
    %19 = arith.mulf %9, %18 : vector<32x32xf32>
    %20 = vector.broadcast %2 : vector<1x32xf32> to vector<32x32xf32>
    %21 = arith.mulf %19, %20 : vector<32x32xf32>
    %22 = vector.broadcast %3 : vector<1x32xf32> to vector<32x32xf32>
    %23 = arith.addf %21, %22 : vector<32x32xf32>
    %24 = arith.truncf %23 : vector<32x32xf32> to vector<32x32xbf16>
    %c0_9 = arith.constant 0 : index
    %c0_10 = arith.constant 0 : index
    %25 = vector.load %arg4[%c0_9, %c0_10] : memref<32x32xbf16, #tpu.memory_space<vmem>>, vector<32x32xbf16>
    %cst_11 = arith.constant dense<0.000000e+00> : vector<32x32xf32>
    %26 = tpu.matmul %24, %25, %cst_11 {dimension_numbers = #tpu.dot_dimension_numbers<[1], [0], [0], [1], [0, 0, 1, 1], [], []>} : vector<32x32xbf16>, vector<32x32xbf16>, vector<32x32xf32> -> vector<32x32xf32>
    %c0_12 = arith.constant 0 : index
    %c0_13 = arith.constant 0 : index
    %27 = vector.load %arg5[%c0_12, %c0_13] : memref<1x32xf32, #tpu.memory_space<vmem>>, vector<1x32xf32>
    %28 = vector.broadcast %27 : vector<1x32xf32> to vector<32x32xf32>
    %29 = arith.addf %26, %28 : vector<32x32xf32>
    %30 = arith.truncf %29 : vector<32x32xf32> to vector<32x32xbf16>
    %c0_14 = arith.constant 0 : index
    %c0_15 = arith.constant 0 : index
    %31 = vector.load %arg6[%c0_14, %c0_15] : memref<32x32xbf16, #tpu.memory_space<vmem>>, vector<32x32xbf16>
    tpu.vector_store %arg6[%c0_14, %c0_15], %30 {strides = array<i32>} : memref<32x32xbf16, #tpu.memory_space<vmem>>, vector<32x32xbf16>,
    return
  }
  func.func @transform_0(%arg0: i32) -> (i32, i32) {
    %c0_i32 = arith.constant 0 : i32
    %c0_i32_0 = arith.constant 0 : i32
    return %arg0, %c0_i32 : i32, i32
  }
  func.func @transform_1(%arg0: i32) -> (i32, i32) {
    %c0_i32 = arith.constant 0 : i32
    %c0_i32_0 = arith.constant 0 : i32
    %c0_i32_1 = arith.constant 0 : i32
    return %c0_i32, %c0_i32_0 : i32, i32
  }
  func.func @transform_2(%arg0: i32) -> (i32, i32) {
    %c0_i32 = arith.constant 0 : i32
    %c0_i32_0 = arith.constant 0 : i32
    %c0_i32_1 = arith.constant 0 : i32
    return %c0_i32, %c0_i32_0 : i32, i32
  }
  func.func @transform_3(%arg0: i32) -> (i32, i32) {
    %c0_i32 = arith.constant 0 : i32
    %c0_i32_0 = arith.constant 0 : i32
    %c0_i32_1 = arith.constant 0 : i32
    return %c0_i32, %c0_i32_0 : i32, i32
  }
  func.func @transform_4(%arg0: i32) -> (i32, i32) {
    %c0_i32 = arith.constant 0 : i32
    %c0_i32_0 = arith.constant 0 : i32
    %c0_i32_1 = arith.constant 0 : i32
    return %c0_i32, %c0_i32_0 : i32, i32
  }
  func.func @transform_5(%arg0: i32) -> (i32, i32) {
    %c0_i32 = arith.constant 0 : i32
    %c0_i32_0 = arith.constant 0 : i32
    return %arg0, %c0_i32 : i32, i32
  }
}

module attributes {stable_mosaic.version = 11 : i64} {
  func.func @_fused_block_kernel(%arg0: i32, %arg1: memref<1x16x32xbf16, #tpu.memory_space<vmem>>, %arg2: memref<1x32xf32, #tpu.memory_space<vmem>>, %arg3: memref<1x32xf32, #tpu.memory_space<vmem>>, %arg4: memref<32x96xbf16, #tpu.memory_space<vmem>>, %arg5: memref<1x96xf32, #tpu.memory_space<vmem>>, %arg6: memref<32x32xbf16, #tpu.memory_space<vmem>>, %arg7: memref<1x32xf32, #tpu.memory_space<vmem>>, %arg8: memref<1x32xf32, #tpu.memory_space<vmem>>, %arg9: memref<1x32xf32, #tpu.memory_space<vmem>>, %arg10: memref<32x128xbf16, #tpu.memory_space<vmem>>, %arg11: memref<1x128xf32, #tpu.memory_space<vmem>>, %arg12: memref<128x32xbf16, #tpu.memory_space<vmem>>, %arg13: memref<1x32xf32, #tpu.memory_space<vmem>>, %arg14: memref<1x16x32xbf16, #tpu.memory_space<vmem>>) attributes {dimension_semantics = [#tpu.dimension_semantics<parallel>], iteration_bounds = array<i64: 2>, scalar_prefetch = 0 : i64, scratch_operands = 0 : i64, tpu.core_type = #tpu.core_type<tc>, window_params = [{transform_indices = @transform_0, window_bounds = array<i64: 1, 16, 32>}, {pipeline_mode = #tpu.pipeline_mode<synchronous>, transform_indices = @transform_1, window_bounds = array<i64: 1, 32>}, {pipeline_mode = #tpu.pipeline_mode<synchronous>, transform_indices = @transform_2, window_bounds = array<i64: 1, 32>}, {pipeline_mode = #tpu.pipeline_mode<synchronous>, transform_indices = @transform_3, window_bounds = array<i64: 32, 96>}, {pipeline_mode = #tpu.pipeline_mode<synchronous>, transform_indices = @transform_4, window_bounds = array<i64: 1, 96>}, {pipeline_mode = #tpu.pipeline_mode<synchronous>, transform_indices = @transform_5, window_bounds = array<i64: 32, 32>}, {pipeline_mode = #tpu.pipeline_mode<synchronous>, transform_indices = @transform_6, window_bounds = array<i64: 1, 32>}, {pipeline_mode = #tpu.pipeline_mode<synchronous>, transform_indices = @transform_7, window_bounds = array<i64: 1, 32>}, {pipeline_mode = #tpu.pipeline_mode<synchronous>, transform_indices = @transform_8, window_bounds = array<i64: 1, 32>}, {pipeline_mode = #tpu.pipeline_mode<synchronous>, transform_indices = @transform_9, window_bounds = array<i64: 32, 128>}, {pipeline_mode = #tpu.pipeline_mode<synchronous>, transform_indices = @transform_10, window_bounds = array<i64: 1, 128>}, {pipeline_mode = #tpu.pipeline_mode<synchronous>, transform_indices = @transform_11, window_bounds = array<i64: 128, 32>}, {pipeline_mode = #tpu.pipeline_mode<synchronous>, transform_indices = @transform_12, window_bounds = array<i64: 1, 32>}, {transform_indices = @transform_13, window_bounds = array<i64: 1, 16, 32>}]} {
    %c0 = arith.constant 0 : index
    %c0_0 = arith.constant 0 : index
    %c0_1 = arith.constant 0 : index
    %0 = vector.load %arg1[%c0, %c0_0, %c0_1] : memref<1x16x32xbf16, #tpu.memory_space<vmem>>, vector<1x16x32xbf16>
    %1 = vector.shape_cast %0 : vector<1x16x32xbf16> to vector<16x32xbf16>
    %2 = arith.extf %1 : vector<16x32xbf16> to vector<16x32xf32>
    %c0_2 = arith.constant 0 : index
    %c0_3 = arith.constant 0 : index
    %3 = vector.load %arg2[%c0_2, %c0_3] : memref<1x32xf32, #tpu.memory_space<vmem>>, vector<1x32xf32>
    %c0_4 = arith.constant 0 : index
    %c0_5 = arith.constant 0 : index
    %4 = vector.load %arg3[%c0_4, %c0_5] : memref<1x32xf32, #tpu.memory_space<vmem>>, vector<1x32xf32>
    %cst = arith.constant dense<0.000000e+00> : vector<16xf32>
    %5 = vector.multi_reduction <add>, %2, %cst [1] : vector<16x32xf32> to vector<16xf32>
    %6 = vector.shape_cast %5 : vector<16xf32> to vector<16x1xf32>
    %cst_6 = arith.constant 3.200000e+01 : f32
    %7 = vector.broadcast %cst_6 : f32 to vector<16x1xf32>
    %8 = arith.divf %6, %7 : vector<16x1xf32>
    %9 = vector.broadcast %8 : vector<16x1xf32> to vector<16x32xf32>
    %10 = arith.subf %2, %9 : vector<16x32xf32>
    %11 = arith.mulf %10, %10 : vector<16x32xf32>
    %cst_7 = arith.constant dense<0.000000e+00> : vector<16xf32>
    %12 = vector.multi_reduction <add>, %11, %cst_7 [1] : vector<16x32xf32> to vector<16xf32>
    %13 = vector.shape_cast %12 : vector<16xf32> to vector<16x1xf32>
    %cst_8 = arith.constant 3.200000e+01 : f32
    %14 = vector.broadcast %cst_8 : f32 to vector<16x1xf32>
    %15 = arith.divf %13, %14 : vector<16x1xf32>
    %cst_9 = arith.constant 9.99999974E-6 : f32
    %16 = vector.broadcast %cst_9 : f32 to vector<16x1xf32>
    %17 = arith.addf %15, %16 : vector<16x1xf32>
    %18 = math.rsqrt %17 : vector<16x1xf32>
    %19 = vector.broadcast %18 : vector<16x1xf32> to vector<16x32xf32>
    %20 = arith.mulf %10, %19 : vector<16x32xf32>
    %21 = vector.broadcast %3 : vector<1x32xf32> to vector<16x32xf32>
    %22 = arith.mulf %20, %21 : vector<16x32xf32>
    %23 = vector.broadcast %4 : vector<1x32xf32> to vector<16x32xf32>
    %24 = arith.addf %22, %23 : vector<16x32xf32>
    %25 = arith.truncf %24 : vector<16x32xf32> to vector<16x32xbf16>
    %c0_10 = arith.constant 0 : index
    %c0_11 = arith.constant 0 : index
    %26 = vector.load %arg4[%c0_10, %c0_11] : memref<32x96xbf16, #tpu.memory_space<vmem>>, vector<32x96xbf16>
    %cst_12 = arith.constant dense<0.000000e+00> : vector<16x96xf32>
    %27 = tpu.matmul %25, %26, %cst_12 {dimension_numbers = #tpu.dot_dimension_numbers<[1], [0], [0], [1], [0, 0, 1, 1], [], []>} : vector<16x32xbf16>, vector<32x96xbf16>, vector<16x96xf32> -> vector<16x96xf32>
    %c0_13 = arith.constant 0 : index
    %c0_14 = arith.constant 0 : index
    %28 = vector.load %arg5[%c0_13, %c0_14] : memref<1x96xf32, #tpu.memory_space<vmem>>, vector<1x96xf32>
    %29 = vector.broadcast %28 : vector<1x96xf32> to vector<16x96xf32>
    %30 = arith.addf %27, %29 : vector<16x96xf32>
    %31 = vector.extract_strided_slice %30 {offsets = [0, 0], sizes = [16, 32], strides = [1, 1]} : vector<16x96xf32> to vector<16x32xf32>
    %cst_15 = arith.constant 0.353553385 : f32
    %32 = vector.broadcast %cst_15 : f32 to vector<16x32xf32>
    %33 = arith.mulf %31, %32 : vector<16x32xf32>
    %34 = arith.truncf %33 : vector<16x32xf32> to vector<16x32xbf16>
    %35 = vector.extract_strided_slice %30 {offsets = [0, 32], sizes = [16, 32], strides = [1, 1]} : vector<16x96xf32> to vector<16x32xf32>
    %36 = arith.truncf %35 : vector<16x32xf32> to vector<16x32xbf16>
    %37 = vector.extract_strided_slice %30 {offsets = [0, 64], sizes = [16, 32], strides = [1, 1]} : vector<16x96xf32> to vector<16x32xf32>
    %38 = arith.truncf %37 : vector<16x32xf32> to vector<16x32xbf16>
    %39 = tpu.iota {dimensions = array<i32: 1>} : vector<1x16xi32>
    %c5_i32 = arith.constant 5 : i32
    %40 = vector.broadcast %c5_i32 : i32 to vector<1x16xi32>
    %41 = arith.cmpi slt, %39, %40 : vector<1x16xi32>
    %cst_16 = arith.constant 0.000000e+00 : f32
    %cst_17 = arith.constant -1.000000e+30 : f32
    %42 = vector.broadcast %cst_16 : f32 to vector<1x16xf32>
    %43 = vector.broadcast %cst_17 : f32 to vector<1x16xf32>
    %44 = arith.select %41, %42, %43 : vector<1x16xi1>, vector<1x16xf32>
    %45 = vector.extract_strided_slice %34 {offsets = [0, 0], sizes = [16, 8], strides = [1, 1]} : vector<16x32xbf16> to vector<16x8xbf16>
    %46 = vector.extract_strided_slice %36 {offsets = [0, 0], sizes = [16, 8], strides = [1, 1]} : vector<16x32xbf16> to vector<16x8xbf16>
    %47 = vector.extract_strided_slice %38 {offsets = [0, 0], sizes = [16, 8], strides = [1, 1]} : vector<16x32xbf16> to vector<16x8xbf16>
    %cst_18 = arith.constant dense<0.000000e+00> : vector<16x16xf32>
    %48 = tpu.matmul %45, %46, %cst_18 {dimension_numbers = #tpu.dot_dimension_numbers<[1], [1], [0], [0], [0, 0, 1, 0], [], []>} : vector<16x8xbf16>, vector<16x8xbf16>, vector<16x16xf32> -> vector<16x16xf32>
    %49 = vector.broadcast %44 : vector<1x16xf32> to vector<16x16xf32>
    %50 = arith.addf %48, %49 : vector<16x16xf32>
    %cst_19 = arith.constant dense<0xFF800000> : vector<16xf32>
    %51 = vector.multi_reduction <maximumf>, %50, %cst_19 [1] : vector<16x16xf32> to vector<16xf32>
    %52 = vector.shape_cast %51 : vector<16xf32> to vector<16x1xf32>
    %53 = vector.broadcast %52 : vector<16x1xf32> to vector<16x16xf32>
    %54 = arith.subf %50, %53 : vector<16x16xf32>
    %55 = math.exp %54 : vector<16x16xf32>
    %cst_20 = arith.constant dense<0.000000e+00> : vector<16xf32>
    %56 = vector.multi_reduction <add>, %55, %cst_20 [1] : vector<16x16xf32> to vector<16xf32>
    %57 = vector.shape_cast %56 : vector<16xf32> to vector<16x1xf32>
    %58 = tpu.reciprocal %57 {approx = true} : vector<16x1xf32> -> vector<16x1xf32>
    %59 = vector.broadcast %58 : vector<16x1xf32> to vector<16x16xf32>
    %60 = arith.mulf %55, %59 : vector<16x16xf32>
    %61 = arith.truncf %60 : vector<16x16xf32> to vector<16x16xbf16>
    %cst_21 = arith.constant dense<0.000000e+00> : vector<16x8xf32>
    %62 = tpu.matmul %61, %47, %cst_21 {dimension_numbers = #tpu.dot_dimension_numbers<[1], [0], [0], [1], [0, 0, 1, 1], [], []>} : vector<16x16xbf16>, vector<16x8xbf16>, vector<16x8xf32> -> vector<16x8xf32>
    %63 = vector.extract_strided_slice %34 {offsets = [0, 8], sizes = [16, 8], strides = [1, 1]} : vector<16x32xbf16> to vector<16x8xbf16>
    %64 = vector.extract_strided_slice %36 {offsets = [0, 8], sizes = [16, 8], strides = [1, 1]} : vector<16x32xbf16> to vector<16x8xbf16>
    %65 = vector.extract_strided_slice %38 {offsets = [0, 8], sizes = [16, 8], strides = [1, 1]} : vector<16x32xbf16> to vector<16x8xbf16>
    %cst_22 = arith.constant dense<0.000000e+00> : vector<16x16xf32>
    %66 = tpu.matmul %63, %64, %cst_22 {dimension_numbers = #tpu.dot_dimension_numbers<[1], [1], [0], [0], [0, 0, 1, 0], [], []>} : vector<16x8xbf16>, vector<16x8xbf16>, vector<16x16xf32> -> vector<16x16xf32>
    %67 = vector.broadcast %44 : vector<1x16xf32> to vector<16x16xf32>
    %68 = arith.addf %66, %67 : vector<16x16xf32>
    %cst_23 = arith.constant dense<0xFF800000> : vector<16xf32>
    %69 = vector.multi_reduction <maximumf>, %68, %cst_23 [1] : vector<16x16xf32> to vector<16xf32>
    %70 = vector.shape_cast %69 : vector<16xf32> to vector<16x1xf32>
    %71 = vector.broadcast %70 : vector<16x1xf32> to vector<16x16xf32>
    %72 = arith.subf %68, %71 : vector<16x16xf32>
    %73 = math.exp %72 : vector<16x16xf32>
    %cst_24 = arith.constant dense<0.000000e+00> : vector<16xf32>
    %74 = vector.multi_reduction <add>, %73, %cst_24 [1] : vector<16x16xf32> to vector<16xf32>
    %75 = vector.shape_cast %74 : vector<16xf32> to vector<16x1xf32>
    %76 = tpu.reciprocal %75 {approx = true} : vector<16x1xf32> -> vector<16x1xf32>
    %77 = vector.broadcast %76 : vector<16x1xf32> to vector<16x16xf32>
    %78 = arith.mulf %73, %77 : vector<16x16xf32>
    %79 = arith.truncf %78 : vector<16x16xf32> to vector<16x16xbf16>
    %cst_25 = arith.constant dense<0.000000e+00> : vector<16x8xf32>
    %80 = tpu.matmul %79, %65, %cst_25 {dimension_numbers = #tpu.dot_dimension_numbers<[1], [0], [0], [1], [0, 0, 1, 1], [], []>} : vector<16x16xbf16>, vector<16x8xbf16>, vector<16x8xf32> -> vector<16x8xf32>
    %81 = vector.extract_strided_slice %34 {offsets = [0, 16], sizes = [16, 8], strides = [1, 1]} : vector<16x32xbf16> to vector<16x8xbf16>
    %82 = vector.extract_strided_slice %36 {offsets = [0, 16], sizes = [16, 8], strides = [1, 1]} : vector<16x32xbf16> to vector<16x8xbf16>
    %83 = vector.extract_strided_slice %38 {offsets = [0, 16], sizes = [16, 8], strides = [1, 1]} : vector<16x32xbf16> to vector<16x8xbf16>
    %cst_26 = arith.constant dense<0.000000e+00> : vector<16x16xf32>
    %84 = tpu.matmul %81, %82, %cst_26 {dimension_numbers = #tpu.dot_dimension_numbers<[1], [1], [0], [0], [0, 0, 1, 0], [], []>} : vector<16x8xbf16>, vector<16x8xbf16>, vector<16x16xf32> -> vector<16x16xf32>
    %85 = vector.broadcast %44 : vector<1x16xf32> to vector<16x16xf32>
    %86 = arith.addf %84, %85 : vector<16x16xf32>
    %cst_27 = arith.constant dense<0xFF800000> : vector<16xf32>
    %87 = vector.multi_reduction <maximumf>, %86, %cst_27 [1] : vector<16x16xf32> to vector<16xf32>
    %88 = vector.shape_cast %87 : vector<16xf32> to vector<16x1xf32>
    %89 = vector.broadcast %88 : vector<16x1xf32> to vector<16x16xf32>
    %90 = arith.subf %86, %89 : vector<16x16xf32>
    %91 = math.exp %90 : vector<16x16xf32>
    %cst_28 = arith.constant dense<0.000000e+00> : vector<16xf32>
    %92 = vector.multi_reduction <add>, %91, %cst_28 [1] : vector<16x16xf32> to vector<16xf32>
    %93 = vector.shape_cast %92 : vector<16xf32> to vector<16x1xf32>
    %94 = tpu.reciprocal %93 {approx = true} : vector<16x1xf32> -> vector<16x1xf32>
    %95 = vector.broadcast %94 : vector<16x1xf32> to vector<16x16xf32>
    %96 = arith.mulf %91, %95 : vector<16x16xf32>
    %97 = arith.truncf %96 : vector<16x16xf32> to vector<16x16xbf16>
    %cst_29 = arith.constant dense<0.000000e+00> : vector<16x8xf32>
    %98 = tpu.matmul %97, %83, %cst_29 {dimension_numbers = #tpu.dot_dimension_numbers<[1], [0], [0], [1], [0, 0, 1, 1], [], []>} : vector<16x16xbf16>, vector<16x8xbf16>, vector<16x8xf32> -> vector<16x8xf32>
    %99 = vector.extract_strided_slice %34 {offsets = [0, 24], sizes = [16, 8], strides = [1, 1]} : vector<16x32xbf16> to vector<16x8xbf16>
    %100 = vector.extract_strided_slice %36 {offsets = [0, 24], sizes = [16, 8], strides = [1, 1]} : vector<16x32xbf16> to vector<16x8xbf16>
    %101 = vector.extract_strided_slice %38 {offsets = [0, 24], sizes = [16, 8], strides = [1, 1]} : vector<16x32xbf16> to vector<16x8xbf16>
    %cst_30 = arith.constant dense<0.000000e+00> : vector<16x16xf32>
    %102 = tpu.matmul %99, %100, %cst_30 {dimension_numbers = #tpu.dot_dimension_numbers<[1], [1], [0], [0], [0, 0, 1, 0], [], []>} : vector<16x8xbf16>, vector<16x8xbf16>, vector<16x16xf32> -> vector<16x16xf32>
    %103 = vector.broadcast %44 : vector<1x16xf32> to vector<16x16xf32>
    %104 = arith.addf %102, %103 : vector<16x16xf32>
    %cst_31 = arith.constant dense<0xFF800000> : vector<16xf32>
    %105 = vector.multi_reduction <maximumf>, %104, %cst_31 [1] : vector<16x16xf32> to vector<16xf32>
    %106 = vector.shape_cast %105 : vector<16xf32> to vector<16x1xf32>
    %107 = vector.broadcast %106 : vector<16x1xf32> to vector<16x16xf32>
    %108 = arith.subf %104, %107 : vector<16x16xf32>
    %109 = math.exp %108 : vector<16x16xf32>
    %cst_32 = arith.constant dense<0.000000e+00> : vector<16xf32>
    %110 = vector.multi_reduction <add>, %109, %cst_32 [1] : vector<16x16xf32> to vector<16xf32>
    %111 = vector.shape_cast %110 : vector<16xf32> to vector<16x1xf32>
    %112 = tpu.reciprocal %111 {approx = true} : vector<16x1xf32> -> vector<16x1xf32>
    %113 = vector.broadcast %112 : vector<16x1xf32> to vector<16x16xf32>
    %114 = arith.mulf %109, %113 : vector<16x16xf32>
    %115 = arith.truncf %114 : vector<16x16xf32> to vector<16x16xbf16>
    %cst_33 = arith.constant dense<0.000000e+00> : vector<16x8xf32>
    %116 = tpu.matmul %115, %101, %cst_33 {dimension_numbers = #tpu.dot_dimension_numbers<[1], [0], [0], [1], [0, 0, 1, 1], [], []>} : vector<16x16xbf16>, vector<16x8xbf16>, vector<16x8xf32> -> vector<16x8xf32>
    %117 = tpu.concatenate %62, %80, %98, %116 in 1 : vector<16x8xf32>, vector<16x8xf32>, vector<16x8xf32>, vector<16x8xf32> -> vector<16x32xf32>
    %118 = arith.truncf %117 : vector<16x32xf32> to vector<16x32xbf16>
    %c0_34 = arith.constant 0 : index
    %c0_35 = arith.constant 0 : index
    %119 = vector.load %arg6[%c0_34, %c0_35] : memref<32x32xbf16, #tpu.memory_space<vmem>>, vector<32x32xbf16>
    %cst_36 = arith.constant dense<0.000000e+00> : vector<16x32xf32>
    %120 = tpu.matmul %118, %119, %cst_36 {dimension_numbers = #tpu.dot_dimension_numbers<[1], [0], [0], [1], [0, 0, 1, 1], [], []>} : vector<16x32xbf16>, vector<32x32xbf16>, vector<16x32xf32> -> vector<16x32xf32>
    %121 = arith.addf %2, %120 : vector<16x32xf32>
    %c0_37 = arith.constant 0 : index
    %c0_38 = arith.constant 0 : index
    %122 = vector.load %arg7[%c0_37, %c0_38] : memref<1x32xf32, #tpu.memory_space<vmem>>, vector<1x32xf32>
    %123 = vector.broadcast %122 : vector<1x32xf32> to vector<16x32xf32>
    %124 = arith.addf %121, %123 : vector<16x32xf32>
    %c0_39 = arith.constant 0 : index
    %c0_40 = arith.constant 0 : index
    %125 = vector.load %arg8[%c0_39, %c0_40] : memref<1x32xf32, #tpu.memory_space<vmem>>, vector<1x32xf32>
    %c0_41 = arith.constant 0 : index
    %c0_42 = arith.constant 0 : index
    %126 = vector.load %arg9[%c0_41, %c0_42] : memref<1x32xf32, #tpu.memory_space<vmem>>, vector<1x32xf32>
    %cst_43 = arith.constant dense<0.000000e+00> : vector<16xf32>
    %127 = vector.multi_reduction <add>, %124, %cst_43 [1] : vector<16x32xf32> to vector<16xf32>
    %128 = vector.shape_cast %127 : vector<16xf32> to vector<16x1xf32>
    %cst_44 = arith.constant 3.200000e+01 : f32
    %129 = vector.broadcast %cst_44 : f32 to vector<16x1xf32>
    %130 = arith.divf %128, %129 : vector<16x1xf32>
    %131 = vector.broadcast %130 : vector<16x1xf32> to vector<16x32xf32>
    %132 = arith.subf %124, %131 : vector<16x32xf32>
    %133 = arith.mulf %132, %132 : vector<16x32xf32>
    %cst_45 = arith.constant dense<0.000000e+00> : vector<16xf32>
    %134 = vector.multi_reduction <add>, %133, %cst_45 [1] : vector<16x32xf32> to vector<16xf32>
    %135 = vector.shape_cast %134 : vector<16xf32> to vector<16x1xf32>
    %cst_46 = arith.constant 3.200000e+01 : f32
    %136 = vector.broadcast %cst_46 : f32 to vector<16x1xf32>
    %137 = arith.divf %135, %136 : vector<16x1xf32>
    %cst_47 = arith.constant 9.99999974E-6 : f32
    %138 = vector.broadcast %cst_47 : f32 to vector<16x1xf32>
    %139 = arith.addf %137, %138 : vector<16x1xf32>
    %140 = math.rsqrt %139 : vector<16x1xf32>
    %141 = vector.broadcast %140 : vector<16x1xf32> to vector<16x32xf32>
    %142 = arith.mulf %132, %141 : vector<16x32xf32>
    %143 = vector.broadcast %125 : vector<1x32xf32> to vector<16x32xf32>
    %144 = arith.mulf %142, %143 : vector<16x32xf32>
    %145 = vector.broadcast %126 : vector<1x32xf32> to vector<16x32xf32>
    %146 = arith.addf %144, %145 : vector<16x32xf32>
    %147 = arith.truncf %146 : vector<16x32xf32> to vector<16x32xbf16>
    %c0_48 = arith.constant 0 : index
    %c0_49 = arith.constant 0 : index
    %148 = vector.load %arg10[%c0_48, %c0_49] : memref<32x128xbf16, #tpu.memory_space<vmem>>, vector<32x128xbf16>
    %cst_50 = arith.constant dense<0.000000e+00> : vector<16x128xf32>
    %149 = tpu.matmul %147, %148, %cst_50 {dimension_numbers = #tpu.dot_dimension_numbers<[1], [0], [0], [1], [0, 0, 1, 1], [], []>} : vector<16x32xbf16>, vector<32x128xbf16>, vector<16x128xf32> -> vector<16x128xf32>
    %c0_51 = arith.constant 0 : index
    %c0_52 = arith.constant 0 : index
    %150 = vector.load %arg11[%c0_51, %c0_52] : memref<1x128xf32, #tpu.memory_space<vmem>>, vector<1x128xf32>
    %151 = vector.broadcast %150 : vector<1x128xf32> to vector<16x128xf32>
    %152 = arith.addf %149, %151 : vector<16x128xf32>
    %cst_53 = arith.constant 5.000000e-01 : f32
    %153 = vector.broadcast %cst_53 : f32 to vector<16x128xf32>
    %154 = arith.mulf %153, %152 : vector<16x128xf32>
    %cst_54 = arith.constant 0.707106769 : f32
    %155 = vector.broadcast %cst_54 : f32 to vector<16x128xf32>
    %156 = arith.mulf %152, %155 : vector<16x128xf32>
    %157 = math.erf %156 : vector<16x128xf32>
    %cst_55 = arith.constant 1.000000e+00 : f32
    %158 = vector.broadcast %cst_55 : f32 to vector<16x128xf32>
    %159 = arith.addf %158, %157 : vector<16x128xf32>
    %160 = arith.mulf %154, %159 : vector<16x128xf32>
    %161 = arith.truncf %160 : vector<16x128xf32> to vector<16x128xbf16>
    %c0_56 = arith.constant 0 : index
    %c0_57 = arith.constant 0 : index
    %162 = vector.load %arg12[%c0_56, %c0_57] : memref<128x32xbf16, #tpu.memory_space<vmem>>, vector<128x32xbf16>
    %cst_58 = arith.constant dense<0.000000e+00> : vector<16x32xf32>
    %163 = tpu.matmul %161, %162, %cst_58 {dimension_numbers = #tpu.dot_dimension_numbers<[1], [0], [0], [1], [0, 0, 1, 1], [], []>} : vector<16x128xbf16>, vector<128x32xbf16>, vector<16x32xf32> -> vector<16x32xf32>
    %164 = arith.addf %124, %163 : vector<16x32xf32>
    %c0_59 = arith.constant 0 : index
    %c0_60 = arith.constant 0 : index
    %165 = vector.load %arg13[%c0_59, %c0_60] : memref<1x32xf32, #tpu.memory_space<vmem>>, vector<1x32xf32>
    %166 = vector.broadcast %165 : vector<1x32xf32> to vector<16x32xf32>
    %167 = arith.addf %164, %166 : vector<16x32xf32>
    %168 = arith.truncf %167 : vector<16x32xf32> to vector<16x32xbf16>
    %c0_61 = arith.constant 0 : index
    %c0_62 = arith.constant 0 : index
    %c0_63 = arith.constant 0 : index
    %169 = vector.load %arg14[%c0_61, %c0_62, %c0_63] : memref<1x16x32xbf16, #tpu.memory_space<vmem>>, vector<1x16x32xbf16>
    %170 = vector.shape_cast %169 : vector<1x16x32xbf16> to vector<16x32xbf16>
    %171 = vector.shape_cast %168 : vector<16x32xbf16> to vector<1x16x32xbf16>
    tpu.vector_store %arg14[%c0_61, %c0_62, %c0_63], %171 {strides = array<i32>} : memref<1x16x32xbf16, #tpu.memory_space<vmem>>, vector<1x16x32xbf16>,
    return
  }
  func.func @transform_0(%arg0: i32) -> (i32, i32, i32) {
    %c0_i32 = arith.constant 0 : i32
    %c0_i32_0 = arith.constant 0 : i32
    %c0_i32_1 = arith.constant 0 : i32
    return %arg0, %c0_i32, %c0_i32_0 : i32, i32, i32
  }
  func.func @transform_1(%arg0: i32) -> (i32, i32) {
    %c0_i32 = arith.constant 0 : i32
    %c0_i32_0 = arith.constant 0 : i32
    %c0_i32_1 = arith.constant 0 : i32
    return %c0_i32, %c0_i32_0 : i32, i32
  }
  func.func @transform_2(%arg0: i32) -> (i32, i32) {
    %c0_i32 = arith.constant 0 : i32
    %c0_i32_0 = arith.constant 0 : i32
    %c0_i32_1 = arith.constant 0 : i32
    return %c0_i32, %c0_i32_0 : i32, i32
  }
  func.func @transform_3(%arg0: i32) -> (i32, i32) {
    %c0_i32 = arith.constant 0 : i32
    %c0_i32_0 = arith.constant 0 : i32
    %c0_i32_1 = arith.constant 0 : i32
    return %c0_i32, %c0_i32_0 : i32, i32
  }
  func.func @transform_4(%arg0: i32) -> (i32, i32) {
    %c0_i32 = arith.constant 0 : i32
    %c0_i32_0 = arith.constant 0 : i32
    %c0_i32_1 = arith.constant 0 : i32
    return %c0_i32, %c0_i32_0 : i32, i32
  }
  func.func @transform_5(%arg0: i32) -> (i32, i32) {
    %c0_i32 = arith.constant 0 : i32
    %c0_i32_0 = arith.constant 0 : i32
    %c0_i32_1 = arith.constant 0 : i32
    return %c0_i32, %c0_i32_0 : i32, i32
  }
  func.func @transform_6(%arg0: i32) -> (i32, i32) {
    %c0_i32 = arith.constant 0 : i32
    %c0_i32_0 = arith.constant 0 : i32
    %c0_i32_1 = arith.constant 0 : i32
    return %c0_i32, %c0_i32_0 : i32, i32
  }
  func.func @transform_7(%arg0: i32) -> (i32, i32) {
    %c0_i32 = arith.constant 0 : i32
    %c0_i32_0 = arith.constant 0 : i32
    %c0_i32_1 = arith.constant 0 : i32
    return %c0_i32, %c0_i32_0 : i32, i32
  }
  func.func @transform_8(%arg0: i32) -> (i32, i32) {
    %c0_i32 = arith.constant 0 : i32
    %c0_i32_0 = arith.constant 0 : i32
    %c0_i32_1 = arith.constant 0 : i32
    return %c0_i32, %c0_i32_0 : i32, i32
  }
  func.func @transform_9(%arg0: i32) -> (i32, i32) {
    %c0_i32 = arith.constant 0 : i32
    %c0_i32_0 = arith.constant 0 : i32
    %c0_i32_1 = arith.constant 0 : i32
    return %c0_i32, %c0_i32_0 : i32, i32
  }
  func.func @transform_10(%arg0: i32) -> (i32, i32) {
    %c0_i32 = arith.constant 0 : i32
    %c0_i32_0 = arith.constant 0 : i32
    %c0_i32_1 = arith.constant 0 : i32
    return %c0_i32, %c0_i32_0 : i32, i32
  }
  func.func @transform_11(%arg0: i32) -> (i32, i32) {
    %c0_i32 = arith.constant 0 : i32
    %c0_i32_0 = arith.constant 0 : i32
    %c0_i32_1 = arith.constant 0 : i32
    return %c0_i32, %c0_i32_0 : i32, i32
  }
  func.func @transform_12(%arg0: i32) -> (i32, i32) {
    %c0_i32 = arith.constant 0 : i32
    %c0_i32_0 = arith.constant 0 : i32
    %c0_i32_1 = arith.constant 0 : i32
    return %c0_i32, %c0_i32_0 : i32, i32
  }
  func.func @transform_13(%arg0: i32) -> (i32, i32, i32) {
    %c0_i32 = arith.constant 0 : i32
    %c0_i32_0 = arith.constant 0 : i32
    %c0_i32_1 = arith.constant 0 : i32
    return %arg0, %c0_i32, %c0_i32_0 : i32, i32, i32
  }
}

module attributes {stable_mosaic.version = 11 : i64} {
  func.func @_ln_linear_kernel(%arg0: i32, %arg1: memref<32x32xbf16, #tpu.memory_space<vmem>>, %arg2: memref<1x32xf32, #tpu.memory_space<vmem>>, %arg3: memref<1x32xf32, #tpu.memory_space<vmem>>, %arg4: memref<32x32xbf16, #tpu.memory_space<vmem>>, %arg5: memref<1x32xf32, #tpu.memory_space<vmem>>, %arg6: memref<32x32xf32, #tpu.memory_space<vmem>>) attributes {dimension_semantics = [#tpu.dimension_semantics<parallel>], iteration_bounds = array<i64: 1>, scalar_prefetch = 0 : i64, scratch_operands = 0 : i64, tpu.core_type = #tpu.core_type<tc>, window_params = [{transform_indices = @transform_0, window_bounds = array<i64: 32, 32>}, {pipeline_mode = #tpu.pipeline_mode<synchronous>, transform_indices = @transform_1, window_bounds = array<i64: 1, 32>}, {pipeline_mode = #tpu.pipeline_mode<synchronous>, transform_indices = @transform_2, window_bounds = array<i64: 1, 32>}, {pipeline_mode = #tpu.pipeline_mode<synchronous>, transform_indices = @transform_3, window_bounds = array<i64: 32, 32>}, {pipeline_mode = #tpu.pipeline_mode<synchronous>, transform_indices = @transform_4, window_bounds = array<i64: 1, 32>}, {transform_indices = @transform_5, window_bounds = array<i64: 32, 32>}]} {
    %c0 = arith.constant 0 : index
    %c0_0 = arith.constant 0 : index
    %0 = vector.load %arg1[%c0, %c0_0] : memref<32x32xbf16, #tpu.memory_space<vmem>>, vector<32x32xbf16>
    %1 = arith.extf %0 : vector<32x32xbf16> to vector<32x32xf32>
    %c0_1 = arith.constant 0 : index
    %c0_2 = arith.constant 0 : index
    %2 = vector.load %arg2[%c0_1, %c0_2] : memref<1x32xf32, #tpu.memory_space<vmem>>, vector<1x32xf32>
    %c0_3 = arith.constant 0 : index
    %c0_4 = arith.constant 0 : index
    %3 = vector.load %arg3[%c0_3, %c0_4] : memref<1x32xf32, #tpu.memory_space<vmem>>, vector<1x32xf32>
    %cst = arith.constant dense<0.000000e+00> : vector<32xf32>
    %4 = vector.multi_reduction <add>, %1, %cst [1] : vector<32x32xf32> to vector<32xf32>
    %5 = vector.shape_cast %4 : vector<32xf32> to vector<32x1xf32>
    %cst_5 = arith.constant 3.200000e+01 : f32
    %6 = vector.broadcast %cst_5 : f32 to vector<32x1xf32>
    %7 = arith.divf %5, %6 : vector<32x1xf32>
    %8 = vector.broadcast %7 : vector<32x1xf32> to vector<32x32xf32>
    %9 = arith.subf %1, %8 : vector<32x32xf32>
    %10 = arith.mulf %9, %9 : vector<32x32xf32>
    %cst_6 = arith.constant dense<0.000000e+00> : vector<32xf32>
    %11 = vector.multi_reduction <add>, %10, %cst_6 [1] : vector<32x32xf32> to vector<32xf32>
    %12 = vector.shape_cast %11 : vector<32xf32> to vector<32x1xf32>
    %cst_7 = arith.constant 3.200000e+01 : f32
    %13 = vector.broadcast %cst_7 : f32 to vector<32x1xf32>
    %14 = arith.divf %12, %13 : vector<32x1xf32>
    %cst_8 = arith.constant 9.99999974E-6 : f32
    %15 = vector.broadcast %cst_8 : f32 to vector<32x1xf32>
    %16 = arith.addf %14, %15 : vector<32x1xf32>
    %17 = math.rsqrt %16 : vector<32x1xf32>
    %18 = vector.broadcast %17 : vector<32x1xf32> to vector<32x32xf32>
    %19 = arith.mulf %9, %18 : vector<32x32xf32>
    %20 = vector.broadcast %2 : vector<1x32xf32> to vector<32x32xf32>
    %21 = arith.mulf %19, %20 : vector<32x32xf32>
    %22 = vector.broadcast %3 : vector<1x32xf32> to vector<32x32xf32>
    %23 = arith.addf %21, %22 : vector<32x32xf32>
    %24 = arith.truncf %23 : vector<32x32xf32> to vector<32x32xbf16>
    %c0_9 = arith.constant 0 : index
    %c0_10 = arith.constant 0 : index
    %25 = vector.load %arg4[%c0_9, %c0_10] : memref<32x32xbf16, #tpu.memory_space<vmem>>, vector<32x32xbf16>
    %cst_11 = arith.constant dense<0.000000e+00> : vector<32x32xf32>
    %26 = tpu.matmul %24, %25, %cst_11 {dimension_numbers = #tpu.dot_dimension_numbers<[1], [0], [0], [1], [0, 0, 1, 1], [], []>} : vector<32x32xbf16>, vector<32x32xbf16>, vector<32x32xf32> -> vector<32x32xf32>
    %c0_12 = arith.constant 0 : index
    %c0_13 = arith.constant 0 : index
    %27 = vector.load %arg5[%c0_12, %c0_13] : memref<1x32xf32, #tpu.memory_space<vmem>>, vector<1x32xf32>
    %28 = vector.broadcast %27 : vector<1x32xf32> to vector<32x32xf32>
    %29 = arith.addf %26, %28 : vector<32x32xf32>
    %c0_14 = arith.constant 0 : index
    %c0_15 = arith.constant 0 : index
    %30 = vector.load %arg6[%c0_14, %c0_15] : memref<32x32xf32, #tpu.memory_space<vmem>>, vector<32x32xf32>
    tpu.vector_store %arg6[%c0_14, %c0_15], %29 {strides = array<i32>} : memref<32x32xf32, #tpu.memory_space<vmem>>, vector<32x32xf32>,
    return
  }
  func.func @transform_0(%arg0: i32) -> (i32, i32) {
    %c0_i32 = arith.constant 0 : i32
    %c0_i32_0 = arith.constant 0 : i32
    return %arg0, %c0_i32 : i32, i32
  }
  func.func @transform_1(%arg0: i32) -> (i32, i32) {
    %c0_i32 = arith.constant 0 : i32
    %c0_i32_0 = arith.constant 0 : i32
    %c0_i32_1 = arith.constant 0 : i32
    return %c0_i32, %c0_i32_0 : i32, i32
  }
  func.func @transform_2(%arg0: i32) -> (i32, i32) {
    %c0_i32 = arith.constant 0 : i32
    %c0_i32_0 = arith.constant 0 : i32
    %c0_i32_1 = arith.constant 0 : i32
    return %c0_i32, %c0_i32_0 : i32, i32
  }
  func.func @transform_3(%arg0: i32) -> (i32, i32) {
    %c0_i32 = arith.constant 0 : i32
    %c0_i32_0 = arith.constant 0 : i32
    %c0_i32_1 = arith.constant 0 : i32
    return %c0_i32, %c0_i32_0 : i32, i32
  }
  func.func @transform_4(%arg0: i32) -> (i32, i32) {
    %c0_i32 = arith.constant 0 : i32
    %c0_i32_0 = arith.constant 0 : i32
    %c0_i32_1 = arith.constant 0 : i32
    return %c0_i32, %c0_i32_0 : i32, i32
  }
  func.func @transform_5(%arg0: i32) -> (i32, i32) {
    %c0_i32 = arith.constant 0 : i32
    %c0_i32_0 = arith.constant 0 : i32
    return %arg0, %c0_i32 : i32, i32
  }
}

module attributes {stable_mosaic.version = 11 : i64} {
  func.func @_layernorm_kernel(%arg0: i32, %arg1: memref<32x32xbf16, #tpu.memory_space<vmem>>, %arg2: memref<1x32xf32, #tpu.memory_space<vmem>>, %arg3: memref<1x32xf32, #tpu.memory_space<vmem>>, %arg4: memref<32x32xf32, #tpu.memory_space<vmem>>) attributes {dimension_semantics = [#tpu.dimension_semantics<parallel>], iteration_bounds = array<i64: 1>, scalar_prefetch = 0 : i64, scratch_operands = 0 : i64, tpu.core_type = #tpu.core_type<tc>, window_params = [{transform_indices = @transform_0, window_bounds = array<i64: 32, 32>}, {pipeline_mode = #tpu.pipeline_mode<synchronous>, transform_indices = @transform_1, window_bounds = array<i64: 1, 32>}, {pipeline_mode = #tpu.pipeline_mode<synchronous>, transform_indices = @transform_2, window_bounds = array<i64: 1, 32>}, {transform_indices = @transform_3, window_bounds = array<i64: 32, 32>}]} {
    %c0 = arith.constant 0 : index
    %c0_0 = arith.constant 0 : index
    %0 = vector.load %arg1[%c0, %c0_0] : memref<32x32xbf16, #tpu.memory_space<vmem>>, vector<32x32xbf16>
    %1 = arith.extf %0 : vector<32x32xbf16> to vector<32x32xf32>
    %c0_1 = arith.constant 0 : index
    %c0_2 = arith.constant 0 : index
    %2 = vector.load %arg2[%c0_1, %c0_2] : memref<1x32xf32, #tpu.memory_space<vmem>>, vector<1x32xf32>
    %c0_3 = arith.constant 0 : index
    %c0_4 = arith.constant 0 : index
    %3 = vector.load %arg3[%c0_3, %c0_4] : memref<1x32xf32, #tpu.memory_space<vmem>>, vector<1x32xf32>
    %cst = arith.constant dense<0.000000e+00> : vector<32xf32>
    %4 = vector.multi_reduction <add>, %1, %cst [1] : vector<32x32xf32> to vector<32xf32>
    %5 = vector.shape_cast %4 : vector<32xf32> to vector<32x1xf32>
    %cst_5 = arith.constant 3.200000e+01 : f32
    %6 = vector.broadcast %cst_5 : f32 to vector<32x1xf32>
    %7 = arith.divf %5, %6 : vector<32x1xf32>
    %8 = vector.broadcast %7 : vector<32x1xf32> to vector<32x32xf32>
    %9 = arith.subf %1, %8 : vector<32x32xf32>
    %10 = arith.mulf %9, %9 : vector<32x32xf32>
    %cst_6 = arith.constant dense<0.000000e+00> : vector<32xf32>
    %11 = vector.multi_reduction <add>, %10, %cst_6 [1] : vector<32x32xf32> to vector<32xf32>
    %12 = vector.shape_cast %11 : vector<32xf32> to vector<32x1xf32>
    %cst_7 = arith.constant 3.200000e+01 : f32
    %13 = vector.broadcast %cst_7 : f32 to vector<32x1xf32>
    %14 = arith.divf %12, %13 : vector<32x1xf32>
    %cst_8 = arith.constant 9.99999974E-6 : f32
    %15 = vector.broadcast %cst_8 : f32 to vector<32x1xf32>
    %16 = arith.addf %14, %15 : vector<32x1xf32>
    %17 = math.rsqrt %16 : vector<32x1xf32>
    %18 = vector.broadcast %17 : vector<32x1xf32> to vector<32x32xf32>
    %19 = arith.mulf %9, %18 : vector<32x32xf32>
    %20 = vector.broadcast %2 : vector<1x32xf32> to vector<32x32xf32>
    %21 = arith.mulf %19, %20 : vector<32x32xf32>
    %22 = vector.broadcast %3 : vector<1x32xf32> to vector<32x32xf32>
    %23 = arith.addf %21, %22 : vector<32x32xf32>
    %c0_9 = arith.constant 0 : index
    %c0_10 = arith.constant 0 : index
    %24 = vector.load %arg4[%c0_9, %c0_10] : memref<32x32xf32, #tpu.memory_space<vmem>>, vector<32x32xf32>
    tpu.vector_store %arg4[%c0_9, %c0_10], %23 {strides = array<i32>} : memref<32x32xf32, #tpu.memory_space<vmem>>, vector<32x32xf32>,
    return
  }
  func.func @transform_0(%arg0: i32) -> (i32, i32) {
    %c0_i32 = arith.constant 0 : i32
    %c0_i32_0 = arith.constant 0 : i32
    return %arg0, %c0_i32 : i32, i32
  }
  func.func @transform_1(%arg0: i32) -> (i32, i32) {
    %c0_i32 = arith.constant 0 : i32
    %c0_i32_0 = arith.constant 0 : i32
    %c0_i32_1 = arith.constant 0 : i32
    return %c0_i32, %c0_i32_0 : i32, i32
  }
  func.func @transform_2(%arg0: i32) -> (i32, i32) {
    %c0_i32 = arith.constant 0 : i32
    %c0_i32_0 = arith.constant 0 : i32
    %c0_i32_1 = arith.constant 0 : i32
    return %c0_i32, %c0_i32_0 : i32, i32
  }
  func.func @transform_3(%arg0: i32) -> (i32, i32) {
    %c0_i32 = arith.constant 0 : i32
    %c0_i32_0 = arith.constant 0 : i32
    return %arg0, %c0_i32 : i32, i32
  }
}

</mosaic_0001>

<llo_original>
// kernel: m2d_forward.10
$region0: #{m2d_forward.10}
  #allocation0 [shape = 'u32[]', space=smem, size = 0x4, offset = 0x4, fixed_abs, tag = 'smem constant byte address 0x4 - core index']
  #allocation1 [shape = 'u32[72,128]{1,0:T(1,128)}', space=vmem, size = 0x9000, scoped, tag = 'internal scratch']
  %s0 = inlined_call_operand.vmem [shape: f32[2,4,192], index: 0, kind: input, shape index: {}]
  %s1 = inlined_call_operand.vmem [shape: bf16[192,32], index: 1, kind: input, shape index: {}]
  %s2 = inlined_call_operand.vmem [shape: f32[1,32], index: 2, kind: input, shape index: {}]
  %s3 = inlined_call_operand.vmem [shape: f32[1,4,32], index: 3, kind: input, shape index: {}]
  %s4 = inlined_call_operand.vmem [shape: bf16[2,4,32], index: 4, kind: output, shape index: {}]
  %s5 = sld [smem:[#allocation0]]
  $region49: #{m2d_forward.10} parent=0
    _
  %s7 = ssub.s32 1, %s5
  %s8 = scalar_select 0, %s7, %s5
  loop: start=0, step=1, limit=4
  $region2: #{m2d_forward.10} parent=0 // loop_pre_header
    _
  $region3: #{m2d_forward.10} parent=0 // loop_header
    %s10 = sphi 0, %s14
    %p11 = scmp.ge.s32.totalorder %s10, 4
    %s20 = sphi 0, %s22
    %s23 = sphi 0, %s20
    %s24 = sphi 0, %s23
    %s40 = sphi 0, %s24
    %s44 = sphi 0, %s44
    %s46 = sphi 0, %s44
    %s47 = sphi 0, %s46
    %s61 = sphi 0, %s47
    %s65 = sphi 0, %s65
    %s67 = sphi 0, %s65
    %s68 = sphi 0, %s67
    %s82 = sphi 0, %s68
    %s86 = sphi 0, %s86
    %s88 = sphi 0, %s86
    %s89 = sphi 0, %s88
    %s103 = sphi 0, %s89
    %s109 = sphi 0, %s111
    %s112 = sphi 0, %s109
    %s113 = sphi 0, %s112
    %s129 = sphi 0, %s113
  $region4: #{m2d_forward.10} parent=0 // loop_header_branch
    %13 = sbr.rel (%p11) target = $region8
  $region5: #{m2d_forward.10} parent=0 // loop_body
    %s15 = ssub.s32 %s10, 1
    %s16 = ssub.s32 %s10, 2
    %s17 = sadd.s32 %s10, 1
    %s18 = ssub.s32 %s10, %s17
    %p19 = scmp.eq.s32.totalorder %s18, 0
    %s21 = sadd.s32 %s20, 1
    %s22 = scalar_select %p19, %s20, %s21
    %p25 = pneg %p19
    %p26 = scmp.eq.s32.totalorder %s10, 1
    %p27 = por %p25, %p26
    %p28 = scmp.ne.s32.totalorder %s20, %s23
    %p29 = scmp.eq.s32.totalorder %s10, 0
    %p30 = por %p28, %p29
    %p31 = scmp.ne.s32.totalorder %s20, %s23
    %p32 = scmp.eq.s32.totalorder %s15, 1
    %p33 = por %p31, %p32
    %p34 = scmp.ne.s32.totalorder %s23, %s24
    %p35 = scmp.eq.s32.totalorder %s15, 0
    %p36 = por %p34, %p35
    %p37 = scmp.ne.s32.totalorder %s23, %s24
    %p38 = scmp.eq.s32.totalorder %s16, 1
    %p39 = por %p37, %p38
    %p41 = scmp.ne.s32.totalorder %s24, %s40
    %p42 = scmp.eq.s32.totalorder %s16, 0
    %p43 = por %p41, %p42
    %s45 = sadd.s32 %s44, 1
    %p48 = scmp.eq.s32.totalorder %s10, 1
    %p49 = scmp.ne.s32.totalorder %s44, %s46
    %p50 = scmp.eq.s32.totalorder %s10, 0
    %p51 = por %p49, %p50
    %p52 = scmp.ne.s32.totalorder %s44, %s46
    %p53 = scmp.eq.s32.totalorder %s15, 1
    %p54 = por %p52, %p53
    %p55 = scmp.ne.s32.totalorder %s46, %s47
    %p56 = scmp.eq.s32.totalorder %s15, 0
    %p57 = por %p55, %p56
    %p58 = scmp.ne.s32.totalorder %s46, %s47
    %p59 = scmp.eq.s32.totalorder %s16, 1
    %p60 = por %p58, %p59
    %p62 = scmp.ne.s32.totalorder %s47, %s61
    %p63 = scmp.eq.s32.totalorder %s16, 0
    %p64 = por %p62, %p63
    %s66 = sadd.s32 %s65, 1
    %p69 = scmp.eq.s32.totalorder %s10, 1
    %p70 = scmp.ne.s32.totalorder %s65, %s67
    %p71 = scmp.eq.s32.totalorder %s10, 0
    %p72 = por %p70, %p71
    %p73 = scmp.ne.s32.totalorder %s65, %s67
    %p74 = scmp.eq.s32.totalorder %s15, 1
    %p75 = por %p73, %p74
    %p76 = scmp.ne.s32.totalorder %s67, %s68
    %p77 = scmp.eq.s32.totalorder %s15, 0
    %p78 = por %p76, %p77
    %p79 = scmp.ne.s32.totalorder %s67, %s68
    %p80 = scmp.eq.s32.totalorder %s16, 1
    %p81 = por %p79, %p80
    %p83 = scmp.ne.s32.totalorder %s68, %s82
    %p84 = scmp.eq.s32.totalorder %s16, 0
    %p85 = por %p83, %p84
    %s87 = sadd.s32 %s86, 1
    %p90 = scmp.eq.s32.totalorder %s10, 1
    %p91 = scmp.ne.s32.totalorder %s86, %s88
    %p92 = scmp.eq.s32.totalorder %s10, 0
    %p93 = por %p91, %p92
    %p94 = scmp.ne.s32.totalorder %s86, %s88
    %p95 = scmp.eq.s32.totalorder %s15, 1
    %p96 = por %p94, %p95
    %p97 = scmp.ne.s32.totalorder %s88, %s89
    %p98 = scmp.eq.s32.totalorder %s15, 0
    %p99 = por %p97, %p98
    %p100 = scmp.ne.s32.totalorder %s88, %s89
    %p101 = scmp.eq.s32.totalorder %s16, 1
    %p102 = por %p100, %p101
    %p104 = scmp.ne.s32.totalorder %s89, %s103
    %p105 = scmp.eq.s32.totalorder %s16, 0
    %p106 = por %p104, %p105
    %s107 = ssub.s32 %s10, %s17
    %p108 = scmp.eq.s32.totalorder %s107, 0
    %s110 = sadd.s32 %s109, 1
    %s111 = scalar_select %p108, %s109, %s110
    %p114 = pneg %p108
    %p115 = scmp.eq.s32.totalorder %s10, 1
    %p116 = por %p114, %p115
    %p117 = scmp.ne.s32.totalorder %s109, %s112
    %p118 = scmp.eq.s32.totalorder %s10, 0
    %p119 = por %p117, %p118
    %p120 = scmp.ne.s32.totalorder %s109, %s112
    %p121 = scmp.eq.s32.totalorder %s15, 1
    %p122 = por %p120, %p121
    %p123 = scmp.ne.s32.totalorder %s112, %s113
    %p124 = scmp.eq.s32.totalorder %s15, 0
    %p125 = por %p123, %p124
    %p126 = scmp.ne.s32.totalorder %s112, %s113
    %p127 = scmp.eq.s32.totalorder %s16, 1
    %p128 = por %p126, %p127
    %p130 = scmp.ne.s32.totalorder %s113, %s129
    %p131 = scmp.eq.s32.totalorder %s16, 0
    %p132 = por %p130, %p131
    %p133 = scmp.le.s32.totalorder 1, %s10
    %p134 = scmp.lt.s32.totalorder %s10, 3
    %p135 = pnand %p133, %p134
    %p136 = pneg %p135
    // Predicated region
    $region9: #{m2d_forward.10} parent=5 // pred_check
      _
    $region10: #{m2d_forward.10} parent=5 // pred_check_branch
      %138 = sbr.rel (%p135) target = $region12
    $region11: #{m2d_forward.10} parent=5 // pred_region
      %s139 = ssub.s32 %s10, 1
      // Predicated region
      $region13: #{m2d_forward.10} parent=11 // pred_check
        %p140 = pneg %p57
      $region14: #{m2d_forward.10} parent=11 // pred_check_branch
        %142 = sbr.rel (%p140) target = $region16
      $region15: #{m2d_forward.10} parent=11 // pred_region
        _
      $region16: #{m2d_forward.10} parent=11 // pred_fallthru
        _
      // Predicated region
      $region17: #{m2d_forward.10} parent=11 // pred_check
        %p143 = pneg %p78
      $region18: #{m2d_forward.10} parent=11 // pred_check_branch
        %145 = sbr.rel (%p143) target = $region20
      $region19: #{m2d_forward.10} parent=11 // pred_region
        _
      $region20: #{m2d_forward.10} parent=11 // pred_fallthru
        _
      // Predicated region
      $region21: #{m2d_forward.10} parent=11 // pred_check
        %p146 = pneg %p99
      $region22: #{m2d_forward.10} parent=11 // pred_check_branch
        %148 = sbr.rel (%p146) target = $region24
      $region23: #{m2d_forward.10} parent=11 // pred_region
        _
      $region24: #{m2d_forward.10} parent=11 // pred_fallthru
        _
    $region12: #{m2d_forward.10} parent=5 // pred_fallthru
      _
    %p149 = scmp.lt.s32.totalorder %s10, 2
    // Predicated region
    $region25: #{m2d_forward.10} parent=5 // pred_check
      %p150 = pneg %p149
    $region26: #{m2d_forward.10} parent=5 // pred_check_branch
      %152 = sbr.rel (%p150) target = $region28
    $region27: #{m2d_forward.10} parent=5 // pred_region
      // Predicated region
      $region29: #{m2d_forward.10} parent=27 // pred_check
        %p153 = pneg %p30
      $region30: #{m2d_forward.10} parent=27 // pred_check_branch
        %155 = sbr.rel (%p153) target = $region32
      $region31: #{m2d_forward.10} parent=27 // pred_region
        %p156 = scmp.lt.s32.totalorder %s10, 1
        %s157 = scalar_select %p156, %s10, 1
        %s158 = smul.addr %s157, 2
        %s159 = smul.addr %s158, 4
        %s160 = scalar_lea.vmem %s0, %s159
      $region32: #{m2d_forward.10} parent=27 // pred_fallthru
        _
    $region28: #{m2d_forward.10} parent=5 // pred_fallthru
      _
    %p161 = scmp.le.s32.totalorder 1, %s10
    %p162 = scmp.lt.s32.totalorder %s10, 3
    %p163 = pnand %p161, %p162
    %p164 = pneg %p163
    // Predicated region
    $region33: #{m2d_forward.10} parent=5 // pred_check
      _
    $region34: #{m2d_forward.10} parent=5 // pred_check_branch
      %166 = sbr.rel (%p163) target = $region36
    $region35: #{m2d_forward.10} parent=5 // pred_region
      %s167 = ssub.s32 %s10, 1
      %p168 = scmp.lt.s32.totalorder %s15, 1
      %s169 = scalar_select %p168, %s15, 1
      %s170 = smul.addr %s169, 2
      %s171 = smul.addr %s170, 4
      %s172 = scalar_lea.vmem %s0, %s171
      %p173 = pneg %p36
      %p174 = pneg %p33
      %p175 = pneg %p57
      %p176 = pneg %p54
      %p177 = pneg %p78
      %p178 = pneg %p75
      %p179 = pneg %p99
      %p180 = pneg %p96
      %p181 = pneg %p125
      %p182 = pneg %p122
      %p183 = scmp.lt.s32.totalorder %s15, 1
      %s184 = scalar_select %p183, %s15, 1
      %s185 = smul.addr %s184, 2
      %s186 = scalar_lea.vmem %s4, %s185
      %p187 = scmp.lt.s32.totalorder %s15, 1
      %s188 = scalar_select %p187, %s15, 1
      %s189 = smul.addr %s188, 2
      %s190 = smul.addr %s189, 4
      %s191 = scalar_lea.vmem %s0, %s190
      %p192 = scmp.lt.s32.totalorder %s15, 1
      %s193 = scalar_select %p192, %s15, 1
      %s194 = smul.addr %s193, 2
      %s195 = scalar_lea.vmem %s4, %s194
      %v197 = vld [vmem:[%s191] sm:$0xff]
      %199 = vst [vmem:[#allocation1] ss:$2 sm:$0xff] %v197
      %v200 = vld.sshfl [vmem:[#allocation1] sm:$0xff pattern:$0x75316420]
      %v201 = vld.sshfl [vmem:[#allocation1 + $0x8] sm:$0xff pattern:$0x75316420]
      %v204 = vpack.c.bf16 %v200, %v200
      %v205 = vpack.c.bf16 %v201, %v201
      %v206 = vld [vmem:[%s1] sm:$0xf]
      %v207 = vld [vmem:[%s1 + $0x4] sm:$0xf]
      %v208 = vld [vmem:[%s1 + $0x8] sm:$0xf]
      %v209 = vld [vmem:[%s1 + $0xc] sm:$0xf]
      %v210 = vld [vmem:[%s1 + $0x10] sm:$0xf]
      %v211 = vld [vmem:[%s1 + $0x14] sm:$0xf]
      %v212 = vld [vmem:[%s1 + $0x18] sm:$0xf]
      %v213 = vld [vmem:[%s1 + $0x1c] sm:$0xf]
      %v214 = vld [vmem:[%s1 + $0x20] sm:$0xf]
      %v215 = vld [vmem:[%s1 + $0x24] sm:$0xf]
      %v216 = vld [vmem:[%s1 + $0x28] sm:$0xf]
      %v217 = vld [vmem:[%s1 + $0x2c] sm:$0xf]
      %v218 = vld [vmem:[%s1 + $0x30] sm:$0xf]
      %v219 = vld [vmem:[%s1 + $0x34] sm:$0xf]
      %v220 = vld [vmem:[%s1 + $0x38] sm:$0xf]
      %v221 = vld [vmem:[%s1 + $0x3c] sm:$0xf]
      %v222 = vld [vmem:[%s1 + $0x40] sm:$0xf]
      %v223 = vld [vmem:[%s1 + $0x44] sm:$0xf]
      %v224 = vld [vmem:[%s1 + $0x48] sm:$0xf]
      %v225 = vld [vmem:[%s1 + $0x4c] sm:$0xf]
      %v226 = vld [vmem:[%s1 + $0x50] sm:$0xf]
      %v227 = vld [vmem:[%s1 + $0x54] sm:$0xf]
      %v228 = vld [vmem:[%s1 + $0x58] sm:$0xf]
      %v229 = vld [vmem:[%s1 + $0x5c] sm:$0xf]
      %v230 = vld [vmem:[%s2] sm:$0x1]
      %v232 = vperm.slane %v230, 0
      %v258 = vunpack.c.l.b16 %v206
      %v259 = vunpack.c.l.b16 %v207
      %v260 = vunpack.c.l.b16 %v208
      %v261 = vunpack.c.l.b16 %v209
      %v262 = vunpack.c.l.b16 %v210
      %v263 = vunpack.c.l.b16 %v211
      %v264 = vunpack.c.l.b16 %v212
      %v265 = vunpack.c.l.b16 %v213
      %v266 = vunpack.c.l.b16 %v214
      %v267 = vunpack.c.l.b16 %v215
      %v268 = vunpack.c.l.b16 %v216
      %v269 = vunpack.c.l.b16 %v217
      %v270 = vunpack.c.l.b16 %v218
      %v271 = vunpack.c.l.b16 %v219
      %v272 = vunpack.c.l.b16 %v220
      %v273 = vunpack.c.l.b16 %v221
      %v274 = vunpack.c.l.b16 %v222
      %v275 = vunpack.c.l.b16 %v223
      %v276 = vunpack.c.l.b16 %v224
      %v277 = vunpack.c.l.b16 %v225
      %v278 = vunpack.c.l.b16 %v226
      %v279 = vunpack.c.l.b16 %v227
      %v280 = vunpack.c.l.b16 %v228
      %v281 = vunpack.c.l.b16 %v229
      %v282 = vpack.c.b16 %v259, %v258
      %v283 = vpack.c.b16 %v261, %v260
      %v284 = vpack.c.b16 %v263, %v262
      %v285 = vpack.c.b16 %v265, %v264
      %v286 = vpack.c.b16 %v267, %v266
      %v287 = vpack.c.b16 %v269, %v268
      %v288 = vpack.c.b16 %v271, %v270
      %v289 = vpack.c.b16 %v273, %v272
      %v290 = vpack.c.b16 %v275, %v274
      %v291 = vpack.c.b16 %v277, %v276
      %v292 = vpack.c.b16 %v279, %v278
      %v293 = vpack.c.b16 %v281, %v280
      %vm306 = vcmask 523264
      %v308 = vsel %vm306, %v205, 0
      %310 = vmatpush.bf16.msra.mxu0 %v289
      %311 = vmatpush.bf16.msra.mxu0 %v288
      %312 = vmatpush.bf16.msra.mxu0 %v287
      %313 = vmatpush.bf16.msra.mxu0 %v286
      %314 = vmatpush.bf16.msra.mxu0 %v285
      %315 = vmatpush.bf16.msra.mxu0 %v284
      %316 = vmatpush.bf16.msra.mxu0 %v283
      %317 = vmatpush.bf16.msra.mxu0 %v282
      %318 = vmatmul.bf16.gmra.mxu0 %v204
      %v319 = vpop.f32.mrf.mxu0
      %v320 = vadd.f32 %v232, %v319
      %v321 = vpop.f32.mrf.mxu0
      %322 = vdwg.mxu0
      %323 = vmatpush.bf16.msra.mxu0 0
      %324 = vmatpush.bf16.msra.mxu0 0
      %325 = vmatpush.bf16.msra.mxu0 0
      %326 = vmatpush.bf16.msra.mxu0 0
      %327 = vmatpush.bf16.msra.mxu0 %v293
      %328 = vmatpush.bf16.msra.mxu0 %v292
      %329 = vmatpush.bf16.msra.mxu0 %v291
      %330 = vmatpush.bf16.msra.mxu0 %v290
      %331 = vmatmul.bf16.gmra.mxu0 %v308
      %v332 = vpop.f32.mrf.mxu0
      %v333 = vadd.f32 %v320, %v332
      %v334 = vpop.f32.mrf.mxu0
      %335 = vdwg.mxu0
      %v336 = vld [vmem:[%s3] sm:$0xf]
      %v337 = vadd.f32 %v333, %v336
      %v338 = vpack.c.bf16 %v337, %v337
      %vm339 = vcmask 254976
      %340 = vst.msk [vmem:[%s195] sm:$0x3] %vm339, %v338
      %p341 = scmp.lt.s32.totalorder %s15, 1
      %s342 = scalar_select %p341, %s15, 1
      %s343 = smul.addr %s342, 2
      %s344 = scalar_lea.vmem %s4, %s343
      // Predicated region
      $region37: #{m2d_forward.10} parent=35 // pred_check
        %p345 = pneg %p122
      $region38: #{m2d_forward.10} parent=35 // pred_check_branch
        %347 = sbr.rel (%p345) target = $region40
      $region39: #{m2d_forward.10} parent=35 // pred_region
        _
      $region40: #{m2d_forward.10} parent=35 // pred_fallthru
        _
    $region36: #{m2d_forward.10} parent=5 // pred_fallthru
      _
    %p348 = scmp.le.s32.totalorder 2, %s10
    // Predicated region
    $region41: #{m2d_forward.10} parent=5 // pred_check
      %p349 = pneg %p348
    $region42: #{m2d_forward.10} parent=5 // pred_check_branch
      %351 = sbr.rel (%p349) target = $region44
    $region43: #{m2d_forward.10} parent=5 // pred_region
      %s352 = ssub.s32 %s10, 2
      // Predicated region
      $region45: #{m2d_forward.10} parent=43 // pred_check
        %p353 = pneg %p128
      $region46: #{m2d_forward.10} parent=43 // pred_check_branch
        %355 = sbr.rel (%p353) target = $region48
      $region47: #{m2d_forward.10} parent=43 // pred_region
        %p356 = scmp.lt.s32.totalorder %s16, 1
        %s357 = scalar_select %p356, %s16, 1
        %s358 = smul.addr %s357, 2
        %s359 = scalar_lea.vmem %s4, %s358
      $region48: #{m2d_forward.10} parent=43 // pred_fallthru
        _
    $region44: #{m2d_forward.10} parent=5 // pred_fallthru
      _
  $region6: #{m2d_forward.10} parent=0 // loop_footer
    %s14 = sadd.s32 1, %s10
  $region7: #{m2d_forward.10} parent=0 // loop_footer_branch
    %9 = sbr.rel target = $region3
  $region8: #{m2d_forward.10} parent=0 // loop_exit
    _

// kernel: m2d_forward.13
$region0: #{m2d_forward.13}
  #allocation0 [shape = 'u32[]', space=smem, size = 0x4, offset = 0x4, fixed_abs, tag = 'smem constant byte address 0x4 - core index']
  #allocation1 [shape = 'u32[72,128]{1,0:T(1,128)}', space=vmem, size = 0x9000, scoped, tag = 'internal scratch']
  %s0 = inlined_call_operand.vmem [shape: bf16[32,32], index: 0, kind: input, shape index: {}]
  %s1 = inlined_call_operand.vmem [shape: f32[1,32], index: 1, kind: input, shape index: {}]
  %s2 = inlined_call_operand.vmem [shape: f32[1,32], index: 2, kind: input, shape index: {}]
  %s3 = inlined_call_operand.vmem [shape: bf16[32,32], index: 3, kind: input, shape index: {}]
  %s4 = inlined_call_operand.vmem [shape: f32[1,32], index: 4, kind: input, shape index: {}]
  %s5 = inlined_call_operand.vmem [shape: bf16[32,32], index: 5, kind: output, shape index: {}]
  %s6 = sld [smem:[#allocation0]]
  $region30: #{m2d_forward.13} parent=0
    _
  %s8 = ssub.s32 1, %s6
  %s9 = scalar_select 0, %s8, %s6
  // Predicated region
  $region2: #{m2d_forward.13} parent=0 // pred_check
    _
  $region3: #{m2d_forward.13} parent=0 // pred_check_branch
    %11 = sbr.rel (0) target = $region5
  $region4: #{m2d_forward.13} parent=0 // pred_region
    _
  $region5: #{m2d_forward.13} parent=0 // pred_fallthru
    _
  // Predicated region
  $region6: #{m2d_forward.13} parent=0 // pred_check
    _
  $region7: #{m2d_forward.13} parent=0 // pred_check_branch
    %13 = sbr.rel (0) target = $region9
  $region8: #{m2d_forward.13} parent=0 // pred_region
    _
  $region9: #{m2d_forward.13} parent=0 // pred_fallthru
    _
  // Predicated region
  $region10: #{m2d_forward.13} parent=0 // pred_check
    _
  $region11: #{m2d_forward.13} parent=0 // pred_check_branch
    %15 = sbr.rel (0) target = $region13
  $region12: #{m2d_forward.13} parent=0 // pred_region
    _
  $region13: #{m2d_forward.13} parent=0 // pred_fallthru
    _
  // Predicated region
  $region14: #{m2d_forward.13} parent=0 // pred_check
    _
  $region15: #{m2d_forward.13} parent=0 // pred_check_branch
    %17 = sbr.rel (0) target = $region17
  $region16: #{m2d_forward.13} parent=0 // pred_region
    _
  $region17: #{m2d_forward.13} parent=0 // pred_fallthru
    _
  // Predicated region
  $region18: #{m2d_forward.13} parent=0 // pred_check
    _
  $region19: #{m2d_forward.13} parent=0 // pred_check_branch
    %19 = sbr.rel (0) target = $region21
  $region20: #{m2d_forward.13} parent=0 // pred_region
    _
  $region21: #{m2d_forward.13} parent=0 // pred_fallthru
    _
  %v21 = vld [vmem:[%s0] sm:$0xf]
  %v22 = vld [vmem:[%s0 + $0x4] sm:$0xf]
  %v23 = vld [vmem:[%s0 + $0x8] sm:$0xf]
  %v24 = vld [vmem:[%s0 + $0xc] sm:$0xf]
  %v25 = vunpack.c.l.bf16 %v21
  %v26 = vunpack.c.l.bf16 %v22
  %v27 = vunpack.c.l.bf16 %v23
  %v28 = vunpack.c.l.bf16 %v24
  %v29 = vld [vmem:[%s1] sm:$0x1]
  %v30 = vld [vmem:[%s2] sm:$0x1]
  %vm31 = vcmask 261120
  %v32 = vsel %vm31, %v25, 0.0
  %33 = vadd.xlane.f32.xlu0 %v32
  %v34 = vpop.xlane.xlu0 %33
  %v35 = vsel %vm31, %v26, 0.0
  %36 = vadd.xlane.f32.xlu0 %v35
  %v37 = vpop.xlane.xlu0 %36
  %v38 = vsel %vm31, %v27, 0.0
  %39 = vadd.xlane.f32.xlu0 %v38
  %v40 = vpop.xlane.xlu0 %39
  %v41 = vsel %vm31, %v28, 0.0
  %42 = vadd.xlane.f32.xlu0 %v41
  %v43 = vpop.xlane.xlu0 %42
  %v44 = vrcp.pop 32.0
  %v45 = vmul.f32 32.0, %v44
  %v46 = vsub.f32 1.0, %v45
  %v47 = vmul.f32 %v44, %v46
  %v48 = vadd.f32 %v44, %v47
  %vm49 = vweird.f32 %v44
  %v50 = vsel %vm49, %v44, %v48
  %v51 = vmul.f32 %v34, %v50
  %v52 = vmul.f32 %v37, %v50
  %v53 = vmul.f32 %v40, %v50
  %v54 = vmul.f32 %v43, %v50
  %v55 = vsub.f32 %v25, %v51
  %v56 = vsub.f32 %v26, %v52
  %v57 = vsub.f32 %v27, %v53
  %v58 = vsub.f32 %v28, %v54
  %v59 = vmul.f32 %v55, %v55
  %v60 = vmul.f32 %v56, %v56
  %v61 = vmul.f32 %v57, %v57
  %v62 = vmul.f32 %v58, %v58
  %v63 = vsel %vm31, %v59, 0.0
  %64 = vadd.xlane.f32.xlu0 %v63
  %v65 = vpop.xlane.xlu0 %64
  %v66 = vsel %vm31, %v60, 0.0
  %67 = vadd.xlane.f32.xlu0 %v66
  %v68 = vpop.xlane.xlu0 %67
  %v69 = vsel %vm31, %v61, 0.0
  %70 = vadd.xlane.f32.xlu0 %v69
  %v71 = vpop.xlane.xlu0 %70
  %v72 = vsel %vm31, %v62, 0.0
  %73 = vadd.xlane.f32.xlu0 %v72
  %v74 = vpop.xlane.xlu0 %73
  %v75 = vmul.f32 %v65, %v50
  %v76 = vmul.f32 %v68, %v50
  %v77 = vmul.f32 %v71, %v50
  %v78 = vmul.f32 %v74, %v50
  %v79 = vadd.f32 %v75, 1e-05
  %v80 = vadd.f32 %v76, 1e-05
  %v81 = vadd.f32 %v77, 1e-05
  %v82 = vadd.f32 %v78, 1e-05
  %v83 = vrsqrt.pop %v79
  %v84 = vmul.f32 %v83, %v79
  %v85 = vmul.f32 %v84, %v83
  %v86 = vmul.f32 0.5, %v85
  %v87 = vsub.f32 1.5, %v86
  %v88 = vmul.f32 %v83, %v87
  %vm89 = vweird.f32 %v79
  %vm90 = vweird.f32 %v83
  %vm91 = vmor %vm89, %vm90
  %v92 = vsel %vm91, %v83, %v88
  %v93 = vrsqrt.pop %v80
  %v94 = vmul.f32 %v93, %v80
  %v95 = vmul.f32 %v94, %v93
  %v96 = vmul.f32 0.5, %v95
  %v97 = vsub.f32 1.5, %v96
  %v98 = vmul.f32 %v93, %v97
  %vm99 = vweird.f32 %v80
  %vm100 = vweird.f32 %v93
  %vm101 = vmor %vm99, %vm100
  %v102 = vsel %vm101, %v93, %v98
  %v103 = vrsqrt.pop %v81
  %v104 = vmul.f32 %v103, %v81
  %v105 = vmul.f32 %v104, %v103
  %v106 = vmul.f32 0.5, %v105
  %v107 = vsub.f32 1.5, %v106
  %v108 = vmul.f32 %v103, %v107
  %vm109 = vweird.f32 %v81
  %vm110 = vweird.f32 %v103
  %vm111 = vmor %vm109, %vm110
  %v112 = vsel %vm111, %v103, %v108
  %v113 = vrsqrt.pop %v82
  %v114 = vmul.f32 %v113, %v82
  %v115 = vmul.f32 %v114, %v113
  %v116 = vmul.f32 0.5, %v115
  %v117 = vsub.f32 1.5, %v116
  %v118 = vmul.f32 %v113, %v117
  %vm119 = vweird.f32 %v82
  %vm120 = vweird.f32 %v113
  %vm121 = vmor %vm119, %vm120
  %v122 = vsel %vm121, %v113, %v118
  %v123 = vmul.f32 %v55, %v92
  %v124 = vmul.f32 %v56, %v102
  %v125 = vmul.f32 %v57, %v112
  %v126 = vmul.f32 %v58, %v122
  %v128 = vperm.slane %v29, 0
  %v130 = vmul.f32 %v123, %v128
  %v131 = vmul.f32 %v124, %v128
  %v132 = vmul.f32 %v125, %v128
  %v133 = vmul.f32 %v126, %v128
  %v135 = vperm.slane %v30, 0
  %v137 = vadd.f32 %v130, %v135
  %v138 = vadd.f32 %v131, %v135
  %v139 = vadd.f32 %v132, %v135
  %v140 = vadd.f32 %v133, %v135
  %v141 = vpack.c.bf16 %v138, %v137
  %v142 = vpack.c.bf16 %v140, %v139
  %v143 = vld [vmem:[%s3] sm:$0xf]
  %v144 = vld [vmem:[%s3 + $0x4] sm:$0xf]
  %v145 = vld [vmem:[%s3 + $0x8] sm:$0xf]
  %v146 = vld [vmem:[%s3 + $0xc] sm:$0xf]
  %v147 = vld [vmem:[%s4] sm:$0x1]
  %v149 = vperm.slane %v147, 0
  %v155 = vunpack.c.l.b16 %v143
  %v156 = vunpack.c.l.b16 %v144
  %v157 = vunpack.c.l.b16 %v145
  %v158 = vunpack.c.l.b16 %v146
  %v159 = vpack.c.b16 %v156, %v155
  %v160 = vpack.c.b16 %v158, %v157
  %v164 = vsel %vm31, %v141, 0
  %v167 = vsel %vm31, %v142, 0
  %169 = vmatpush.bf16.msra.mxu0 0
  %170 = vmatpush.bf16.msra.mxu0 0
  %171 = vmatpush.bf16.msra.mxu0 0
  %172 = vmatpush.bf16.msra.mxu0 0
  %173 = vmatpush.bf16.msra.mxu0 0
  %174 = vmatpush.bf16.msra.mxu0 0
  %175 = vmatpush.bf16.msra.mxu0 %v160
  %176 = vmatpush.bf16.msra.mxu0 %v159
  %177 = vmatmul.bf16.gmra.mxu0 %v164
  %v178 = vpop.f32.mrf.mxu0
  %v179 = vadd.f32 %v149, %v178
  %v180 = vpop.f32.mrf.mxu0
  %v181 = vadd.f32 %v149, %v180
  %182 = vmatmul.bf16.gmra.mxu0 %v167
  %v183 = vpop.f32.mrf.mxu0
  %v184 = vadd.f32 %v149, %v183
  %v185 = vpop.f32.mrf.mxu0
  %v186 = vadd.f32 %v149, %v185
  %187 = vdwg.mxu0
  %v188 = vpack.c.bf16 %v179, %v179
  %v189 = vpack.c.bf16 %v181, %v181
  %v190 = vpack.c.bf16 %v184, %v184
  %v191 = vpack.c.bf16 %v186, %v186
  %vm192 = vcmask 257024
  %193 = vst.msk [vmem:[%s5] sm:$0xf] %vm192, %v188
  %194 = vst.msk [vmem:[%s5 + $0x4] sm:$0xf] %vm192, %v189
  %195 = vst.msk [vmem:[%s5 + $0x8] sm:$0xf] %vm192, %v190
  %196 = vst.msk [vmem:[%s5 + $0xc] sm:$0xf] %vm192, %v191
  // Predicated region
  $region22: #{m2d_forward.13} parent=0 // pred_check
    _
  $region23: #{m2d_forward.13} parent=0 // pred_check_branch
    %198 = sbr.rel (0) target = $region25
  $region24: #{m2d_forward.13} parent=0 // pred_region
    _
  $region25: #{m2d_forward.13} parent=0 // pred_fallthru
    _
  // Predicated region
  $region26: #{m2d_forward.13} parent=0 // pred_check
    _
  $region27: #{m2d_forward.13} parent=0 // pred_check_branch
    %200 = sbr.rel (0) target = $region29
  $region28: #{m2d_forward.13} parent=0 // pred_region
    _
  $region29: #{m2d_forward.13} parent=0 // pred_fallthru
    _

// kernel: m2d_forward.11
$region0: #{m2d_forward.11}
  #allocation0 [shape = 'u32[]', space=smem, size = 0x4, offset = 0x4, fixed_abs, tag = 'smem constant byte address 0x4 - core index']
  #allocation1 [shape = 'u32[72,128]{1,0:T(1,128)}', space=vmem, size = 0x9000, scoped, tag = 'internal scratch']
  %s0 = inlined_call_operand.vmem [shape: bf16[2,16,32], index: 0, kind: input, shape index: {}]
  %s1 = inlined_call_operand.vmem [shape: f32[1,32], index: 1, kind: input, shape index: {}]
  %s2 = inlined_call_operand.vmem [shape: f32[1,32], index: 2, kind: input, shape index: {}]
  %s3 = inlined_call_operand.vmem [shape: bf16[32,96], index: 3, kind: input, shape index: {}]
  %s4 = inlined_call_operand.vmem [shape: f32[1,96], index: 4, kind: input, shape index: {}]
  %s5 = inlined_call_operand.vmem [shape: bf16[32,32], index: 5, kind: input, shape index: {}]
  %s6 = inlined_call_operand.vmem [shape: f32[1,32], index: 6, kind: input, shape index: {}]
  %s7 = inlined_call_operand.vmem [shape: f32[1,32], index: 7, kind: input, shape index: {}]
  %s8 = inlined_call_operand.vmem [shape: f32[1,32], index: 8, kind: input, shape index: {}]
  %s9 = inlined_call_operand.vmem [shape: bf16[32,128], index: 9, kind: input, shape index: {}]
  %s10 = inlined_call_operand.vmem [shape: f32[1,128], index: 10, kind: input, shape index: {}]
  %s11 = inlined_call_operand.vmem [shape: bf16[128,32], index: 11, kind: input, shape index: {}]
  %s12 = inlined_call_operand.vmem [shape: f32[1,32], index: 12, kind: input, shape index: {}]
  %s13 = inlined_call_operand.vmem [shape: bf16[2,16,32], index: 13, kind: output, shape index: {}]
  %s14 = sld [smem:[#allocation0]]
  $region85: #{m2d_forward.11} parent=0
    _
  %s16 = ssub.s32 1, %s14
  %s17 = scalar_select 0, %s16, %s14
  loop: start=0, step=1, limit=4
  $region2: #{m2d_forward.11} parent=0 // loop_pre_header
    _
  $region3: #{m2d_forward.11} parent=0 // loop_header
    %s19 = sphi 0, %s23
    %p20 = scmp.ge.s32.totalorder %s19, 4
    %s29 = sphi 0, %s31
    %s32 = sphi 0, %s29
    %s33 = sphi 0, %s32
    %s49 = sphi 0, %s33
    %s53 = sphi 0, %s53
    %s55 = sphi 0, %s53
    %s56 = sphi 0, %s55
    %s70 = sphi 0, %s56
    %s74 = sphi 0, %s74
    %s76 = sphi 0, %s74
    %s77 = sphi 0, %s76
    %s91 = sphi 0, %s77
    %s95 = sphi 0, %s95
    %s97 = sphi 0, %s95
    %s98 = sphi 0, %s97
    %s112 = sphi 0, %s98
    %s116 = sphi 0, %s116
    %s118 = sphi 0, %s116
    %s119 = sphi 0, %s118
    %s133 = sphi 0, %s119
    %s137 = sphi 0, %s137
    %s139 = sphi 0, %s137
    %s140 = sphi 0, %s139
    %s154 = sphi 0, %s140
    %s158 = sphi 0, %s158
    %s160 = sphi 0, %s158
    %s161 = sphi 0, %s160
    %s175 = sphi 0, %s161
    %s179 = sphi 0, %s179
    %s181 = sphi 0, %s179
    %s182 = sphi 0, %s181
    %s196 = sphi 0, %s182
    %s200 = sphi 0, %s200
    %s202 = sphi 0, %s200
    %s203 = sphi 0, %s202
    %s217 = sphi 0, %s203
    %s221 = sphi 0, %s221
    %s223 = sphi 0, %s221
    %s224 = sphi 0, %s223
    %s238 = sphi 0, %s224
    %s242 = sphi 0, %s242
    %s244 = sphi 0, %s242
    %s245 = sphi 0, %s244
    %s259 = sphi 0, %s245
    %s263 = sphi 0, %s263
    %s265 = sphi 0, %s263
    %s266 = sphi 0, %s265
    %s280 = sphi 0, %s266
    %s284 = sphi 0, %s284
    %s286 = sphi 0, %s284
    %s287 = sphi 0, %s286
    %s301 = sphi 0, %s287
    %s307 = sphi 0, %s309
    %s310 = sphi 0, %s307
    %s311 = sphi 0, %s310
    %s327 = sphi 0, %s311
  $region4: #{m2d_forward.11} parent=0 // loop_header_branch
    %22 = sbr.rel (%p20) target = $region8
  $region5: #{m2d_forward.11} parent=0 // loop_body
    %s24 = ssub.s32 %s19, 1
    %s25 = ssub.s32 %s19, 2
    %s26 = sadd.s32 %s19, 1
    %s27 = ssub.s32 %s19, %s26
    %p28 = scmp.eq.s32.totalorder %s27, 0
    %s30 = sadd.s32 %s29, 1
    %s31 = scalar_select %p28, %s29, %s30
    %p34 = pneg %p28
    %p35 = scmp.eq.s32.totalorder %s19, 1
    %p36 = por %p34, %p35
    %p37 = scmp.ne.s32.totalorder %s29, %s32
    %p38 = scmp.eq.s32.totalorder %s19, 0
    %p39 = por %p37, %p38
    %p40 = scmp.ne.s32.totalorder %s29, %s32
    %p41 = scmp.eq.s32.totalorder %s24, 1
    %p42 = por %p40, %p41
    %p43 = scmp.ne.s32.totalorder %s32, %s33
    %p44 = scmp.eq.s32.totalorder %s24, 0
    %p45 = por %p43, %p44
    %p46 = scmp.ne.s32.totalorder %s32, %s33
    %p47 = scmp.eq.s32.totalorder %s25, 1
    %p48 = por %p46, %p47
    %p50 = scmp.ne.s32.totalorder %s33, %s49
    %p51 = scmp.eq.s32.totalorder %s25, 0
    %p52 = por %p50, %p51
    %s54 = sadd.s32 %s53, 1
    %p57 = scmp.eq.s32.totalorder %s19, 1
    %p58 = scmp.ne.s32.totalorder %s53, %s55
    %p59 = scmp.eq.s32.totalorder %s19, 0
    %p60 = por %p58, %p59
    %p61 = scmp.ne.s32.totalorder %s53, %s55
    %p62 = scmp.eq.s32.totalorder %s24, 1
    %p63 = por %p61, %p62
    %p64 = scmp.ne.s32.totalorder %s55, %s56
    %p65 = scmp.eq.s32.totalorder %s24, 0
    %p66 = por %p64, %p65
    %p67 = scmp.ne.s32.totalorder %s55, %s56
    %p68 = scmp.eq.s32.totalorder %s25, 1
    %p69 = por %p67, %p68
    %p71 = scmp.ne.s32.totalorder %s56, %s70
    %p72 = scmp.eq.s32.totalorder %s25, 0
    %p73 = por %p71, %p72
    %s75 = sadd.s32 %s74, 1
    %p78 = scmp.eq.s32.totalorder %s19, 1
    %p79 = scmp.ne.s32.totalorder %s74, %s76
    %p80 = scmp.eq.s32.totalorder %s19, 0
    %p81 = por %p79, %p80
    %p82 = scmp.ne.s32.totalorder %s74, %s76
    %p83 = scmp.eq.s32.totalorder %s24, 1
    %p84 = por %p82, %p83
    %p85 = scmp.ne.s32.totalorder %s76, %s77
    %p86 = scmp.eq.s32.totalorder %s24, 0
    %p87 = por %p85, %p86
    %p88 = scmp.ne.s32.totalorder %s76, %s77
    %p89 = scmp.eq.s32.totalorder %s25, 1
    %p90 = por %p88, %p89
    %p92 = scmp.ne.s32.totalorder %s77, %s91
    %p93 = scmp.eq.s32.totalorder %s25, 0
    %p94 = por %p92, %p93
    %s96 = sadd.s32 %s95, 1
    %p99 = scmp.eq.s32.totalorder %s19, 1
    %p100 = scmp.ne.s32.totalorder %s95, %s97
    %p101 = scmp.eq.s32.totalorder %s19, 0
    %p102 = por %p100, %p101
    %p103 = scmp.ne.s32.totalorder %s95, %s97
    %p104 = scmp.eq.s32.totalorder %s24, 1
    %p105 = por %p103, %p104
    %p106 = scmp.ne.s32.totalorder %s97, %s98
    %p107 = scmp.eq.s32.totalorder %s24, 0
    %p108 = por %p106, %p107
    %p109 = scmp.ne.s32.totalorder %s97, %s98
    %p110 = scmp.eq.s32.totalorder %s25, 1
    %p111 = por %p109, %p110
    %p113 = scmp.ne.s32.totalorder %s98, %s112
    %p114 = scmp.eq.s32.totalorder %s25, 0
    %p115 = por %p113, %p114
    %s117 = sadd.s32 %s116, 1
    %p120 = scmp.eq.s32.totalorder %s19, 1
    %p121 = scmp.ne.s32.totalorder %s116, %s118
    %p122 = scmp.eq.s32.totalorder %s19, 0
    %p123 = por %p121, %p122
    %p124 = scmp.ne.s32.totalorder %s116, %s118
    %p125 = scmp.eq.s32.totalorder %s24, 1
    %p126 = por %p124, %p125
    %p127 = scmp.ne.s32.totalorder %s118, %s119
    %p128 = scmp.eq.s32.totalorder %s24, 0
    %p129 = por %p127, %p128
    %p130 = scmp.ne.s32.totalorder %s118, %s119
    %p131 = scmp.eq.s32.totalorder %s25, 1
    %p132 = por %p130, %p131
    %p134 = scmp.ne.s32.totalorder %s119, %s133
    %p135 = scmp.eq.s32.totalorder %s25, 0
    %p136 = por %p134, %p135
    %s138 = sadd.s32 %s137, 1
    %p141 = scmp.eq.s32.totalorder %s19, 1
    %p142 = scmp.ne.s32.totalorder %s137, %s139
    %p143 = scmp.eq.s32.totalorder %s19, 0
    %p144 = por %p142, %p143
    %p145 = scmp.ne.s32.totalorder %s137, %s139
    %p146 = scmp.eq.s32.totalorder %s24, 1
    %p147 = por %p145, %p146
    %p148 = scmp.ne.s32.totalorder %s139, %s140
    %p149 = scmp.eq.s32.totalorder %s24, 0
    %p150 = por %p148, %p149
    %p151 = scmp.ne.s32.totalorder %s139, %s140
    %p152 = scmp.eq.s32.totalorder %s25, 1
    %p153 = por %p151, %p152
    %p155 = scmp.ne.s32.totalorder %s140, %s154
    %p156 = scmp.eq.s32.totalorder %s25, 0
    %p157 = por %p155, %p156
    %s159 = sadd.s32 %s158, 1
    %p162 = scmp.eq.s32.totalorder %s19, 1
    %p163 = scmp.ne.s32.totalorder %s158, %s160
    %p164 = scmp.eq.s32.totalorder %s19, 0
    %p165 = por %p163, %p164
    %p166 = scmp.ne.s32.totalorder %s158, %s160
    %p167 = scmp.eq.s32.totalorder %s24, 1
    %p168 = por %p166, %p167
    %p169 = scmp.ne.s32.totalorder %s160, %s161
    %p170 = scmp.eq.s32.totalorder %s24, 0
    %p171 = por %p169, %p170
    %p172 = scmp.ne.s32.totalorder %s160, %s161
    %p173 = scmp.eq.s32.totalorder %s25, 1
    %p174 = por %p172, %p173
    %p176 = scmp.ne.s32.totalorder %s161, %s175
    %p177 = scmp.eq.s32.totalorder %s25, 0
    %p178 = por %p176, %p177
    %s180 = sadd.s32 %s179, 1
    %p183 = scmp.eq.s32.totalorder %s19, 1
    %p184 = scmp.ne.s32.totalorder %s179, %s181
    %p185 = scmp.eq.s32.totalorder %s19, 0
    %p186 = por %p184, %p185
    %p187 = scmp.ne.s32.totalorder %s179, %s181
    %p188 = scmp.eq.s32.totalorder %s24, 1
    %p189 = por %p187, %p188
    %p190 = scmp.ne.s32.totalorder %s181, %s182
    %p191 = scmp.eq.s32.totalorder %s24, 0
    %p192 = por %p190, %p191
    %p193 = scmp.ne.s32.totalorder %s181, %s182
    %p194 = scmp.eq.s32.totalorder %s25, 1
    %p195 = por %p193, %p194
    %p197 = scmp.ne.s32.totalorder %s182, %s196
    %p198 = scmp.eq.s32.totalorder %s25, 0
    %p199 = por %p197, %p198
    %s201 = sadd.s32 %s200, 1
    %p204 = scmp.eq.s32.totalorder %s19, 1
    %p205 = scmp.ne.s32.totalorder %s200, %s202
    %p206 = scmp.eq.s32.totalorder %s19, 0
    %p207 = por %p205, %p206
    %p208 = scmp.ne.s32.totalorder %s200, %s202
    %p209 = scmp.eq.s32.totalorder %s24, 1
    %p210 = por %p208, %p209
    %p211 = scmp.ne.s32.totalorder %s202, %s203
    %p212 = scmp.eq.s32.totalorder %s24, 0
    %p213 = por %p211, %p212
    %p214 = scmp.ne.s32.totalorder %s202, %s203
    %p215 = scmp.eq.s32.totalorder %s25, 1
    %p216 = por %p214, %p215
    %p218 = scmp.ne.s32.totalorder %s203, %s217
    %p219 = scmp.eq.s32.totalorder %s25, 0
    %p220 = por %p218, %p219
    %s222 = sadd.s32 %s221, 1
    %p225 = scmp.eq.s32.totalorder %s19, 1
    %p226 = scmp.ne.s32.totalorder %s221, %s223
    %p227 = scmp.eq.s32.totalorder %s19, 0
    %p228 = por %p226, %p227
    %p229 = scmp.ne.s32.totalorder %s221, %s223
    %p230 = scmp.eq.s32.totalorder %s24, 1
    %p231 = por %p229, %p230
    %p232 = scmp.ne.s32.totalorder %s223, %s224
    %p233 = scmp.eq.s32.totalorder %s24, 0
    %p234 = por %p232, %p233
    %p235 = scmp.ne.s32.totalorder %s223, %s224
    %p236 = scmp.eq.s32.totalorder %s25, 1
    %p237 = por %p235, %p236
    %p239 = scmp.ne.s32.totalorder %s224, %s238
    %p240 = scmp.eq.s32.totalorder %s25, 0
    %p241 = por %p239, %p240
    %s243 = sadd.s32 %s242, 1
    %p246 = scmp.eq.s32.totalorder %s19, 1
    %p247 = scmp.ne.s32.totalorder %s242, %s244
    %p248 = scmp.eq.s32.totalorder %s19, 0
    %p249 = por %p247, %p248
    %p250 = scmp.ne.s32.totalorder %s242, %s244
    %p251 = scmp.eq.s32.totalorder %s24, 1
    %p252 = por %p250, %p251
    %p253 = scmp.ne.s32.totalorder %s244, %s245
    %p254 = scmp.eq.s32.totalorder %s24, 0
    %p255 = por %p253, %p254
    %p256 = scmp.ne.s32.totalorder %s244, %s245
    %p257 = scmp.eq.s32.totalorder %s25, 1
    %p258 = por %p256, %p257
    %p260 = scmp.ne.s32.totalorder %s245, %s259
    %p261 = scmp.eq.s32.totalorder %s25, 0
    %p262 = por %p260, %p261
    %s264 = sadd.s32 %s263, 1
    %p267 = scmp.eq.s32.totalorder %s19, 1
    %p268 = scmp.ne.s32.totalorder %s263, %s265
    %p269 = scmp.eq.s32.totalorder %s19, 0
    %p270 = por %p268, %p269
    %p271 = scmp.ne.s32.totalorder %s263, %s265
    %p272 = scmp.eq.s32.totalorder %s24, 1
    %p273 = por %p271, %p272
    %p274 = scmp.ne.s32.totalorder %s265, %s266
    %p275 = scmp.eq.s32.totalorder %s24, 0
    %p276 = por %p274, %p275
    %p277 = scmp.ne.s32.totalorder %s265, %s266
    %p278 = scmp.eq.s32.totalorder %s25, 1
    %p279 = por %p277, %p278
    %p281 = scmp.ne.s32.totalorder %s266, %s280
    %p282 = scmp.eq.s32.totalorder %s25, 0
    %p283 = por %p281, %p282
    %s285 = sadd.s32 %s284, 1
    %p288 = scmp.eq.s32.totalorder %s19, 1
    %p289 = scmp.ne.s32.totalorder %s284, %s286
    %p290 = scmp.eq.s32.totalorder %s19, 0
    %p291 = por %p289, %p290
    %p292 = scmp.ne.s32.totalorder %s284, %s286
    %p293 = scmp.eq.s32.totalorder %s24, 1
    %p294 = por %p292, %p293
    %p295 = scmp.ne.s32.totalorder %s286, %s287
    %p296 = scmp.eq.s32.totalorder %s24, 0
    %p297 = por %p295, %p296
    %p298 = scmp.ne.s32.totalorder %s286, %s287
    %p299 = scmp.eq.s32.totalorder %s25, 1
    %p300 = por %p298, %p299
    %p302 = scmp.ne.s32.totalorder %s287, %s301
    %p303 = scmp.eq.s32.totalorder %s25, 0
    %p304 = por %p302, %p303
    %s305 = ssub.s32 %s19, %s26
    %p306 = scmp.eq.s32.totalorder %s305, 0
    %s308 = sadd.s32 %s307, 1
    %s309 = scalar_select %p306, %s307, %s308
    %p312 = pneg %p306
    %p313 = scmp.eq.s32.totalorder %s19, 1
    %p314 = por %p312, %p313
    %p315 = scmp.ne.s32.totalorder %s307, %s310
    %p316 = scmp.eq.s32.totalorder %s19, 0
    %p317 = por %p315, %p316
    %p318 = scmp.ne.s32.totalorder %s307, %s310
    %p319 = scmp.eq.s32.totalorder %s24, 1
    %p320 = por %p318, %p319
    %p321 = scmp.ne.s32.totalorder %s310, %s311
    %p322 = scmp.eq.s32.totalorder %s24, 0
    %p323 = por %p321, %p322
    %p324 = scmp.ne.s32.totalorder %s310, %s311
    %p325 = scmp.eq.s32.totalorder %s25, 1
    %p326 = por %p324, %p325
    %p328 = scmp.ne.s32.totalorder %s311, %s327
    %p329 = scmp.eq.s32.totalorder %s25, 0
    %p330 = por %p328, %p329
    %p331 = scmp.le.s32.totalorder 1, %s19
    %p332 = scmp.lt.s32.totalorder %s19, 3
    %p333 = pnand %p331, %p332
    %p334 = pneg %p333
    // Predicated region
    $region9: #{m2d_forward.11} parent=5 // pred_check
      _
    $region10: #{m2d_forward.11} parent=5 // pred_check_branch
      %336 = sbr.rel (%p333) target = $region12
    $region11: #{m2d_forward.11} parent=5 // pred_region
      %s337 = ssub.s32 %s19, 1
      // Predicated region
      $region13: #{m2d_forward.11} parent=11 // pred_check
        %p338 = pneg %p66
      $region14: #{m2d_forward.11} parent=11 // pred_check_branch
        %340 = sbr.rel (%p338) target = $region16
      $region15: #{m2d_forward.11} parent=11 // pred_region
        _
      $region16: #{m2d_forward.11} parent=11 // pred_fallthru
        _
      // Predicated region
      $region17: #{m2d_forward.11} parent=11 // pred_check
        %p341 = pneg %p87
      $region18: #{m2d_forward.11} parent=11 // pred_check_branch
        %343 = sbr.rel (%p341) target = $region20
      $region19: #{m2d_forward.11} parent=11 // pred_region
        _
      $region20: #{m2d_forward.11} parent=11 // pred_fallthru
        _
      // Predicated region
      $region21: #{m2d_forward.11} parent=11 // pred_check
        %p344 = pneg %p108
      $region22: #{m2d_forward.11} parent=11 // pred_check_branch
        %346 = sbr.rel (%p344) target = $region24
      $region23: #{m2d_forward.11} parent=11 // pred_region
        _
      $region24: #{m2d_forward.11} parent=11 // pred_fallthru
        _
      // Predicated region
      $region25: #{m2d_forward.11} parent=11 // pred_check
        %p347 = pneg %p129
      $region26: #{m2d_forward.11} parent=11 // pred_check_branch
        %349 = sbr.rel (%p347) target = $region28
      $region27: #{m2d_forward.11} parent=11 // pred_region
        _
      $region28: #{m2d_forward.11} parent=11 // pred_fallthru
        _
      // Predicated region
      $region29: #{m2d_forward.11} parent=11 // pred_check
        %p350 = pneg %p150
      $region30: #{m2d_forward.11} parent=11 // pred_check_branch
        %352 = sbr.rel (%p350) target = $region32
      $region31: #{m2d_forward.11} parent=11 // pred_region
        _
      $region32: #{m2d_forward.11} parent=11 // pred_fallthru
        _
      // Predicated region
      $region33: #{m2d_forward.11} parent=11 // pred_check
        %p353 = pneg %p171
      $region34: #{m2d_forward.11} parent=11 // pred_check_branch
        %355 = sbr.rel (%p353) target = $region36
      $region35: #{m2d_forward.11} parent=11 // pred_region
        _
      $region36: #{m2d_forward.11} parent=11 // pred_fallthru
        _
      // Predicated region
      $region37: #{m2d_forward.11} parent=11 // pred_check
        %p356 = pneg %p192
      $region38: #{m2d_forward.11} parent=11 // pred_check_branch
        %358 = sbr.rel (%p356) target = $region40
      $region39: #{m2d_forward.11} parent=11 // pred_region
        _
      $region40: #{m2d_forward.11} parent=11 // pred_fallthru
        _
      // Predicated region
      $region41: #{m2d_forward.11} parent=11 // pred_check
        %p359 = pneg %p213
      $region42: #{m2d_forward.11} parent=11 // pred_check_branch
        %361 = sbr.rel (%p359) target = $region44
      $region43: #{m2d_forward.11} parent=11 // pred_region
        _
      $region44: #{m2d_forward.11} parent=11 // pred_fallthru
        _
      // Predicated region
      $region45: #{m2d_forward.11} parent=11 // pred_check
        %p362 = pneg %p234
      $region46: #{m2d_forward.11} parent=11 // pred_check_branch
        %364 = sbr.rel (%p362) target = $region48
      $region47: #{m2d_forward.11} parent=11 // pred_region
        _
      $region48: #{m2d_forward.11} parent=11 // pred_fallthru
        _
      // Predicated region
      $region49: #{m2d_forward.11} parent=11 // pred_check
        %p365 = pneg %p255
      $region50: #{m2d_forward.11} parent=11 // pred_check_branch
        %367 = sbr.rel (%p365) target = $region52
      $region51: #{m2d_forward.11} parent=11 // pred_region
        _
      $region52: #{m2d_forward.11} parent=11 // pred_fallthru
        _
      // Predicated region
      $region53: #{m2d_forward.11} parent=11 // pred_check
        %p368 = pneg %p276
      $region54: #{m2d_forward.11} parent=11 // pred_check_branch
        %370 = sbr.rel (%p368) target = $region56
      $region55: #{m2d_forward.11} parent=11 // pred_region
        _
      $region56: #{m2d_forward.11} parent=11 // pred_fallthru
        _
      // Predicated region
      $region57: #{m2d_forward.11} parent=11 // pred_check
        %p371 = pneg %p297
      $region58: #{m2d_forward.11} parent=11 // pred_check_branch
        %373 = sbr.rel (%p371) target = $region60
      $region59: #{m2d_forward.11} parent=11 // pred_region
        _
      $region60: #{m2d_forward.11} parent=11 // pred_fallthru
        _
    $region12: #{m2d_forward.11} parent=5 // pred_fallthru
      _
    %p374 = scmp.lt.s32.totalorder %s19, 2
    // Predicated region
    $region61: #{m2d_forward.11} parent=5 // pred_check
      %p375 = pneg %p374
    $region62: #{m2d_forward.11} parent=5 // pred_check_branch
      %377 = sbr.rel (%p375) target = $region64
    $region63: #{m2d_forward.11} parent=5 // pred_region
      // Predicated region
      $region65: #{m2d_forward.11} parent=63 // pred_check
        %p378 = pneg %p39
      $region66: #{m2d_forward.11} parent=63 // pred_check_branch
        %380 = sbr.rel (%p378) target = $region68
      $region67: #{m2d_forward.11} parent=63 // pred_region
        %p381 = scmp.lt.s32.totalorder %s19, 1
        %s382 = scalar_select %p381, %s19, 1
        %s383 = smul.addr %s382, 2
        %s384 = smul.addr %s383, 4
        %s385 = scalar_lea.vmem %s0, %s384
      $region68: #{m2d_forward.11} parent=63 // pred_fallthru
        _
    $region64: #{m2d_forward.11} parent=5 // pred_fallthru
      _
    %p386 = scmp.le.s32.totalorder 1, %s19
    %p387 = scmp.lt.s32.totalorder %s19, 3
    %p388 = pnand %p386, %p387
    %p389 = pneg %p388
    // Predicated region
    $region69: #{m2d_forward.11} parent=5 // pred_check
      _
    $region70: #{m2d_forward.11} parent=5 // pred_check_branch
      %391 = sbr.rel (%p388) target = $region72
    $region71: #{m2d_forward.11} parent=5 // pred_region
      %s392 = ssub.s32 %s19, 1
      %p393 = scmp.lt.s32.totalorder %s24, 1
      %s394 = scalar_select %p393, %s24, 1
      %s395 = smul.addr %s394, 2
      %s396 = smul.addr %s395, 4
      %s397 = scalar_lea.vmem %s0, %s396
      %p398 = pneg %p45
      %p399 = pneg %p42
      %p400 = pneg %p66
      %p401 = pneg %p63
      %p402 = pneg %p87
      %p403 = pneg %p84
      %p404 = pneg %p108
      %p405 = pneg %p105
      %p406 = pneg %p129
      %p407 = pneg %p126
      %p408 = pneg %p150
      %p409 = pneg %p147
      %p410 = pneg %p171
      %p411 = pneg %p168
      %p412 = pneg %p192
      %p413 = pneg %p189
      %p414 = pneg %p213
      %p415 = pneg %p210
      %p416 = pneg %p234
      %p417 = pneg %p231
      %p418 = pneg %p255
      %p419 = pneg %p252
      %p420 = pneg %p276
      %p421 = pneg %p273
      %p422 = pneg %p297
      %p423 = pneg %p294
      %p424 = pneg %p323
      %p425 = pneg %p320
      %p426 = scmp.lt.s32.totalorder %s24, 1
      %s427 = scalar_select %p426, %s24, 1
      %s428 = smul.addr %s427, 2
      %s429 = smul.addr %s428, 4
      %s430 = scalar_lea.vmem %s13, %s429
      %p431 = scmp.lt.s32.totalorder %s24, 1
      %s432 = scalar_select %p431, %s24, 1
      %s433 = smul.addr %s432, 2
      %s434 = smul.addr %s433, 4
      %s435 = scalar_lea.vmem %s0, %s434
      %p436 = scmp.lt.s32.totalorder %s24, 1
      %s437 = scalar_select %p436, %s24, 1
      %s438 = smul.addr %s437, 2
      %s439 = smul.addr %s438, 4
      %s440 = scalar_lea.vmem %s13, %s439
      %v442 = vld [vmem:[%s435] sm:$0xf]
      %v443 = vld [vmem:[%s435 + $0x4] sm:$0xf]
      %v444 = vunpack.c.l.bf16 %v442
      %v445 = vunpack.c.l.bf16 %v443
      %v446 = vld [vmem:[%s1] sm:$0x1]
      %v447 = vld [vmem:[%s2] sm:$0x1]
      %vm448 = vcmask 261120
      %v449 = vsel %vm448, %v444, 0.0
      %450 = vadd.xlane.f32.xlu0 %v449
      %v451 = vpop.xlane.xlu0 %450
      %v452 = vsel %vm448, %v445, 0.0
      %453 = vadd.xlane.f32.xlu0 %v452
      %v454 = vpop.xlane.xlu0 %453
      %v455 = vrcp.pop 32.0
      %v456 = vmul.f32 32.0, %v455
      %v457 = vsub.f32 1.0, %v456
      %v458 = vmul.f32 %v455, %v457
      %v459 = vadd.f32 %v455, %v458
      %vm460 = vweird.f32 %v455
      %v461 = vsel %vm460, %v455, %v459
      %v462 = vmul.f32 %v451, %v461
      %v463 = vmul.f32 %v454, %v461
      %v464 = vsub.f32 %v444, %v462
      %v465 = vsub.f32 %v445, %v463
      %v466 = vmul.f32 %v464, %v464
      %v467 = vmul.f32 %v465, %v465
      %v468 = vsel %vm448, %v466, 0.0
      %469 = vadd.xlane.f32.xlu0 %v468
      %v470 = vpop.xlane.xlu0 %469
      %v471 = vsel %vm448, %v467, 0.0
      %472 = vadd.xlane.f32.xlu0 %v471
      %v473 = vpop.xlane.xlu0 %472
      %v474 = vmul.f32 %v470, %v461
      %v475 = vmul.f32 %v473, %v461
      %v476 = vadd.f32 %v474, 1e-05
      %v477 = vadd.f32 %v475, 1e-05
      %v478 = vrsqrt.pop %v476
      %v479 = vmul.f32 %v478, %v476
      %v480 = vmul.f32 %v479, %v478
      %v481 = vmul.f32 0.5, %v480
      %v482 = vsub.f32 1.5, %v481
      %v483 = vmul.f32 %v478, %v482
      %vm484 = vweird.f32 %v476
      %vm485 = vweird.f32 %v478
      %vm486 = vmor %vm484, %vm485
      %v487 = vsel %vm486, %v478, %v483
      %v488 = vrsqrt.pop %v477
      %v489 = vmul.f32 %v488, %v477
      %v490 = vmul.f32 %v489, %v488
      %v491 = vmul.f32 0.5, %v490
      %v492 = vsub.f32 1.5, %v491
      %v493 = vmul.f32 %v488, %v492
      %vm494 = vweird.f32 %v477
      %vm495 = vweird.f32 %v488
      %vm496 = vmor %vm494, %vm495
      %v497 = vsel %vm496, %v488, %v493
      %v498 = vmul.f32 %v464, %v487
      %v499 = vmul.f32 %v465, %v497
      %v501 = vperm.slane %v446, 0
      %v503 = vmul.f32 %v498, %v501
      %v504 = vmul.f32 %v499, %v501
      %v506 = vperm.slane %v447, 0
      %v508 = vadd.f32 %v503, %v506
      %v509 = vadd.f32 %v504, %v506
      %v510 = vpack.c.bf16 %v509, %v508
      %v511 = vld [vmem:[%s3] sm:$0xf]
      %v512 = vld [vmem:[%s3 + $0x4] sm:$0xf]
      %v513 = vld [vmem:[%s3 + $0x8] sm:$0xf]
      %v514 = vld [vmem:[%s3 + $0xc] sm:$0xf]
      %v515 = vld [vmem:[%s4] sm:$0x1]
      %v517 = vperm.slane %v515, 0
      %v523 = vunpack.c.l.b16 %v511
      %v524 = vunpack.c.l.b16 %v512
      %v525 = vunpack.c.l.b16 %v513
      %v526 = vunpack.c.l.b16 %v514
      %v527 = vpack.c.b16 %v524, %v523
      %v528 = vpack.c.b16 %v526, %v525
      %v532 = vsel %vm448, %v510, 0
      %534 = vmatpush.bf16.msra.mxu0 0
      %535 = vmatpush.bf16.msra.mxu0 0
      %536 = vmatpush.bf16.msra.mxu0 0
      %537 = vmatpush.bf16.msra.mxu0 0
      %538 = vmatpush.bf16.msra.mxu0 0
      %539 = vmatpush.bf16.msra.mxu0 0
      %540 = vmatpush.bf16.msra.mxu0 %v528
      %541 = vmatpush.bf16.msra.mxu0 %v527
      %542 = vmatmul.bf16.gmra.mxu0 %v532
      %v543 = vpop.f32.mrf.mxu0
      %v544 = vadd.f32 %v517, %v543
      %v545 = vpop.f32.mrf.mxu0
      %v546 = vadd.f32 %v517, %v545
      %547 = vdwg.mxu0
      %v548 = vmul.f32 %v544, 0.35355338
      %v549 = vmul.f32 %v546, 0.35355338
      %v550 = vpack.c.bf16 %v548, %v548
      %v551 = vpack.c.bf16 %v549, %v549
      %v552 = vpack.c.bf16 %v544, %v544
      %v553 = vpack.c.bf16 %v546, %v546
      %v554 = vlaneseq
      %v555 = vand.u32 %v554, 127
      %vm556 = vcmp.lt.s32.totalorder %v555, 3
      %v557 = vsel %vm556, 0.0, -1e+30
      %v560 = vunpack.c.l.b16 %v550
      %v561 = vunpack.c.l.b16 %v551
      %v562 = vpack.c.b16 %v561, %v560
      %v565 = vunpack.c.l.b16 %v552
      %v566 = vunpack.c.l.b16 %v553
      %v567 = vpack.c.b16 %v566, %v565
      %568 = vrot.lane.b32.xlu0 %v567, 96
      %v569 = vpop.permute.xlu0 %568
      %vm570 = vcmask 64512
      %v572 = vsel %vm570, %v562, 0
      %v575 = vsel %vm570, %v569, 0
      %577 = vmatpush.bf16.xpose.msra.mxu0 0
      %578 = vmatpush.bf16.xpose.msra.mxu0 0
      %579 = vmatpush.bf16.xpose.msra.mxu0 0
      %580 = vmatpush.bf16.xpose.msra.mxu0 0
      %581 = vmatpush.bf16.xpose.msra.mxu0 0
      %582 = vmatpush.bf16.xpose.msra.mxu0 0
      %583 = vmatpush.bf16.xpose.msra.mxu0 0
      %584 = vmatpush.bf16.xpose.msra.mxu0 %v575
      %585 = vmatmul.bf16.gmra.mxu0 %v572
      %v586 = vpop.f32.mrf.mxu0
      %v587 = vadd.f32 %v557, %v586
      %v588 = vpop.f32.mrf.mxu0
      %v589 = vadd.f32 %v557, %v588
      %590 = vdwg.mxu0
      %vm591 = vcmask 130048
      %v592 = vsel %vm591, %v587, -inf
      %593 = vmax.xlane.f32.xlu0 %v592
      %v594 = vpop.xlane.xlu0 %593
      %v595 = vsel %vm591, %v589, -inf
      %596 = vmax.xlane.f32.xlu0 %v595
      %v597 = vpop.xlane.xlu0 %596
      %v598 = vsub.f32 %v587, %v594
      %v599 = vsub.f32 %v589, %v597
      %v600 = vmul.f32 %v598, 1.442695
      %v601 = vpow.pop %v600
      %v602 = vmul.f32 %v599, 1.442695
      %v603 = vpow.pop %v602
      %v604 = vsel %vm591, %v601, 0.0
      %605 = vadd.xlane.f32.xlu0 %v604
      %v606 = vpop.xlane.xlu0 %605
      %v607 = vsel %vm591, %v603, 0.0
      %608 = vadd.xlane.f32.xlu0 %v607
      %v609 = vpop.xlane.xlu0 %608
      %v610 = vrcp.pop %v606
      %v611 = vrcp.pop %v609
      %v612 = vmul.f32 %v601, %v610
      %v613 = vmul.f32 %v603, %v611
      %v614 = vpack.c.bf16 %v613, %v612
      %615 = vrot.lane.b32.xlu0 %v567, 64
      %v616 = vpop.permute.xlu0 %615
      %v619 = vsel %vm591, %v614, 0
      %621 = vmatpush.bf16.msra.mxu0 0
      %622 = vmatpush.bf16.msra.mxu0 0
      %623 = vmatpush.bf16.msra.mxu0 0
      %624 = vmatpush.bf16.msra.mxu0 0
      %625 = vmatpush.bf16.msra.mxu0 0
      %626 = vmatpush.bf16.msra.mxu0 0
      %627 = vmatpush.bf16.msra.mxu0 0
      %628 = vmatpush.bf16.msra.mxu0 %v616
      %629 = vmatmul.bf16.gmra.mxu0 %v619
      %v630 = vpop.f32.mrf.mxu0
      %v631 = vadd.f32 0.0, %v630
      %v632 = vpop.f32.mrf.mxu0
      %v633 = vadd.f32 0.0, %v632
      %634 = vdwg.mxu0
      %635 = vrot.lane.b32.xlu0 %v562, 120
      %v636 = vpop.permute.xlu0 %635
      %637 = vrot.lane.b32.xlu0 %v567, 88
      %v638 = vpop.permute.xlu0 %637
      %v640 = vsel %vm570, %v636, 0
      %v643 = vsel %vm570, %v638, 0
      %645 = vmatpush.bf16.xpose.msra.mxu0 0
      %646 = vmatpush.bf16.xpose.msra.mxu0 0
      %647 = vmatpush.bf16.xpose.msra.mxu0 0
      %648 = vmatpush.bf16.xpose.msra.mxu0 0
      %649 = vmatpush.bf16.xpose.msra.mxu0 0
      %650 = vmatpush.bf16.xpose.msra.mxu0 0
      %651 = vmatpush.bf16.xpose.msra.mxu0 0
      %652 = vmatpush.bf16.xpose.msra.mxu0 %v643
      %653 = vmatmul.bf16.gmra.mxu0 %v640
      %v654 = vpop.f32.mrf.mxu0
      %v655 = vadd.f32 %v557, %v654
      %v656 = vpop.f32.mrf.mxu0
      %v657 = vadd.f32 %v557, %v656
      %658 = vdwg.mxu0
      %v659 = vsel %vm591, %v655, -inf
      %660 = vmax.xlane.f32.xlu0 %v659
      %v661 = vpop.xlane.xlu0 %660
      %v662 = vsel %vm591, %v657, -inf
      %663 = vmax.xlane.f32.xlu0 %v662
      %v664 = vpop.xlane.xlu0 %663
      %v665 = vsub.f32 %v655, %v661
      %v666 = vsub.f32 %v657, %v664
      %v667 = vmul.f32 %v665, 1.442695
      %v668 = vpow.pop %v667
      %v669 = vmul.f32 %v666, 1.442695
      %v670 = vpow.pop %v669
      %v671 = vsel %vm591, %v668, 0.0
      %672 = vadd.xlane.f32.xlu0 %v671
      %v673 = vpop.xlane.xlu0 %672
      %v674 = vsel %vm591, %v670, 0.0
      %675 = vadd.xlane.f32.xlu0 %v674
      %v676 = vpop.xlane.xlu0 %675
      %v677 = vrcp.pop %v673
      %v678 = vrcp.pop %v676
      %v679 = vmul.f32 %v668, %v677
      %v680 = vmul.f32 %v670, %v678
      %v681 = vpack.c.bf16 %v680, %v679
      %682 = vrot.lane.b32.xlu0 %v567, 56
      %v683 = vpop.permute.xlu0 %682
      %v686 = vsel %vm591, %v681, 0
      %688 = vmatpush.bf16.msra.mxu0 0
      %689 = vmatpush.bf16.msra.mxu0 0
      %690 = vmatpush.bf16.msra.mxu0 0
      %691 = vmatpush.bf16.msra.mxu0 0
      %692 = vmatpush.bf16.msra.mxu0 0
      %693 = vmatpush.bf16.msra.mxu0 0
      %694 = vmatpush.bf16.msra.mxu0 0
      %695 = vmatpush.bf16.msra.mxu0 %v683
      %696 = vmatmul.bf16.gmra.mxu0 %v686
      %v697 = vpop.f32.mrf.mxu0
      %v698 = vadd.f32 0.0, %v697
      %v699 = vpop.f32.mrf.mxu0
      %v700 = vadd.f32 0.0, %v699
      %701 = vdwg.mxu0
      %702 = vrot.lane.b32.xlu0 %v562, 112
      %v703 = vpop.permute.xlu0 %702
      %704 = vrot.lane.b32.xlu0 %v567, 80
      %v705 = vpop.permute.xlu0 %704
      %v707 = vsel %vm570, %v703, 0
      %v710 = vsel %vm570, %v705, 0
      %712 = vmatpush.bf16.xpose.msra.mxu0 0
      %713 = vmatpush.bf16.xpose.msra.mxu0 0
      %714 = vmatpush.bf16.xpose.msra.mxu0 0
      %715 = vmatpush.bf16.xpose.msra.mxu0 0
      %716 = vmatpush.bf16.xpose.msra.mxu0 0
      %717 = vmatpush.bf16.xpose.msra.mxu0 0
      %718 = vmatpush.bf16.xpose.msra.mxu0 0
      %719 = vmatpush.bf16.xpose.msra.mxu0 %v710
      %720 = vmatmul.bf16.gmra.mxu0 %v707
      %v721 = vpop.f32.mrf.mxu0
      %v722 = vadd.f32 %v557, %v721
      %v723 = vpop.f32.mrf.mxu0
      %v724 = vadd.f32 %v557, %v723
      %725 = vdwg.mxu0
      %v726 = vsel %vm591, %v722, -inf
      %727 = vmax.xlane.f32.xlu0 %v726
      %v728 = vpop.xlane.xlu0 %727
      %v729 = vsel %vm591, %v724, -inf
      %730 = vmax.xlane.f32.xlu0 %v729
      %v731 = vpop.xlane.xlu0 %730
      %v732 = vsub.f32 %v722, %v728
      %v733 = vsub.f32 %v724, %v731
      %v734 = vmul.f32 %v732, 1.442695
      %v735 = vpow.pop %v734
      %v736 = vmul.f32 %v733, 1.442695
      %v737 = vpow.pop %v736
      %v738 = vsel %vm591, %v735, 0.0
      %739 = vadd.xlane.f32.xlu0 %v738
      %v740 = vpop.xlane.xlu0 %739
      %v741 = vsel %vm591, %v737, 0.0
      %742 = vadd.xlane.f32.xlu0 %v741
      %v743 = vpop.xlane.xlu0 %742
      %v744 = vrcp.pop %v740
      %v745 = vrcp.pop %v743
      %v746 = vmul.f32 %v735, %v744
      %v747 = vmul.f32 %v737, %v745
      %v748 = vpack.c.bf16 %v747, %v746
      %749 = vrot.lane.b32.xlu0 %v567, 48
      %v750 = vpop.permute.xlu0 %749
      %v753 = vsel %vm591, %v748, 0
      %755 = vmatpush.bf16.msra.mxu0 0
      %756 = vmatpush.bf16.msra.mxu0 0
      %757 = vmatpush.bf16.msra.mxu0 0
      %758 = vmatpush.bf16.msra.mxu0 0
      %759 = vmatpush.bf16.msra.mxu0 0
      %760 = vmatpush.bf16.msra.mxu0 0
      %761 = vmatpush.bf16.msra.mxu0 0
      %762 = vmatpush.bf16.msra.mxu0 %v750
      %763 = vmatmul.bf16.gmra.mxu0 %v753
      %v764 = vpop.f32.mrf.mxu0
      %v765 = vadd.f32 0.0, %v764
      %v766 = vpop.f32.mrf.mxu0
      %v767 = vadd.f32 0.0, %v766
      %768 = vdwg.mxu0
      %769 = vrot.lane.b32.xlu0 %v562, 104
      %v770 = vpop.permute.xlu0 %769
      %771 = vrot.lane.b32.xlu0 %v567, 72
      %v772 = vpop.permute.xlu0 %771
      %v774 = vsel %vm570, %v770, 0
      %v777 = vsel %vm570, %v772, 0
      %779 = vmatpush.bf16.xpose.msra.mxu0 0
      %780 = vmatpush.bf16.xpose.msra.mxu0 0
      %781 = vmatpush.bf16.xpose.msra.mxu0 0
      %782 = vmatpush.bf16.xpose.msra.mxu0 0
      %783 = vmatpush.bf16.xpose.msra.mxu0 0
      %784 = vmatpush.bf16.xpose.msra.mxu0 0
      %785 = vmatpush.bf16.xpose.msra.mxu0 0
      %786 = vmatpush.bf16.xpose.msra.mxu0 %v777
      %787 = vmatmul.bf16.gmra.mxu0 %v774
      %v788 = vpop.f32.mrf.mxu0
      %v789 = vadd.f32 %v557, %v788
      %v790 = vpop.f32.mrf.mxu0
      %v791 = vadd.f32 %v557, %v790
      %792 = vdwg.mxu0
      %v793 = vsel %vm591, %v789, -inf
      %794 = vmax.xlane.f32.xlu0 %v793
      %v795 = vpop.xlane.xlu0 %794
      %v796 = vsel %vm591, %v791, -inf
      %797 = vmax.xlane.f32.xlu0 %v796
      %v798 = vpop.xlane.xlu0 %797
      %v799 = vsub.f32 %v789, %v795
      %v800 = vsub.f32 %v791, %v798
      %v801 = vmul.f32 %v799, 1.442695
      %v802 = vpow.pop %v801
      %v803 = vmul.f32 %v800, 1.442695
      %v804 = vpow.pop %v803
      %v805 = vsel %vm591, %v802, 0.0
      %806 = vadd.xlane.f32.xlu0 %v805
      %v807 = vpop.xlane.xlu0 %806
      %v808 = vsel %vm591, %v804, 0.0
      %809 = vadd.xlane.f32.xlu0 %v808
      %v810 = vpop.xlane.xlu0 %809
      %v811 = vrcp.pop %v807
      %v812 = vrcp.pop %v810
      %v813 = vmul.f32 %v802, %v811
      %v814 = vmul.f32 %v804, %v812
      %v815 = vpack.c.bf16 %v814, %v813
      %816 = vrot.lane.b32.xlu0 %v567, 40
      %v817 = vpop.permute.xlu0 %816
      %v820 = vsel %vm591, %v815, 0
      %822 = vmatpush.bf16.msra.mxu0 0
      %823 = vmatpush.bf16.msra.mxu0 0
      %824 = vmatpush.bf16.msra.mxu0 0
      %825 = vmatpush.bf16.msra.mxu0 0
      %826 = vmatpush.bf16.msra.mxu0 0
      %827 = vmatpush.bf16.msra.mxu0 0
      %828 = vmatpush.bf16.msra.mxu0 0
      %829 = vmatpush.bf16.msra.mxu0 %v817
      %830 = vmatmul.bf16.gmra.mxu0 %v820
      %v831 = vpop.f32.mrf.mxu0
      %v832 = vadd.f32 0.0, %v831
      %v833 = vpop.f32.mrf.mxu0
      %v834 = vadd.f32 0.0, %v833
      %835 = vdwg.mxu0
      %838 = vrot.lane.b32.xlu0 %v698, 8
      %v839 = vpop.permute.xlu0 %838
      %840 = vrot.lane.b32.xlu0 %v700, 8
      %v841 = vpop.permute.xlu0 %840
      %846 = vrot.lane.b32.xlu0 %v765, 16
      %v847 = vpop.permute.xlu0 %846
      %848 = vrot.lane.b32.xlu0 %v767, 16
      %v849 = vpop.permute.xlu0 %848
      %854 = vrot.lane.b32.xlu0 %v832, 24
      %v855 = vpop.permute.xlu0 %854
      %856 = vrot.lane.b32.xlu0 %v834, 24
      %v857 = vpop.permute.xlu0 %856
      %v860 = vsel %vm570, %v631, %v839
      %v861 = vsel %vm570, %v633, %v841
      %v862 = vsel %vm591, %v860, %v847
      %v863 = vsel %vm591, %v861, %v849
      %vm864 = vcmask 195584
      %v865 = vsel %vm864, %v862, %v855
      %v866 = vsel %vm864, %v863, %v857
      %v867 = vpack.c.bf16 %v866, %v865
      %v868 = vld [vmem:[%s5] sm:$0xf]
      %v869 = vld [vmem:[%s5 + $0x4] sm:$0xf]
      %v870 = vld [vmem:[%s5 + $0x8] sm:$0xf]
      %v871 = vld [vmem:[%s5 + $0xc] sm:$0xf]
      %v876 = vunpack.c.l.b16 %v868
      %v877 = vunpack.c.l.b16 %v869
      %v878 = vunpack.c.l.b16 %v870
      %v879 = vunpack.c.l.b16 %v871
      %v880 = vpack.c.b16 %v877, %v876
      %v881 = vpack.c.b16 %v879, %v878
      %v885 = vsel %vm448, %v867, 0
      %887 = vmatpush.bf16.msra.mxu0 0
      %888 = vmatpush.bf16.msra.mxu0 0
      %889 = vmatpush.bf16.msra.mxu0 0
      %890 = vmatpush.bf16.msra.mxu0 0
      %891 = vmatpush.bf16.msra.mxu0 0
      %892 = vmatpush.bf16.msra.mxu0 0
      %893 = vmatpush.bf16.msra.mxu0 %v881
      %894 = vmatpush.bf16.msra.mxu0 %v880
      %895 = vmatmul.bf16.gmra.mxu0 %v885
      %v896 = vpop.f32.mrf.mxu0
      %v897 = vadd.f32 0.0, %v896
      %v898 = vpop.f32.mrf.mxu0
      %v899 = vadd.f32 0.0, %v898
      %900 = vdwg.mxu0
      %v901 = vadd.f32 %v444, %v897
      %v902 = vadd.f32 %v445, %v899
      %v903 = vld [vmem:[%s6] sm:$0x1]
      %v905 = vperm.slane %v903, 0
      %v907 = vadd.f32 %v901, %v905
      %v908 = vadd.f32 %v902, %v905
      %v909 = vld [vmem:[%s7] sm:$0x1]
      %v910 = vld [vmem:[%s8] sm:$0x1]
      %v911 = vsel %vm448, %v907, 0.0
      %912 = vadd.xlane.f32.xlu0 %v911
      %v913 = vpop.xlane.xlu0 %912
      %v914 = vsel %vm448, %v908, 0.0
      %915 = vadd.xlane.f32.xlu0 %v914
      %v916 = vpop.xlane.xlu0 %915
      %v917 = vmul.f32 %v913, %v461
      %v918 = vmul.f32 %v916, %v461
      %v919 = vsub.f32 %v907, %v917
      %v920 = vsub.f32 %v908, %v918
      %v921 = vmul.f32 %v919, %v919
      %v922 = vmul.f32 %v920, %v920
      %v923 = vsel %vm448, %v921, 0.0
      %924 = vadd.xlane.f32.xlu0 %v923
      %v925 = vpop.xlane.xlu0 %924
      %v926 = vsel %vm448, %v922, 0.0
      %927 = vadd.xlane.f32.xlu0 %v926
      %v928 = vpop.xlane.xlu0 %927
      %v929 = vmul.f32 %v925, %v461
      %v930 = vmul.f32 %v928, %v461
      %v931 = vadd.f32 %v929, 1e-05
      %v932 = vadd.f32 %v930, 1e-05
      %v933 = vrsqrt.pop %v931
      %v934 = vmul.f32 %v933, %v931
      %v935 = vmul.f32 %v934, %v933
      %v936 = vmul.f32 0.5, %v935
      %v937 = vsub.f32 1.5, %v936
      %v938 = vmul.f32 %v933, %v937
      %vm939 = vweird.f32 %v931
      %vm940 = vweird.f32 %v933
      %vm941 = vmor %vm939, %vm940
      %v942 = vsel %vm941, %v933, %v938
      %v943 = vrsqrt.pop %v932
      %v944 = vmul.f32 %v943, %v932
      %v945 = vmul.f32 %v944, %v943
      %v946 = vmul.f32 0.5, %v945
      %v947 = vsub.f32 1.5, %v946
      %v948 = vmul.f32 %v943, %v947
      %vm949 = vweird.f32 %v932
      %vm950 = vweird.f32 %v943
      %vm951 = vmor %vm949, %vm950
      %v952 = vsel %vm951, %v943, %v948
      %v953 = vmul.f32 %v919, %v942
      %v954 = vmul.f32 %v920, %v952
      %v956 = vperm.slane %v909, 0
      %v958 = vmul.f32 %v953, %v956
      %v959 = vmul.f32 %v954, %v956
      %v961 = vperm.slane %v910, 0
      %v963 = vadd.f32 %v958, %v961
      %v964 = vadd.f32 %v959, %v961
      %v965 = vpack.c.bf16 %v964, %v963
      %v966 = vld [vmem:[%s9] sm:$0xf]
      %v967 = vld [vmem:[%s9 + $0x4] sm:$0xf]
      %v968 = vld [vmem:[%s9 + $0x8] sm:$0xf]
      %v969 = vld [vmem:[%s9 + $0xc] sm:$0xf]
      %v970 = vld [vmem:[%s10] sm:$0x1]
      %v972 = vperm.slane %v970, 0
      %v978 = vunpack.c.l.b16 %v966
      %v979 = vunpack.c.l.b16 %v967
      %v980 = vunpack.c.l.b16 %v968
      %v981 = vunpack.c.l.b16 %v969
      %v982 = vpack.c.b16 %v979, %v978
      %v983 = vpack.c.b16 %v981, %v980
      %v987 = vsel %vm448, %v965, 0
      %989 = vmatpush.bf16.msra.mxu0 0
      %990 = vmatpush.bf16.msra.mxu0 0
      %991 = vmatpush.bf16.msra.mxu0 0
      %992 = vmatpush.bf16.msra.mxu0 0
      %993 = vmatpush.bf16.msra.mxu0 0
      %994 = vmatpush.bf16.msra.mxu0 0
      %995 = vmatpush.bf16.msra.mxu0 %v983
      %996 = vmatpush.bf16.msra.mxu0 %v982
      %997 = vmatmul.bf16.gmra.mxu0 %v987
      %v998 = vpop.f32.mrf.mxu0
      %v999 = vadd.f32 %v972, %v998
      %v1000 = vpop.f32.mrf.mxu0
      %v1001 = vadd.f32 %v972, %v1000
      %1002 = vdwg.mxu0
      %v1003 = vmul.f32 %v999, 0.5
      %v1004 = vmul.f32 %v1001, 0.5
      %v1005 = vmul.f32 %v999, 0.70710677
      %v1006 = vmul.f32 %v1001, 0.70710677
      %v1007 = vmul.f32 %v1005, %v1005
      %v1008 = vmin.f32 16.0, %v1007
      %v1009 = vmul.f32 %v1008, 2.1237322e-06
      %v1010 = vadd.f32 %v1009, 0.00028619796
      %v1011 = vmul.f32 %v1008, %v1010
      %v1012 = vadd.f32 %v1011, 0.0036580483
      %v1013 = vmul.f32 %v1008, %v1012
      %v1014 = vadd.f32 %v1013, 0.05243302
      %v1015 = vmul.f32 %v1008, %v1014
      %v1016 = vadd.f32 %v1015, 0.18741608
      %v1017 = vmul.f32 %v1008, %v1016
      %v1018 = vadd.f32 %v1017, 1.1283791
      %v1019 = vmul.f32 %v1005, %v1018
      %v1020 = vmul.f32 %v1008, 3.8918573e-05
      %v1021 = vadd.f32 %v1020, 0.001143296
      %v1022 = vmul.f32 %v1008, %v1021
      %v1023 = vadd.f32 %v1022, 0.014752088
      %v1024 = vmul.f32 %v1008, %v1023
      %v1025 = vadd.f32 %v1024, 0.112945676
      %v1026 = vmul.f32 %v1008, %v1025
      %v1027 = vadd.f32 %v1026, 0.4994258
      %v1028 = vmul.f32 %v1008, %v1027
      %v1029 = vadd.f32 %v1028, 1.0
      %v1030 = vrcp.pop %v1029
      %v1031 = vmul.f32 %v1029, %v1030
      %v1032 = vsub.f32 1.0, %v1031
      %v1033 = vmul.f32 %v1030, %v1032
      %v1034 = vadd.f32 %v1030, %v1033
      %vm1035 = vweird.f32 %v1029
      %vm1036 = vweird.f32 %v1030
      %vm1037 = vmor %vm1035, %vm1036
      %v1038 = vsel %vm1037, %v1030, %v1034
      %v1039 = vand.u32 2147483647, %v1029
      %vm1040 = vcmp.eq.f32.partialorder %v1039, 8.507059e+37
      %v1041 = vand.u32 %v1029, 2147483648
      %v1042 = vor.u32 1.1754944e-38, %v1041
      %v1043 = vsel %vm1040, %v1042, %v1038
      %v1044 = vmul.f32 %v1019, %v1043
      %v1045 = vmin.f32 %v1044, 1.0
      %v1046 = vmax.f32 %v1045, -1.0
      %v1047 = vmul.f32 %v1006, %v1006
      %v1048 = vmin.f32 16.0, %v1047
      %v1049 = vmul.f32 %v1048, 2.1237322e-06
      %v1050 = vadd.f32 %v1049, 0.00028619796
      %v1051 = vmul.f32 %v1048, %v1050
      %v1052 = vadd.f32 %v1051, 0.0036580483
      %v1053 = vmul.f32 %v1048, %v1052
      %v1054 = vadd.f32 %v1053, 0.05243302
      %v1055 = vmul.f32 %v1048, %v1054
      %v1056 = vadd.f32 %v1055, 0.18741608
      %v1057 = vmul.f32 %v1048, %v1056
      %v1058 = vadd.f32 %v1057, 1.1283791
      %v1059 = vmul.f32 %v1006, %v1058
      %v1060 = vmul.f32 %v1048, 3.8918573e-05
      %v1061 = vadd.f32 %v1060, 0.001143296
      %v1062 = vmul.f32 %v1048, %v1061
      %v1063 = vadd.f32 %v1062, 0.014752088
      %v1064 = vmul.f32 %v1048, %v1063
      %v1065 = vadd.f32 %v1064, 0.112945676
      %v1066 = vmul.f32 %v1048, %v1065
      %v1067 = vadd.f32 %v1066, 0.4994258
      %v1068 = vmul.f32 %v1048, %v1067
      %v1069 = vadd.f32 %v1068, 1.0
      %v1070 = vrcp.pop %v1069
      %v1071 = vmul.f32 %v1069, %v1070
      %v1072 = vsub.f32 1.0, %v1071
      %v1073 = vmul.f32 %v1070, %v1072
      %v1074 = vadd.f32 %v1070, %v1073
      %vm1075 = vweird.f32 %v1069
      %vm1076 = vweird.f32 %v1070
      %vm1077 = vmor %vm1075, %vm1076
      %v1078 = vsel %vm1077, %v1070, %v1074
      %v1079 = vand.u32 2147483647, %v1069
      %vm1080 = vcmp.eq.f32.partialorder %v1079, 8.507059e+37
      %v1081 = vand.u32 %v1069, 2147483648
      %v1082 = vor.u32 1.1754944e-38, %v1081
      %v1083 = vsel %vm1080, %v1082, %v1078
      %v1084 = vmul.f32 %v1059, %v1083
      %v1085 = vmin.f32 %v1084, 1.0
      %v1086 = vmax.f32 %v1085, -1.0
      %v1087 = vadd.f32 %v1046, 1.0
      %v1088 = vadd.f32 %v1086, 1.0
      %v1089 = vmul.f32 %v1003, %v1087
      %v1090 = vmul.f32 %v1004, %v1088
      %v1091 = vpack.c.bf16 %v1090, %v1089
      %v1092 = vld [vmem:[%s11] sm:$0xf]
      %v1093 = vld [vmem:[%s11 + $0x4] sm:$0xf]
      %v1094 = vld [vmem:[%s11 + $0x8] sm:$0xf]
      %v1095 = vld [vmem:[%s11 + $0xc] sm:$0xf]
      %v1096 = vld [vmem:[%s11 + $0x10] sm:$0xf]
      %v1097 = vld [vmem:[%s11 + $0x14] sm:$0xf]
      %v1098 = vld [vmem:[%s11 + $0x18] sm:$0xf]
      %v1099 = vld [vmem:[%s11 + $0x1c] sm:$0xf]
      %v1100 = vld [vmem:[%s11 + $0x20] sm:$0xf]
      %v1101 = vld [vmem:[%s11 + $0x24] sm:$0xf]
      %v1102 = vld [vmem:[%s11 + $0x28] sm:$0xf]
      %v1103 = vld [vmem:[%s11 + $0x2c] sm:$0xf]
      %v1104 = vld [vmem:[%s11 + $0x30] sm:$0xf]
      %v1105 = vld [vmem:[%s11 + $0x34] sm:$0xf]
      %v1106 = vld [vmem:[%s11 + $0x38] sm:$0xf]
      %v1107 = vld [vmem:[%s11 + $0x3c] sm:$0xf]
      %v1124 = vunpack.c.l.b16 %v1092
      %v1125 = vunpack.c.l.b16 %v1093
      %v1126 = vunpack.c.l.b16 %v1094
      %v1127 = vunpack.c.l.b16 %v1095
      %v1128 = vunpack.c.l.b16 %v1096
      %v1129 = vunpack.c.l.b16 %v1097
      %v1130 = vunpack.c.l.b16 %v1098
      %v1131 = vunpack.c.l.b16 %v1099
      %v1132 = vunpack.c.l.b16 %v1100
      %v1133 = vunpack.c.l.b16 %v1101
      %v1134 = vunpack.c.l.b16 %v1102
      %v1135 = vunpack.c.l.b16 %v1103
      %v1136 = vunpack.c.l.b16 %v1104
      %v1137 = vunpack.c.l.b16 %v1105
      %v1138 = vunpack.c.l.b16 %v1106
      %v1139 = vunpack.c.l.b16 %v1107
      %v1140 = vpack.c.b16 %v1125, %v1124
      %v1141 = vpack.c.b16 %v1127, %v1126
      %v1142 = vpack.c.b16 %v1129, %v1128
      %v1143 = vpack.c.b16 %v1131, %v1130
      %v1144 = vpack.c.b16 %v1133, %v1132
      %v1145 = vpack.c.b16 %v1135, %v1134
      %v1146 = vpack.c.b16 %v1137, %v1136
      %v1147 = vpack.c.b16 %v1139, %v1138
      %1156 = vmatpush.bf16.msra.mxu0 %v1147
      %1157 = vmatpush.bf16.msra.mxu0 %v1146
      %1158 = vmatpush.bf16.msra.mxu0 %v1145
      %1159 = vmatpush.bf16.msra.mxu0 %v1144
      %1160 = vmatpush.bf16.msra.mxu0 %v1143
      %1161 = vmatpush.bf16.msra.mxu0 %v1142
      %1162 = vmatpush.bf16.msra.mxu0 %v1141
      %1163 = vmatpush.bf16.msra.mxu0 %v1140
      %1164 = vmatmul.bf16.gmra.mxu0 %v1091
      %v1165 = vpop.f32.mrf.mxu0
      %v1166 = vadd.f32 0.0, %v1165
      %v1167 = vpop.f32.mrf.mxu0
      %v1168 = vadd.f32 0.0, %v1167
      %1169 = vdwg.mxu0
      %v1170 = vadd.f32 %v907, %v1166
      %v1171 = vadd.f32 %v908, %v1168
      %v1172 = vld [vmem:[%s12] sm:$0x1]
      %v1174 = vperm.slane %v1172, 0
      %v1176 = vadd.f32 %v1170, %v1174
      %v1177 = vadd.f32 %v1171, %v1174
      %v1178 = vpack.c.bf16 %v1176, %v1176
      %v1179 = vpack.c.bf16 %v1177, %v1177
      %vm1180 = vcmask 257024
      %1181 = vst.msk [vmem:[%s440] sm:$0xf] %vm1180, %v1178
      %1182 = vst.msk [vmem:[%s440 + $0x4] sm:$0xf] %vm1180, %v1179
      %p1183 = scmp.lt.s32.totalorder %s24, 1
      %s1184 = scalar_select %p1183, %s24, 1
      %s1185 = smul.addr %s1184, 2
      %s1186 = smul.addr %s1185, 4
      %s1187 = scalar_lea.vmem %s13, %s1186
      // Predicated region
      $region73: #{m2d_forward.11} parent=71 // pred_check
        %p1188 = pneg %p320
      $region74: #{m2d_forward.11} parent=71 // pred_check_branch
        %1190 = sbr.rel (%p1188) target = $region76
      $region75: #{m2d_forward.11} parent=71 // pred_region
        _
      $region76: #{m2d_forward.11} parent=71 // pred_fallthru
        _
    $region72: #{m2d_forward.11} parent=5 // pred_fallthru
      _
    %p1191 = scmp.le.s32.totalorder 2, %s19
    // Predicated region
    $region77: #{m2d_forward.11} parent=5 // pred_check
      %p1192 = pneg %p1191
    $region78: #{m2d_forward.11} parent=5 // pred_check_branch
      %1194 = sbr.rel (%p1192) target = $region80
    $region79: #{m2d_forward.11} parent=5 // pred_region
      %s1195 = ssub.s32 %s19, 2
      // Predicated region
      $region81: #{m2d_forward.11} parent=79 // pred_check
        %p1196 = pneg %p326
      $region82: #{m2d_forward.11} parent=79 // pred_check_branch
        %1198 = sbr.rel (%p1196) target = $region84
      $region83: #{m2d_forward.11} parent=79 // pred_region
        %p1199 = scmp.lt.s32.totalorder %s25, 1
        %s1200 = scalar_select %p1199, %s25, 1
        %s1201 = smul.addr %s1200, 2
        %s1202 = smul.addr %s1201, 4
        %s1203 = scalar_lea.vmem %s13, %s1202
      $region84: #{m2d_forward.11} parent=79 // pred_fallthru
        _
    $region80: #{m2d_forward.11} parent=5 // pred_fallthru
      _
  $region6: #{m2d_forward.11} parent=0 // loop_footer
    %s23 = sadd.s32 1, %s19
  $region7: #{m2d_forward.11} parent=0 // loop_footer_branch
    %18 = sbr.rel target = $region3
  $region8: #{m2d_forward.11} parent=0 // loop_exit
    _

// kernel: m2d_forward.16
$region0: #{m2d_forward.16}
  #allocation0 [shape = 'u32[]', space=smem, size = 0x4, offset = 0x4, fixed_abs, tag = 'smem constant byte address 0x4 - core index']
  #allocation1 [shape = 'u32[72,128]{1,0:T(1,128)}', space=vmem, size = 0x9000, scoped, tag = 'internal scratch']
  %s0 = inlined_call_operand.vmem [shape: bf16[32,32], index: 0, kind: input, shape index: {}]
  %s1 = inlined_call_operand.vmem [shape: f32[1,32], index: 1, kind: input, shape index: {}]
  %s2 = inlined_call_operand.vmem [shape: f32[1,32], index: 2, kind: input, shape index: {}]
  %s3 = inlined_call_operand.vmem [shape: bf16[32,32], index: 3, kind: input, shape index: {}]
  %s4 = inlined_call_operand.vmem [shape: f32[1,32], index: 4, kind: input, shape index: {}]
  %s5 = inlined_call_operand.vmem [shape: f32[32,32], index: 5, kind: output, shape index: {}]
  %s6 = sld [smem:[#allocation0]]
  $region30: #{m2d_forward.16} parent=0
    _
  %s8 = ssub.s32 1, %s6
  %s9 = scalar_select 0, %s8, %s6
  // Predicated region
  $region2: #{m2d_forward.16} parent=0 // pred_check
    _
  $region3: #{m2d_forward.16} parent=0 // pred_check_branch
    %11 = sbr.rel (0) target = $region5
  $region4: #{m2d_forward.16} parent=0 // pred_region
    _
  $region5: #{m2d_forward.16} parent=0 // pred_fallthru
    _
  // Predicated region
  $region6: #{m2d_forward.16} parent=0 // pred_check
    _
  $region7: #{m2d_forward.16} parent=0 // pred_check_branch
    %13 = sbr.rel (0) target = $region9
  $region8: #{m2d_forward.16} parent=0 // pred_region
    _
  $region9: #{m2d_forward.16} parent=0 // pred_fallthru
    _
  // Predicated region
  $region10: #{m2d_forward.16} parent=0 // pred_check
    _
  $region11: #{m2d_forward.16} parent=0 // pred_check_branch
    %15 = sbr.rel (0) target = $region13
  $region12: #{m2d_forward.16} parent=0 // pred_region
    _
  $region13: #{m2d_forward.16} parent=0 // pred_fallthru
    _
  // Predicated region
  $region14: #{m2d_forward.16} parent=0 // pred_check
    _
  $region15: #{m2d_forward.16} parent=0 // pred_check_branch
    %17 = sbr.rel (0) target = $region17
  $region16: #{m2d_forward.16} parent=0 // pred_region
    _
  $region17: #{m2d_forward.16} parent=0 // pred_fallthru
    _
  // Predicated region
  $region18: #{m2d_forward.16} parent=0 // pred_check
    _
  $region19: #{m2d_forward.16} parent=0 // pred_check_branch
    %19 = sbr.rel (0) target = $region21
  $region20: #{m2d_forward.16} parent=0 // pred_region
    _
  $region21: #{m2d_forward.16} parent=0 // pred_fallthru
    _
  %v21 = vld [vmem:[%s0] sm:$0xf]
  %v22 = vld [vmem:[%s0 + $0x4] sm:$0xf]
  %v23 = vld [vmem:[%s0 + $0x8] sm:$0xf]
  %v24 = vld [vmem:[%s0 + $0xc] sm:$0xf]
  %v25 = vunpack.c.l.bf16 %v21
  %v26 = vunpack.c.l.bf16 %v22
  %v27 = vunpack.c.l.bf16 %v23
  %v28 = vunpack.c.l.bf16 %v24
  %v29 = vld [vmem:[%s1] sm:$0x1]
  %v30 = vld [vmem:[%s2] sm:$0x1]
  %vm31 = vcmask 261120
  %v32 = vsel %vm31, %v25, 0.0
  %33 = vadd.xlane.f32.xlu0 %v32
  %v34 = vpop.xlane.xlu0 %33
  %v35 = vsel %vm31, %v26, 0.0
  %36 = vadd.xlane.f32.xlu0 %v35
  %v37 = vpop.xlane.xlu0 %36
  %v38 = vsel %vm31, %v27, 0.0
  %39 = vadd.xlane.f32.xlu0 %v38
  %v40 = vpop.xlane.xlu0 %39
  %v41 = vsel %vm31, %v28, 0.0
  %42 = vadd.xlane.f32.xlu0 %v41
  %v43 = vpop.xlane.xlu0 %42
  %v44 = vrcp.pop 32.0
  %v45 = vmul.f32 32.0, %v44
  %v46 = vsub.f32 1.0, %v45
  %v47 = vmul.f32 %v44, %v46
  %v48 = vadd.f32 %v44, %v47
  %vm49 = vweird.f32 %v44
  %v50 = vsel %vm49, %v44, %v48
  %v51 = vmul.f32 %v34, %v50
  %v52 = vmul.f32 %v37, %v50
  %v53 = vmul.f32 %v40, %v50
  %v54 = vmul.f32 %v43, %v50
  %v55 = vsub.f32 %v25, %v51
  %v56 = vsub.f32 %v26, %v52
  %v57 = vsub.f32 %v27, %v53
  %v58 = vsub.f32 %v28, %v54
  %v59 = vmul.f32 %v55, %v55
  %v60 = vmul.f32 %v56, %v56
  %v61 = vmul.f32 %v57, %v57
  %v62 = vmul.f32 %v58, %v58
  %v63 = vsel %vm31, %v59, 0.0
  %64 = vadd.xlane.f32.xlu0 %v63
  %v65 = vpop.xlane.xlu0 %64
  %v66 = vsel %vm31, %v60, 0.0
  %67 = vadd.xlane.f32.xlu0 %v66
  %v68 = vpop.xlane.xlu0 %67
  %v69 = vsel %vm31, %v61, 0.0
  %70 = vadd.xlane.f32.xlu0 %v69
  %v71 = vpop.xlane.xlu0 %70
  %v72 = vsel %vm31, %v62, 0.0
  %73 = vadd.xlane.f32.xlu0 %v72
  %v74 = vpop.xlane.xlu0 %73
  %v75 = vmul.f32 %v65, %v50
  %v76 = vmul.f32 %v68, %v50
  %v77 = vmul.f32 %v71, %v50
  %v78 = vmul.f32 %v74, %v50
  %v79 = vadd.f32 %v75, 1e-05
  %v80 = vadd.f32 %v76, 1e-05
  %v81 = vadd.f32 %v77, 1e-05
  %v82 = vadd.f32 %v78, 1e-05
  %v83 = vrsqrt.pop %v79
  %v84 = vmul.f32 %v83, %v79
  %v85 = vmul.f32 %v84, %v83
  %v86 = vmul.f32 0.5, %v85
  %v87 = vsub.f32 1.5, %v86
  %v88 = vmul.f32 %v83, %v87
  %vm89 = vweird.f32 %v79
  %vm90 = vweird.f32 %v83
  %vm91 = vmor %vm89, %vm90
  %v92 = vsel %vm91, %v83, %v88
  %v93 = vrsqrt.pop %v80
  %v94 = vmul.f32 %v93, %v80
  %v95 = vmul.f32 %v94, %v93
  %v96 = vmul.f32 0.5, %v95
  %v97 = vsub.f32 1.5, %v96
  %v98 = vmul.f32 %v93, %v97
  %vm99 = vweird.f32 %v80
  %vm100 = vweird.f32 %v93
  %vm101 = vmor %vm99, %vm100
  %v102 = vsel %vm101, %v93, %v98
  %v103 = vrsqrt.pop %v81
  %v104 = vmul.f32 %v103, %v81
  %v105 = vmul.f32 %v104, %v103
  %v106 = vmul.f32 0.5, %v105
  %v107 = vsub.f32 1.5, %v106
  %v108 = vmul.f32 %v103, %v107
  %vm109 = vweird.f32 %v81
  %vm110 = vweird.f32 %v103
  %vm111 = vmor %vm109, %vm110
  %v112 = vsel %vm111, %v103, %v108
  %v113 = vrsqrt.pop %v82
  %v114 = vmul.f32 %v113, %v82
  %v115 = vmul.f32 %v114, %v113
  %v116 = vmul.f32 0.5, %v115
  %v117 = vsub.f32 1.5, %v116
  %v118 = vmul.f32 %v113, %v117
  %vm119 = vweird.f32 %v82
  %vm120 = vweird.f32 %v113
  %vm121 = vmor %vm119, %vm120
  %v122 = vsel %vm121, %v113, %v118
  %v123 = vmul.f32 %v55, %v92
  %v124 = vmul.f32 %v56, %v102
  %v125 = vmul.f32 %v57, %v112
  %v126 = vmul.f32 %v58, %v122
  %v128 = vperm.slane %v29, 0
  %v130 = vmul.f32 %v123, %v128
  %v131 = vmul.f32 %v124, %v128
  %v132 = vmul.f32 %v125, %v128
  %v133 = vmul.f32 %v126, %v128
  %v135 = vperm.slane %v30, 0
  %v137 = vadd.f32 %v130, %v135
  %v138 = vadd.f32 %v131, %v135
  %v139 = vadd.f32 %v132, %v135
  %v140 = vadd.f32 %v133, %v135
  %v141 = vpack.c.bf16 %v138, %v137
  %v142 = vpack.c.bf16 %v140, %v139
  %v143 = vld [vmem:[%s3] sm:$0xf]
  %v144 = vld [vmem:[%s3 + $0x4] sm:$0xf]
  %v145 = vld [vmem:[%s3 + $0x8] sm:$0xf]
  %v146 = vld [vmem:[%s3 + $0xc] sm:$0xf]
  %v147 = vld [vmem:[%s4] sm:$0x1]
  %v149 = vperm.slane %v147, 0
  %v155 = vunpack.c.l.b16 %v143
  %v156 = vunpack.c.l.b16 %v144
  %v157 = vunpack.c.l.b16 %v145
  %v158 = vunpack.c.l.b16 %v146
  %v159 = vpack.c.b16 %v156, %v155
  %v160 = vpack.c.b16 %v158, %v157
  %v164 = vsel %vm31, %v141, 0
  %v167 = vsel %vm31, %v142, 0
  %169 = vmatpush.bf16.msra.mxu0 0
  %170 = vmatpush.bf16.msra.mxu0 0
  %171 = vmatpush.bf16.msra.mxu0 0
  %172 = vmatpush.bf16.msra.mxu0 0
  %173 = vmatpush.bf16.msra.mxu0 0
  %174 = vmatpush.bf16.msra.mxu0 0
  %175 = vmatpush.bf16.msra.mxu0 %v160
  %176 = vmatpush.bf16.msra.mxu0 %v159
  %177 = vmatmul.bf16.gmra.mxu0 %v164
  %v178 = vpop.f32.mrf.mxu0
  %v179 = vadd.f32 %v149, %v178
  %v180 = vpop.f32.mrf.mxu0
  %v181 = vadd.f32 %v149, %v180
  %182 = vmatmul.bf16.gmra.mxu0 %v167
  %v183 = vpop.f32.mrf.mxu0
  %v184 = vadd.f32 %v149, %v183
  %v185 = vpop.f32.mrf.mxu0
  %v186 = vadd.f32 %v149, %v185
  %187 = vdwg.mxu0
  %188 = vst.msk [vmem:[%s5] sm:$0xff] %vm31, %v179
  %189 = vst.msk [vmem:[%s5 + $0x8] sm:$0xff] %vm31, %v181
  %190 = vst.msk [vmem:[%s5 + $0x10] sm:$0xff] %vm31, %v184
  %191 = vst.msk [vmem:[%s5 + $0x18] sm:$0xff] %vm31, %v186
  // Predicated region
  $region22: #{m2d_forward.16} parent=0 // pred_check
    _
  $region23: #{m2d_forward.16} parent=0 // pred_check_branch
    %193 = sbr.rel (0) target = $region25
  $region24: #{m2d_forward.16} parent=0 // pred_region
    _
  $region25: #{m2d_forward.16} parent=0 // pred_fallthru
    _
  // Predicated region
  $region26: #{m2d_forward.16} parent=0 // pred_check
    _
  $region27: #{m2d_forward.16} parent=0 // pred_check_branch
    %195 = sbr.rel (0) target = $region29
  $region28: #{m2d_forward.16} parent=0 // pred_region
    _
  $region29: #{m2d_forward.16} parent=0 // pred_fallthru
    _

// kernel: m2d_forward.19
$region0: #{m2d_forward.19}
  #allocation0 [shape = 'u32[]', space=smem, size = 0x4, offset = 0x4, fixed_abs, tag = 'smem constant byte address 0x4 - core index']
  #allocation1 [shape = 'u32[72,128]{1,0:T(1,128)}', space=vmem, size = 0x9000, scoped, tag = 'internal scratch']
  %s0 = inlined_call_operand.vmem [shape: bf16[32,32], index: 0, kind: input, shape index: {}]
  %s1 = inlined_call_operand.vmem [shape: f32[1,32], index: 1, kind: input, shape index: {}]
  %s2 = inlined_call_operand.vmem [shape: f32[1,32], index: 2, kind: input, shape index: {}]
  %s3 = inlined_call_operand.vmem [shape: f32[32,32], index: 3, kind: output, shape index: {}]
  %s4 = sld [smem:[#allocation0]]
  $region22: #{m2d_forward.19} parent=0
    _
  %s6 = ssub.s32 1, %s4
  %s7 = scalar_select 0, %s6, %s4
  // Predicated region
  $region2: #{m2d_forward.19} parent=0 // pred_check
    _
  $region3: #{m2d_forward.19} parent=0 // pred_check_branch
    %9 = sbr.rel (0) target = $region5
  $region4: #{m2d_forward.19} parent=0 // pred_region
    _
  $region5: #{m2d_forward.19} parent=0 // pred_fallthru
    _
  // Predicated region
  $region6: #{m2d_forward.19} parent=0 // pred_check
    _
  $region7: #{m2d_forward.19} parent=0 // pred_check_branch
    %11 = sbr.rel (0) target = $region9
  $region8: #{m2d_forward.19} parent=0 // pred_region
    _
  $region9: #{m2d_forward.19} parent=0 // pred_fallthru
    _
  // Predicated region
  $region10: #{m2d_forward.19} parent=0 // pred_check
    _
  $region11: #{m2d_forward.19} parent=0 // pred_check_branch
    %13 = sbr.rel (0) target = $region13
  $region12: #{m2d_forward.19} parent=0 // pred_region
    _
  $region13: #{m2d_forward.19} parent=0 // pred_fallthru
    _
  %v14 = vld [vmem:[%s0] sm:$0xf]
  %v15 = vld [vmem:[%s0 + $0x4] sm:$0xf]
  %v16 = vld [vmem:[%s0 + $0x8] sm:$0xf]
  %v17 = vld [vmem:[%s0 + $0xc] sm:$0xf]
  %v18 = vunpack.c.l.bf16 %v14
  %v19 = vunpack.c.l.bf16 %v15
  %v20 = vunpack.c.l.bf16 %v16
  %v21 = vunpack.c.l.bf16 %v17
  %v22 = vld [vmem:[%s1] sm:$0x1]
  %v23 = vld [vmem:[%s2] sm:$0x1]
  %vm24 = vcmask 261120
  %v25 = vsel %vm24, %v18, 0.0
  %26 = vadd.xlane.f32.xlu0 %v25
  %v27 = vpop.xlane.xlu0 %26
  %v28 = vsel %vm24, %v19, 0.0
  %29 = vadd.xlane.f32.xlu0 %v28
  %v30 = vpop.xlane.xlu0 %29
  %v31 = vsel %vm24, %v20, 0.0
  %32 = vadd.xlane.f32.xlu0 %v31
  %v33 = vpop.xlane.xlu0 %32
  %v34 = vsel %vm24, %v21, 0.0
  %35 = vadd.xlane.f32.xlu0 %v34
  %v36 = vpop.xlane.xlu0 %35
  %v37 = vrcp.pop 32.0
  %v38 = vmul.f32 32.0, %v37
  %v39 = vsub.f32 1.0, %v38
  %v40 = vmul.f32 %v37, %v39
  %v41 = vadd.f32 %v37, %v40
  %vm42 = vweird.f32 %v37
  %v43 = vsel %vm42, %v37, %v41
  %v44 = vmul.f32 %v27, %v43
  %v45 = vmul.f32 %v30, %v43
  %v46 = vmul.f32 %v33, %v43
  %v47 = vmul.f32 %v36, %v43
  %v48 = vsub.f32 %v18, %v44
  %v49 = vsub.f32 %v19, %v45
  %v50 = vsub.f32 %v20, %v46
  %v51 = vsub.f32 %v21, %v47
  %v52 = vmul.f32 %v48, %v48
  %v53 = vmul.f32 %v49, %v49
  %v54 = vmul.f32 %v50, %v50
  %v55 = vmul.f32 %v51, %v51
  %v56 = vsel %vm24, %v52, 0.0
  %57 = vadd.xlane.f32.xlu0 %v56
  %v58 = vpop.xlane.xlu0 %57
  %v59 = vsel %vm24, %v53, 0.0
  %60 = vadd.xlane.f32.xlu0 %v59
  %v61 = vpop.xlane.xlu0 %60
  %v62 = vsel %vm24, %v54, 0.0
  %63 = vadd.xlane.f32.xlu0 %v62
  %v64 = vpop.xlane.xlu0 %63
  %v65 = vsel %vm24, %v55, 0.0
  %66 = vadd.xlane.f32.xlu0 %v65
  %v67 = vpop.xlane.xlu0 %66
  %v68 = vmul.f32 %v58, %v43
  %v69 = vmul.f32 %v61, %v43
  %v70 = vmul.f32 %v64, %v43
  %v71 = vmul.f32 %v67, %v43
  %v72 = vadd.f32 %v68, 1e-05
  %v73 = vadd.f32 %v69, 1e-05
  %v74 = vadd.f32 %v70, 1e-05
  %v75 = vadd.f32 %v71, 1e-05
  %v76 = vrsqrt.pop %v72
  %v77 = vmul.f32 %v76, %v72
  %v78 = vmul.f32 %v77, %v76
  %v79 = vmul.f32 0.5, %v78
  %v80 = vsub.f32 1.5, %v79
  %v81 = vmul.f32 %v76, %v80
  %vm82 = vweird.f32 %v72
  %vm83 = vweird.f32 %v76
  %vm84 = vmor %vm82, %vm83
  %v85 = vsel %vm84, %v76, %v81
  %v86 = vrsqrt.pop %v73
  %v87 = vmul.f32 %v86, %v73
  %v88 = vmul.f32 %v87, %v86
  %v89 = vmul.f32 0.5, %v88
  %v90 = vsub.f32 1.5, %v89
  %v91 = vmul.f32 %v86, %v90
  %vm92 = vweird.f32 %v73
  %vm93 = vweird.f32 %v86
  %vm94 = vmor %vm92, %vm93
  %v95 = vsel %vm94, %v86, %v91
  %v96 = vrsqrt.pop %v74
  %v97 = vmul.f32 %v96, %v74
  %v98 = vmul.f32 %v97, %v96
  %v99 = vmul.f32 0.5, %v98
  %v100 = vsub.f32 1.5, %v99
  %v101 = vmul.f32 %v96, %v100
  %vm102 = vweird.f32 %v74
  %vm103 = vweird.f32 %v96
  %vm104 = vmor %vm102, %vm103
  %v105 = vsel %vm104, %v96, %v101
  %v106 = vrsqrt.pop %v75
  %v107 = vmul.f32 %v106, %v75
  %v108 = vmul.f32 %v107, %v106
  %v109 = vmul.f32 0.5, %v108
  %v110 = vsub.f32 1.5, %v109
  %v111 = vmul.f32 %v106, %v110
  %vm112 = vweird.f32 %v75
  %vm113 = vweird.f32 %v106
  %vm114 = vmor %vm112, %vm113
  %v115 = vsel %vm114, %v106, %v111
  %v116 = vmul.f32 %v48, %v85
  %v117 = vmul.f32 %v49, %v95
  %v118 = vmul.f32 %v50, %v105
  %v119 = vmul.f32 %v51, %v115
  %v121 = vperm.slane %v22, 0
  %v123 = vmul.f32 %v116, %v121
  %v124 = vmul.f32 %v117, %v121
  %v125 = vmul.f32 %v118, %v121
  %v126 = vmul.f32 %v119, %v121
  %v128 = vperm.slane %v23, 0
  %v130 = vadd.f32 %v123, %v128
  %v131 = vadd.f32 %v124, %v128
  %v132 = vadd.f32 %v125, %v128
  %v133 = vadd.f32 %v126, %v128
  %134 = vst.msk [vmem:[%s3] sm:$0xff] %vm24, %v130
  %135 = vst.msk [vmem:[%s3 + $0x8] sm:$0xff] %vm24, %v131
  %136 = vst.msk [vmem:[%s3 + $0x10] sm:$0xff] %vm24, %v132
  %137 = vst.msk [vmem:[%s3 + $0x18] sm:$0xff] %vm24, %v133
  // Predicated region
  $region14: #{m2d_forward.19} parent=0 // pred_check
    _
  $region15: #{m2d_forward.19} parent=0 // pred_check_branch
    %139 = sbr.rel (0) target = $region17
  $region16: #{m2d_forward.19} parent=0 // pred_region
    _
  $region17: #{m2d_forward.19} parent=0 // pred_fallthru
    _
  // Predicated region
  $region18: #{m2d_forward.19} parent=0 // pred_check
    _
  $region19: #{m2d_forward.19} parent=0 // pred_check_branch
    %141 = sbr.rel (0) target = $region21
  $region20: #{m2d_forward.19} parent=0 // pred_region
    _
  $region21: #{m2d_forward.19} parent=0 // pred_fallthru
    _

// kernel: m2d_forward.14
$region0: #{m2d_forward.14}
  #allocation0 [shape = 'u32[]', space=smem, size = 0x4, offset = 0x4, fixed_abs, tag = 'smem constant byte address 0x4 - core index']
  #allocation1 [shape = 'u32[72,128]{1,0:T(1,128)}', space=vmem, size = 0x9000, scoped, tag = 'internal scratch']
  %s0 = inlined_call_operand.vmem [shape: bf16[2,16,32], index: 0, kind: input, shape index: {}]
  %s1 = inlined_call_operand.vmem [shape: f32[1,32], index: 1, kind: input, shape index: {}]
  %s2 = inlined_call_operand.vmem [shape: f32[1,32], index: 2, kind: input, shape index: {}]
  %s3 = inlined_call_operand.vmem [shape: bf16[32,96], index: 3, kind: input, shape index: {}]
  %s4 = inlined_call_operand.vmem [shape: f32[1,96], index: 4, kind: input, shape index: {}]
  %s5 = inlined_call_operand.vmem [shape: bf16[32,32], index: 5, kind: input, shape index: {}]
  %s6 = inlined_call_operand.vmem [shape: f32[1,32], index: 6, kind: input, shape index: {}]
  %s7 = inlined_call_operand.vmem [shape: f32[1,32], index: 7, kind: input, shape index: {}]
  %s8 = inlined_call_operand.vmem [shape: f32[1,32], index: 8, kind: input, shape index: {}]
  %s9 = inlined_call_operand.vmem [shape: bf16[32,128], index: 9, kind: input, shape index: {}]
  %s10 = inlined_call_operand.vmem [shape: f32[1,128], index: 10, kind: input, shape index: {}]
  %s11 = inlined_call_operand.vmem [shape: bf16[128,32], index: 11, kind: input, shape index: {}]
  %s12 = inlined_call_operand.vmem [shape: f32[1,32], index: 12, kind: input, shape index: {}]
  %s13 = inlined_call_operand.vmem [shape: bf16[2,16,32], index: 13, kind: output, shape index: {}]
  %s14 = sld [smem:[#allocation0]]
  $region85: #{m2d_forward.14} parent=0
    _
  %s16 = ssub.s32 1, %s14
  %s17 = scalar_select 0, %s16, %s14
  loop: start=0, step=1, limit=4
  $region2: #{m2d_forward.14} parent=0 // loop_pre_header
    _
  $region3: #{m2d_forward.14} parent=0 // loop_header
    %s19 = sphi 0, %s23
    %p20 = scmp.ge.s32.totalorder %s19, 4
    %s29 = sphi 0, %s31
    %s32 = sphi 0, %s29
    %s33 = sphi 0, %s32
    %s49 = sphi 0, %s33
    %s53 = sphi 0, %s53
    %s55 = sphi 0, %s53
    %s56 = sphi 0, %s55
    %s70 = sphi 0, %s56
    %s74 = sphi 0, %s74
    %s76 = sphi 0, %s74
    %s77 = sphi 0, %s76
    %s91 = sphi 0, %s77
    %s95 = sphi 0, %s95
    %s97 = sphi 0, %s95
    %s98 = sphi 0, %s97
    %s112 = sphi 0, %s98
    %s116 = sphi 0, %s116
    %s118 = sphi 0, %s116
    %s119 = sphi 0, %s118
    %s133 = sphi 0, %s119
    %s137 = sphi 0, %s137
    %s139 = sphi 0, %s137
    %s140 = sphi 0, %s139
    %s154 = sphi 0, %s140
    %s158 = sphi 0, %s158
    %s160 = sphi 0, %s158
    %s161 = sphi 0, %s160
    %s175 = sphi 0, %s161
    %s179 = sphi 0, %s179
    %s181 = sphi 0, %s179
    %s182 = sphi 0, %s181
    %s196 = sphi 0, %s182
    %s200 = sphi 0, %s200
    %s202 = sphi 0, %s200
    %s203 = sphi 0, %s202
    %s217 = sphi 0, %s203
    %s221 = sphi 0, %s221
    %s223 = sphi 0, %s221
    %s224 = sphi 0, %s223
    %s238 = sphi 0, %s224
    %s242 = sphi 0, %s242
    %s244 = sphi 0, %s242
    %s245 = sphi 0, %s244
    %s259 = sphi 0, %s245
    %s263 = sphi 0, %s263
    %s265 = sphi 0, %s263
    %s266 = sphi 0, %s265
    %s280 = sphi 0, %s266
    %s284 = sphi 0, %s284
    %s286 = sphi 0, %s284
    %s287 = sphi 0, %s286
    %s301 = sphi 0, %s287
    %s307 = sphi 0, %s309
    %s310 = sphi 0, %s307
    %s311 = sphi 0, %s310
    %s327 = sphi 0, %s311
  $region4: #{m2d_forward.14} parent=0 // loop_header_branch
    %22 = sbr.rel (%p20) target = $region8
  $region5: #{m2d_forward.14} parent=0 // loop_body
    %s24 = ssub.s32 %s19, 1
    %s25 = ssub.s32 %s19, 2
    %s26 = sadd.s32 %s19, 1
    %s27 = ssub.s32 %s19, %s26
    %p28 = scmp.eq.s32.totalorder %s27, 0
    %s30 = sadd.s32 %s29, 1
    %s31 = scalar_select %p28, %s29, %s30
    %p34 = pneg %p28
    %p35 = scmp.eq.s32.totalorder %s19, 1
    %p36 = por %p34, %p35
    %p37 = scmp.ne.s32.totalorder %s29, %s32
    %p38 = scmp.eq.s32.totalorder %s19, 0
    %p39 = por %p37, %p38
    %p40 = scmp.ne.s32.totalorder %s29, %s32
    %p41 = scmp.eq.s32.totalorder %s24, 1
    %p42 = por %p40, %p41
    %p43 = scmp.ne.s32.totalorder %s32, %s33
    %p44 = scmp.eq.s32.totalorder %s24, 0
    %p45 = por %p43, %p44
    %p46 = scmp.ne.s32.totalorder %s32, %s33
    %p47 = scmp.eq.s32.totalorder %s25, 1
    %p48 = por %p46, %p47
    %p50 = scmp.ne.s32.totalorder %s33, %s49
    %p51 = scmp.eq.s32.totalorder %s25, 0
    %p52 = por %p50, %p51
    %s54 = sadd.s32 %s53, 1
    %p57 = scmp.eq.s32.totalorder %s19, 1
    %p58 = scmp.ne.s32.totalorder %s53, %s55
    %p59 = scmp.eq.s32.totalorder %s19, 0
    %p60 = por %p58, %p59
    %p61 = scmp.ne.s32.totalorder %s53, %s55
    %p62 = scmp.eq.s32.totalorder %s24, 1
    %p63 = por %p61, %p62
    %p64 = scmp.ne.s32.totalorder %s55, %s56
    %p65 = scmp.eq.s32.totalorder %s24, 0
    %p66 = por %p64, %p65
    %p67 = scmp.ne.s32.totalorder %s55, %s56
    %p68 = scmp.eq.s32.totalorder %s25, 1
    %p69 = por %p67, %p68
    %p71 = scmp.ne.s32.totalorder %s56, %s70
    %p72 = scmp.eq.s32.totalorder %s25, 0
    %p73 = por %p71, %p72
    %s75 = sadd.s32 %s74, 1
    %p78 = scmp.eq.s32.totalorder %s19, 1
    %p79 = scmp.ne.s32.totalorder %s74, %s76
    %p80 = scmp.eq.s32.totalorder %s19, 0
    %p81 = por %p79, %p80
    %p82 = scmp.ne.s32.totalorder %s74, %s76
    %p83 = scmp.eq.s32.totalorder %s24, 1
    %p84 = por %p82, %p83
    %p85 = scmp.ne.s32.totalorder %s76, %s77
    %p86 = scmp.eq.s32.totalorder %s24, 0
    %p87 = por %p85, %p86
    %p88 = scmp.ne.s32.totalorder %s76, %s77
    %p89 = scmp.eq.s32.totalorder %s25, 1
    %p90 = por %p88, %p89
    %p92 = scmp.ne.s32.totalorder %s77, %s91
    %p93 = scmp.eq.s32.totalorder %s25, 0
    %p94 = por %p92, %p93
    %s96 = sadd.s32 %s95, 1
    %p99 = scmp.eq.s32.totalorder %s19, 1
    %p100 = scmp.ne.s32.totalorder %s95, %s97
    %p101 = scmp.eq.s32.totalorder %s19, 0
    %p102 = por %p100, %p101
    %p103 = scmp.ne.s32.totalorder %s95, %s97
    %p104 = scmp.eq.s32.totalorder %s24, 1
    %p105 = por %p103, %p104
    %p106 = scmp.ne.s32.totalorder %s97, %s98
    %p107 = scmp.eq.s32.totalorder %s24, 0
    %p108 = por %p106, %p107
    %p109 = scmp.ne.s32.totalorder %s97, %s98
    %p110 = scmp.eq.s32.totalorder %s25, 1
    %p111 = por %p109, %p110
    %p113 = scmp.ne.s32.totalorder %s98, %s112
    %p114 = scmp.eq.s32.totalorder %s25, 0
    %p115 = por %p113, %p114
    %s117 = sadd.s32 %s116, 1
    %p120 = scmp.eq.s32.totalorder %s19, 1
    %p121 = scmp.ne.s32.totalorder %s116, %s118
    %p122 = scmp.eq.s32.totalorder %s19, 0
    %p123 = por %p121, %p122
    %p124 = scmp.ne.s32.totalorder %s116, %s118
    %p125 = scmp.eq.s32.totalorder %s24, 1
    %p126 = por %p124, %p125
    %p127 = scmp.ne.s32.totalorder %s118, %s119
    %p128 = scmp.eq.s32.totalorder %s24, 0
    %p129 = por %p127, %p128
    %p130 = scmp.ne.s32.totalorder %s118, %s119
    %p131 = scmp.eq.s32.totalorder %s25, 1
    %p132 = por %p130, %p131
    %p134 = scmp.ne.s32.totalorder %s119, %s133
    %p135 = scmp.eq.s32.totalorder %s25, 0
    %p136 = por %p134, %p135
    %s138 = sadd.s32 %s137, 1
    %p141 = scmp.eq.s32.totalorder %s19, 1
    %p142 = scmp.ne.s32.totalorder %s137, %s139
    %p143 = scmp.eq.s32.totalorder %s19, 0
    %p144 = por %p142, %p143
    %p145 = scmp.ne.s32.totalorder %s137, %s139
    %p146 = scmp.eq.s32.totalorder %s24, 1
    %p147 = por %p145, %p146
    %p148 = scmp.ne.s32.totalorder %s139, %s140
    %p149 = scmp.eq.s32.totalorder %s24, 0
    %p150 = por %p148, %p149
    %p151 = scmp.ne.s32.totalorder %s139, %s140
    %p152 = scmp.eq.s32.totalorder %s25, 1
    %p153 = por %p151, %p152
    %p155 = scmp.ne.s32.totalorder %s140, %s154
    %p156 = scmp.eq.s32.totalorder %s25, 0
    %p157 = por %p155, %p156
    %s159 = sadd.s32 %s158, 1
    %p162 = scmp.eq.s32.totalorder %s19, 1
    %p163 = scmp.ne.s32.totalorder %s158, %s160
    %p164 = scmp.eq.s32.totalorder %s19, 0
    %p165 = por %p163, %p164
    %p166 = scmp.ne.s32.totalorder %s158, %s160
    %p167 = scmp.eq.s32.totalorder %s24, 1
    %p168 = por %p166, %p167
    %p169 = scmp.ne.s32.totalorder %s160, %s161
    %p170 = scmp.eq.s32.totalorder %s24, 0
    %p171 = por %p169, %p170
    %p172 = scmp.ne.s32.totalorder %s160, %s161
    %p173 = scmp.eq.s32.totalorder %s25, 1
    %p174 = por %p172, %p173
    %p176 = scmp.ne.s32.totalorder %s161, %s175
    %p177 = scmp.eq.s32.totalorder %s25, 0
    %p178 = por %p176, %p177
    %s180 = sadd.s32 %s179, 1
    %p183 = scmp.eq.s32.totalorder %s19, 1
    %p184 = scmp.ne.s32.totalorder %s179, %s181
    %p185 = scmp.eq.s32.totalorder %s19, 0
    %p186 = por %p184, %p185
    %p187 = scmp.ne.s32.totalorder %s179, %s181
    %p188 = scmp.eq.s32.totalorder %s24, 1
    %p189 = por %p187, %p188
    %p190 = scmp.ne.s32.totalorder %s181, %s182
    %p191 = scmp.eq.s32.totalorder %s24, 0
    %p192 = por %p190, %p191
    %p193 = scmp.ne.s32.totalorder %s181, %s182
    %p194 = scmp.eq.s32.totalorder %s25, 1
    %p195 = por %p193, %p194
    %p197 = scmp.ne.s32.totalorder %s182, %s196
    %p198 = scmp.eq.s32.totalorder %s25, 0
    %p199 = por %p197, %p198
    %s201 = sadd.s32 %s200, 1
    %p204 = scmp.eq.s32.totalorder %s19, 1
    %p205 = scmp.ne.s32.totalorder %s200, %s202
    %p206 = scmp.eq.s32.totalorder %s19, 0
    %p207 = por %p205, %p206
    %p208 = scmp.ne.s32.totalorder %s200, %s202
    %p209 = scmp.eq.s32.totalorder %s24, 1
    %p210 = por %p208, %p209
    %p211 = scmp.ne.s32.totalorder %s202, %s203
    %p212 = scmp.eq.s32.totalorder %s24, 0
    %p213 = por %p211, %p212
    %p214 = scmp.ne.s32.totalorder %s202, %s203
    %p215 = scmp.eq.s32.totalorder %s25, 1
    %p216 = por %p214, %p215
    %p218 = scmp.ne.s32.totalorder %s203, %s217
    %p219 = scmp.eq.s32.totalorder %s25, 0
    %p220 = por %p218, %p219
    %s222 = sadd.s32 %s221, 1
    %p225 = scmp.eq.s32.totalorder %s19, 1
    %p226 = scmp.ne.s32.totalorder %s221, %s223
    %p227 = scmp.eq.s32.totalorder %s19, 0
    %p228 = por %p226, %p227
    %p229 = scmp.ne.s32.totalorder %s221, %s223
    %p230 = scmp.eq.s32.totalorder %s24, 1
    %p231 = por %p229, %p230
    %p232 = scmp.ne.s32.totalorder %s223, %s224
    %p233 = scmp.eq.s32.totalorder %s24, 0
    %p234 = por %p232, %p233
    %p235 = scmp.ne.s32.totalorder %s223, %s224
    %p236 = scmp.eq.s32.totalorder %s25, 1
    %p237 = por %p235, %p236
    %p239 = scmp.ne.s32.totalorder %s224, %s238
    %p240 = scmp.eq.s32.totalorder %s25, 0
    %p241 = por %p239, %p240
    %s243 = sadd.s32 %s242, 1
    %p246 = scmp.eq.s32.totalorder %s19, 1
    %p247 = scmp.ne.s32.totalorder %s242, %s244
    %p248 = scmp.eq.s32.totalorder %s19, 0
    %p249 = por %p247, %p248
    %p250 = scmp.ne.s32.totalorder %s242, %s244
    %p251 = scmp.eq.s32.totalorder %s24, 1
    %p252 = por %p250, %p251
    %p253 = scmp.ne.s32.totalorder %s244, %s245
    %p254 = scmp.eq.s32.totalorder %s24, 0
    %p255 = por %p253, %p254
    %p256 = scmp.ne.s32.totalorder %s244, %s245
    %p257 = scmp.eq.s32.totalorder %s25, 1
    %p258 = por %p256, %p257
    %p260 = scmp.ne.s32.totalorder %s245, %s259
    %p261 = scmp.eq.s32.totalorder %s25, 0
    %p262 = por %p260, %p261
    %s264 = sadd.s32 %s263, 1
    %p267 = scmp.eq.s32.totalorder %s19, 1
    %p268 = scmp.ne.s32.totalorder %s263, %s265
    %p269 = scmp.eq.s32.totalorder %s19, 0
    %p270 = por %p268, %p269
    %p271 = scmp.ne.s32.totalorder %s263, %s265
    %p272 = scmp.eq.s32.totalorder %s24, 1
    %p273 = por %p271, %p272
    %p274 = scmp.ne.s32.totalorder %s265, %s266
    %p275 = scmp.eq.s32.totalorder %s24, 0
    %p276 = por %p274, %p275
    %p277 = scmp.ne.s32.totalorder %s265, %s266
    %p278 = scmp.eq.s32.totalorder %s25, 1
    %p279 = por %p277, %p278
    %p281 = scmp.ne.s32.totalorder %s266, %s280
    %p282 = scmp.eq.s32.totalorder %s25, 0
    %p283 = por %p281, %p282
    %s285 = sadd.s32 %s284, 1
    %p288 = scmp.eq.s32.totalorder %s19, 1
    %p289 = scmp.ne.s32.totalorder %s284, %s286
    %p290 = scmp.eq.s32.totalorder %s19, 0
    %p291 = por %p289, %p290
    %p292 = scmp.ne.s32.totalorder %s284, %s286
    %p293 = scmp.eq.s32.totalorder %s24, 1
    %p294 = por %p292, %p293
    %p295 = scmp.ne.s32.totalorder %s286, %s287
    %p296 = scmp.eq.s32.totalorder %s24, 0
    %p297 = por %p295, %p296
    %p298 = scmp.ne.s32.totalorder %s286, %s287
    %p299 = scmp.eq.s32.totalorder %s25, 1
    %p300 = por %p298, %p299
    %p302 = scmp.ne.s32.totalorder %s287, %s301
    %p303 = scmp.eq.s32.totalorder %s25, 0
    %p304 = por %p302, %p303
    %s305 = ssub.s32 %s19, %s26
    %p306 = scmp.eq.s32.totalorder %s305, 0
    %s308 = sadd.s32 %s307, 1
    %s309 = scalar_select %p306, %s307, %s308
    %p312 = pneg %p306
    %p313 = scmp.eq.s32.totalorder %s19, 1
    %p314 = por %p312, %p313
    %p315 = scmp.ne.s32.totalorder %s307, %s310
    %p316 = scmp.eq.s32.totalorder %s19, 0
    %p317 = por %p315, %p316
    %p318 = scmp.ne.s32.totalorder %s307, %s310
    %p319 = scmp.eq.s32.totalorder %s24, 1
    %p320 = por %p318, %p319
    %p321 = scmp.ne.s32.totalorder %s310, %s311
    %p322 = scmp.eq.s32.totalorder %s24, 0
    %p323 = por %p321, %p322
    %p324 = scmp.ne.s32.totalorder %s310, %s311
    %p325 = scmp.eq.s32.totalorder %s25, 1
    %p326 = por %p324, %p325
    %p328 = scmp.ne.s32.totalorder %s311, %s327
    %p329 = scmp.eq.s32.totalorder %s25, 0
    %p330 = por %p328, %p329
    %p331 = scmp.le.s32.totalorder 1, %s19
    %p332 = scmp.lt.s32.totalorder %s19, 3
    %p333 = pnand %p331, %p332
    %p334 = pneg %p333
    // Predicated region
    $region9: #{m2d_forward.14} parent=5 // pred_check
      _
    $region10: #{m2d_forward.14} parent=5 // pred_check_branch
      %336 = sbr.rel (%p333) target = $region12
    $region11: #{m2d_forward.14} parent=5 // pred_region
      %s337 = ssub.s32 %s19, 1
      // Predicated region
      $region13: #{m2d_forward.14} parent=11 // pred_check
        %p338 = pneg %p66
      $region14: #{m2d_forward.14} parent=11 // pred_check_branch
        %340 = sbr.rel (%p338) target = $region16
      $region15: #{m2d_forward.14} parent=11 // pred_region
        _
      $region16: #{m2d_forward.14} parent=11 // pred_fallthru
        _
      // Predicated region
      $region17: #{m2d_forward.14} parent=11 // pred_check
        %p341 = pneg %p87
      $region18: #{m2d_forward.14} parent=11 // pred_check_branch
        %343 = sbr.rel (%p341) target = $region20
      $region19: #{m2d_forward.14} parent=11 // pred_region
        _
      $region20: #{m2d_forward.14} parent=11 // pred_fallthru
        _
      // Predicated region
      $region21: #{m2d_forward.14} parent=11 // pred_check
        %p344 = pneg %p108
      $region22: #{m2d_forward.14} parent=11 // pred_check_branch
        %346 = sbr.rel (%p344) target = $region24
      $region23: #{m2d_forward.14} parent=11 // pred_region
        _
      $region24: #{m2d_forward.14} parent=11 // pred_fallthru
        _
      // Predicated region
      $region25: #{m2d_forward.14} parent=11 // pred_check
        %p347 = pneg %p129
      $region26: #{m2d_forward.14} parent=11 // pred_check_branch
        %349 = sbr.rel (%p347) target = $region28
      $region27: #{m2d_forward.14} parent=11 // pred_region
        _
      $region28: #{m2d_forward.14} parent=11 // pred_fallthru
        _
      // Predicated region
      $region29: #{m2d_forward.14} parent=11 // pred_check
        %p350 = pneg %p150
      $region30: #{m2d_forward.14} parent=11 // pred_check_branch
        %352 = sbr.rel (%p350) target = $region32
      $region31: #{m2d_forward.14} parent=11 // pred_region
        _
      $region32: #{m2d_forward.14} parent=11 // pred_fallthru
        _
      // Predicated region
      $region33: #{m2d_forward.14} parent=11 // pred_check
        %p353 = pneg %p171
      $region34: #{m2d_forward.14} parent=11 // pred_check_branch
        %355 = sbr.rel (%p353) target = $region36
      $region35: #{m2d_forward.14} parent=11 // pred_region
        _
      $region36: #{m2d_forward.14} parent=11 // pred_fallthru
        _
      // Predicated region
      $region37: #{m2d_forward.14} parent=11 // pred_check
        %p356 = pneg %p192
      $region38: #{m2d_forward.14} parent=11 // pred_check_branch
        %358 = sbr.rel (%p356) target = $region40
      $region39: #{m2d_forward.14} parent=11 // pred_region
        _
      $region40: #{m2d_forward.14} parent=11 // pred_fallthru
        _
      // Predicated region
      $region41: #{m2d_forward.14} parent=11 // pred_check
        %p359 = pneg %p213
      $region42: #{m2d_forward.14} parent=11 // pred_check_branch
        %361 = sbr.rel (%p359) target = $region44
      $region43: #{m2d_forward.14} parent=11 // pred_region
        _
      $region44: #{m2d_forward.14} parent=11 // pred_fallthru
        _
      // Predicated region
      $region45: #{m2d_forward.14} parent=11 // pred_check
        %p362 = pneg %p234
      $region46: #{m2d_forward.14} parent=11 // pred_check_branch
        %364 = sbr.rel (%p362) target = $region48
      $region47: #{m2d_forward.14} parent=11 // pred_region
        _
      $region48: #{m2d_forward.14} parent=11 // pred_fallthru
        _
      // Predicated region
      $region49: #{m2d_forward.14} parent=11 // pred_check
        %p365 = pneg %p255
      $region50: #{m2d_forward.14} parent=11 // pred_check_branch
        %367 = sbr.rel (%p365) target = $region52
      $region51: #{m2d_forward.14} parent=11 // pred_region
        _
      $region52: #{m2d_forward.14} parent=11 // pred_fallthru
        _
      // Predicated region
      $region53: #{m2d_forward.14} parent=11 // pred_check
        %p368 = pneg %p276
      $region54: #{m2d_forward.14} parent=11 // pred_check_branch
        %370 = sbr.rel (%p368) target = $region56
      $region55: #{m2d_forward.14} parent=11 // pred_region
        _
      $region56: #{m2d_forward.14} parent=11 // pred_fallthru
        _
      // Predicated region
      $region57: #{m2d_forward.14} parent=11 // pred_check
        %p371 = pneg %p297
      $region58: #{m2d_forward.14} parent=11 // pred_check_branch
        %373 = sbr.rel (%p371) target = $region60
      $region59: #{m2d_forward.14} parent=11 // pred_region
        _
      $region60: #{m2d_forward.14} parent=11 // pred_fallthru
        _
    $region12: #{m2d_forward.14} parent=5 // pred_fallthru
      _
    %p374 = scmp.lt.s32.totalorder %s19, 2
    // Predicated region
    $region61: #{m2d_forward.14} parent=5 // pred_check
      %p375 = pneg %p374
    $region62: #{m2d_forward.14} parent=5 // pred_check_branch
      %377 = sbr.rel (%p375) target = $region64
    $region63: #{m2d_forward.14} parent=5 // pred_region
      // Predicated region
      $region65: #{m2d_forward.14} parent=63 // pred_check
        %p378 = pneg %p39
      $region66: #{m2d_forward.14} parent=63 // pred_check_branch
        %380 = sbr.rel (%p378) target = $region68
      $region67: #{m2d_forward.14} parent=63 // pred_region
        %p381 = scmp.lt.s32.totalorder %s19, 1
        %s382 = scalar_select %p381, %s19, 1
        %s383 = smul.addr %s382, 2
        %s384 = smul.addr %s383, 4
        %s385 = scalar_lea.vmem %s0, %s384
      $region68: #{m2d_forward.14} parent=63 // pred_fallthru
        _
    $region64: #{m2d_forward.14} parent=5 // pred_fallthru
      _
    %p386 = scmp.le.s32.totalorder 1, %s19
    %p387 = scmp.lt.s32.totalorder %s19, 3
    %p388 = pnand %p386, %p387
    %p389 = pneg %p388
    // Predicated region
    $region69: #{m2d_forward.14} parent=5 // pred_check
      _
    $region70: #{m2d_forward.14} parent=5 // pred_check_branch
      %391 = sbr.rel (%p388) target = $region72
    $region71: #{m2d_forward.14} parent=5 // pred_region
      %s392 = ssub.s32 %s19, 1
      %p393 = scmp.lt.s32.totalorder %s24, 1
      %s394 = scalar_select %p393, %s24, 1
      %s395 = smul.addr %s394, 2
      %s396 = smul.addr %s395, 4
      %s397 = scalar_lea.vmem %s0, %s396
      %p398 = pneg %p45
      %p399 = pneg %p42
      %p400 = pneg %p66
      %p401 = pneg %p63
      %p402 = pneg %p87
      %p403 = pneg %p84
      %p404 = pneg %p108
      %p405 = pneg %p105
      %p406 = pneg %p129
      %p407 = pneg %p126
      %p408 = pneg %p150
      %p409 = pneg %p147
      %p410 = pneg %p171
      %p411 = pneg %p168
      %p412 = pneg %p192
      %p413 = pneg %p189
      %p414 = pneg %p213
      %p415 = pneg %p210
      %p416 = pneg %p234
      %p417 = pneg %p231
      %p418 = pneg %p255
      %p419 = pneg %p252
      %p420 = pneg %p276
      %p421 = pneg %p273
      %p422 = pneg %p297
      %p423 = pneg %p294
      %p424 = pneg %p323
      %p425 = pneg %p320
      %p426 = scmp.lt.s32.totalorder %s24, 1
      %s427 = scalar_select %p426, %s24, 1
      %s428 = smul.addr %s427, 2
      %s429 = smul.addr %s428, 4
      %s430 = scalar_lea.vmem %s13, %s429
      %p431 = scmp.lt.s32.totalorder %s24, 1
      %s432 = scalar_select %p431, %s24, 1
      %s433 = smul.addr %s432, 2
      %s434 = smul.addr %s433, 4
      %s435 = scalar_lea.vmem %s0, %s434
      %p436 = scmp.lt.s32.totalorder %s24, 1
      %s437 = scalar_select %p436, %s24, 1
      %s438 = smul.addr %s437, 2
      %s439 = smul.addr %s438, 4
      %s440 = scalar_lea.vmem %s13, %s439
      %v442 = vld [vmem:[%s435] sm:$0xf]
      %v443 = vld [vmem:[%s435 + $0x4] sm:$0xf]
      %v444 = vunpack.c.l.bf16 %v442
      %v445 = vunpack.c.l.bf16 %v443
      %v446 = vld [vmem:[%s1] sm:$0x1]
      %v447 = vld [vmem:[%s2] sm:$0x1]
      %vm448 = vcmask 261120
      %v449 = vsel %vm448, %v444, 0.0
      %450 = vadd.xlane.f32.xlu0 %v449
      %v451 = vpop.xlane.xlu0 %450
      %v452 = vsel %vm448, %v445, 0.0
      %453 = vadd.xlane.f32.xlu0 %v452
      %v454 = vpop.xlane.xlu0 %453
      %v455 = vrcp.pop 32.0
      %v456 = vmul.f32 32.0, %v455
      %v457 = vsub.f32 1.0, %v456
      %v458 = vmul.f32 %v455, %v457
      %v459 = vadd.f32 %v455, %v458
      %vm460 = vweird.f32 %v455
      %v461 = vsel %vm460, %v455, %v459
      %v462 = vmul.f32 %v451, %v461
      %v463 = vmul.f32 %v454, %v461
      %v464 = vsub.f32 %v444, %v462
      %v465 = vsub.f32 %v445, %v463
      %v466 = vmul.f32 %v464, %v464
      %v467 = vmul.f32 %v465, %v465
      %v468 = vsel %vm448, %v466, 0.0
      %469 = vadd.xlane.f32.xlu0 %v468
      %v470 = vpop.xlane.xlu0 %469
      %v471 = vsel %vm448, %v467, 0.0
      %472 = vadd.xlane.f32.xlu0 %v471
      %v473 = vpop.xlane.xlu0 %472
      %v474 = vmul.f32 %v470, %v461
      %v475 = vmul.f32 %v473, %v461
      %v476 = vadd.f32 %v474, 1e-05
      %v477 = vadd.f32 %v475, 1e-05
      %v478 = vrsqrt.pop %v476
      %v479 = vmul.f32 %v478, %v476
      %v480 = vmul.f32 %v479, %v478
      %v481 = vmul.f32 0.5, %v480
      %v482 = vsub.f32 1.5, %v481
      %v483 = vmul.f32 %v478, %v482
      %vm484 = vweird.f32 %v476
      %vm485 = vweird.f32 %v478
      %vm486 = vmor %vm484, %vm485
      %v487 = vsel %vm486, %v478, %v483
      %v488 = vrsqrt.pop %v477
      %v489 = vmul.f32 %v488, %v477
      %v490 = vmul.f32 %v489, %v488
      %v491 = vmul.f32 0.5, %v490
      %v492 = vsub.f32 1.5, %v491
      %v493 = vmul.f32 %v488, %v492
      %vm494 = vweird.f32 %v477
      %vm495 = vweird.f32 %v488
      %vm496 = vmor %vm494, %vm495
      %v497 = vsel %vm496, %v488, %v493
      %v498 = vmul.f32 %v464, %v487
      %v499 = vmul.f32 %v465, %v497
      %v501 = vperm.slane %v446, 0
      %v503 = vmul.f32 %v498, %v501
      %v504 = vmul.f32 %v499, %v501
      %v506 = vperm.slane %v447, 0
      %v508 = vadd.f32 %v503, %v506
      %v509 = vadd.f32 %v504, %v506
      %v510 = vpack.c.bf16 %v509, %v508
      %v511 = vld [vmem:[%s3] sm:$0xf]
      %v512 = vld [vmem:[%s3 + $0x4] sm:$0xf]
      %v513 = vld [vmem:[%s3 + $0x8] sm:$0xf]
      %v514 = vld [vmem:[%s3 + $0xc] sm:$0xf]
      %v515 = vld [vmem:[%s4] sm:$0x1]
      %v517 = vperm.slane %v515, 0
      %v523 = vunpack.c.l.b16 %v511
      %v524 = vunpack.c.l.b16 %v512
      %v525 = vunpack.c.l.b16 %v513
      %v526 = vunpack.c.l.b16 %v514
      %v527 = vpack.c.b16 %v524, %v523
      %v528 = vpack.c.b16 %v526, %v525
      %v532 = vsel %vm448, %v510, 0
      %534 = vmatpush.bf16.msra.mxu0 0
      %535 = vmatpush.bf16.msra.mxu0 0
      %536 = vmatpush.bf16.msra.mxu0 0
      %537 = vmatpush.bf16.msra.mxu0 0
      %538 = vmatpush.bf16.msra.mxu0 0
      %539 = vmatpush.bf16.msra.mxu0 0
      %540 = vmatpush.bf16.msra.mxu0 %v528
      %541 = vmatpush.bf16.msra.mxu0 %v527
      %542 = vmatmul.bf16.gmra.mxu0 %v532
      %v543 = vpop.f32.mrf.mxu0
      %v544 = vadd.f32 %v517, %v543
      %v545 = vpop.f32.mrf.mxu0
      %v546 = vadd.f32 %v517, %v545
      %547 = vdwg.mxu0
      %v548 = vmul.f32 %v544, 0.35355338
      %v549 = vmul.f32 %v546, 0.35355338
      %v550 = vpack.c.bf16 %v548, %v548
      %v551 = vpack.c.bf16 %v549, %v549
      %v552 = vpack.c.bf16 %v544, %v544
      %v553 = vpack.c.bf16 %v546, %v546
      %v554 = vlaneseq
      %v555 = vand.u32 %v554, 127
      %vm556 = vcmp.lt.s32.totalorder %v555, 5
      %v557 = vsel %vm556, 0.0, -1e+30
      %v560 = vunpack.c.l.b16 %v550
      %v561 = vunpack.c.l.b16 %v551
      %v562 = vpack.c.b16 %v561, %v560
      %v565 = vunpack.c.l.b16 %v552
      %v566 = vunpack.c.l.b16 %v553
      %v567 = vpack.c.b16 %v566, %v565
      %568 = vrot.lane.b32.xlu0 %v567, 96
      %v569 = vpop.permute.xlu0 %568
      %vm570 = vcmask 64512
      %v572 = vsel %vm570, %v562, 0
      %v575 = vsel %vm570, %v569, 0
      %577 = vmatpush.bf16.xpose.msra.mxu0 0
      %578 = vmatpush.bf16.xpose.msra.mxu0 0
      %579 = vmatpush.bf16.xpose.msra.mxu0 0
      %580 = vmatpush.bf16.xpose.msra.mxu0 0
      %581 = vmatpush.bf16.xpose.msra.mxu0 0
      %582 = vmatpush.bf16.xpose.msra.mxu0 0
      %583 = vmatpush.bf16.xpose.msra.mxu0 0
      %584 = vmatpush.bf16.xpose.msra.mxu0 %v575
      %585 = vmatmul.bf16.gmra.mxu0 %v572
      %v586 = vpop.f32.mrf.mxu0
      %v587 = vadd.f32 %v557, %v586
      %v588 = vpop.f32.mrf.mxu0
      %v589 = vadd.f32 %v557, %v588
      %590 = vdwg.mxu0
      %vm591 = vcmask 130048
      %v592 = vsel %vm591, %v587, -inf
      %593 = vmax.xlane.f32.xlu0 %v592
      %v594 = vpop.xlane.xlu0 %593
      %v595 = vsel %vm591, %v589, -inf
      %596 = vmax.xlane.f32.xlu0 %v595
      %v597 = vpop.xlane.xlu0 %596
      %v598 = vsub.f32 %v587, %v594
      %v599 = vsub.f32 %v589, %v597
      %v600 = vmul.f32 %v598, 1.442695
      %v601 = vpow.pop %v600
      %v602 = vmul.f32 %v599, 1.442695
      %v603 = vpow.pop %v602
      %v604 = vsel %vm591, %v601, 0.0
      %605 = vadd.xlane.f32.xlu0 %v604
      %v606 = vpop.xlane.xlu0 %605
      %v607 = vsel %vm591, %v603, 0.0
      %608 = vadd.xlane.f32.xlu0 %v607
      %v609 = vpop.xlane.xlu0 %608
      %v610 = vrcp.pop %v606
      %v611 = vrcp.pop %v609
      %v612 = vmul.f32 %v601, %v610
      %v613 = vmul.f32 %v603, %v611
      %v614 = vpack.c.bf16 %v613, %v612
      %615 = vrot.lane.b32.xlu0 %v567, 64
      %v616 = vpop.permute.xlu0 %615
      %v619 = vsel %vm591, %v614, 0
      %621 = vmatpush.bf16.msra.mxu0 0
      %622 = vmatpush.bf16.msra.mxu0 0
      %623 = vmatpush.bf16.msra.mxu0 0
      %624 = vmatpush.bf16.msra.mxu0 0
      %625 = vmatpush.bf16.msra.mxu0 0
      %626 = vmatpush.bf16.msra.mxu0 0
      %627 = vmatpush.bf16.msra.mxu0 0
      %628 = vmatpush.bf16.msra.mxu0 %v616
      %629 = vmatmul.bf16.gmra.mxu0 %v619
      %v630 = vpop.f32.mrf.mxu0
      %v631 = vadd.f32 0.0, %v630
      %v632 = vpop.f32.mrf.mxu0
      %v633 = vadd.f32 0.0, %v632
      %634 = vdwg.mxu0
      %635 = vrot.lane.b32.xlu0 %v562, 120
      %v636 = vpop.permute.xlu0 %635
      %637 = vrot.lane.b32.xlu0 %v567, 88
      %v638 = vpop.permute.xlu0 %637
      %v640 = vsel %vm570, %v636, 0
      %v643 = vsel %vm570, %v638, 0
      %645 = vmatpush.bf16.xpose.msra.mxu0 0
      %646 = vmatpush.bf16.xpose.msra.mxu0 0
      %647 = vmatpush.bf16.xpose.msra.mxu0 0
      %648 = vmatpush.bf16.xpose.msra.mxu0 0
      %649 = vmatpush.bf16.xpose.msra.mxu0 0
      %650 = vmatpush.bf16.xpose.msra.mxu0 0
      %651 = vmatpush.bf16.xpose.msra.mxu0 0
      %652 = vmatpush.bf16.xpose.msra.mxu0 %v643
      %653 = vmatmul.bf16.gmra.mxu0 %v640
      %v654 = vpop.f32.mrf.mxu0
      %v655 = vadd.f32 %v557, %v654
      %v656 = vpop.f32.mrf.mxu0
      %v657 = vadd.f32 %v557, %v656
      %658 = vdwg.mxu0
      %v659 = vsel %vm591, %v655, -inf
      %660 = vmax.xlane.f32.xlu0 %v659
      %v661 = vpop.xlane.xlu0 %660
      %v662 = vsel %vm591, %v657, -inf
      %663 = vmax.xlane.f32.xlu0 %v662
      %v664 = vpop.xlane.xlu0 %663
      %v665 = vsub.f32 %v655, %v661
      %v666 = vsub.f32 %v657, %v664
      %v667 = vmul.f32 %v665, 1.442695
      %v668 = vpow.pop %v667
      %v669 = vmul.f32 %v666, 1.442695
      %v670 = vpow.pop %v669
      %v671 = vsel %vm591, %v668, 0.0
      %672 = vadd.xlane.f32.xlu0 %v671
      %v673 = vpop.xlane.xlu0 %672
      %v674 = vsel %vm591, %v670, 0.0
      %675 = vadd.xlane.f32.xlu0 %v674
      %v676 = vpop.xlane.xlu0 %675
      %v677 = vrcp.pop %v673
      %v678 = vrcp.pop %v676
      %v679 = vmul.f32 %v668, %v677
      %v680 = vmul.f32 %v670, %v678
      %v681 = vpack.c.bf16 %v680, %v679
      %682 = vrot.lane.b32.xlu0 %v567, 56
      %v683 = vpop.permute.xlu0 %682
      %v686 = vsel %vm591, %v681, 0
      %688 = vmatpush.bf16.msra.mxu0 0
      %689 = vmatpush.bf16.msra.mxu0 0
      %690 = vmatpush.bf16.msra.mxu0 0
      %691 = vmatpush.bf16.msra.mxu0 0
      %692 = vmatpush.bf16.msra.mxu0 0
      %693 = vmatpush.bf16.msra.mxu0 0
      %694 = vmatpush.bf16.msra.mxu0 0
      %695 = vmatpush.bf16.msra.mxu0 %v683
      %696 = vmatmul.bf16.gmra.mxu0 %v686
      %v697 = vpop.f32.mrf.mxu0
      %v698 = vadd.f32 0.0, %v697
      %v699 = vpop.f32.mrf.mxu0
      %v700 = vadd.f32 0.0, %v699
      %701 = vdwg.mxu0
      %702 = vrot.lane.b32.xlu0 %v562, 112
      %v703 = vpop.permute.xlu0 %702
      %704 = vrot.lane.b32.xlu0 %v567, 80
      %v705 = vpop.permute.xlu0 %704
      %v707 = vsel %vm570, %v703, 0
      %v710 = vsel %vm570, %v705, 0
      %712 = vmatpush.bf16.xpose.msra.mxu0 0
      %713 = vmatpush.bf16.xpose.msra.mxu0 0
      %714 = vmatpush.bf16.xpose.msra.mxu0 0
      %715 = vmatpush.bf16.xpose.msra.mxu0 0
      %716 = vmatpush.bf16.xpose.msra.mxu0 0
      %717 = vmatpush.bf16.xpose.msra.mxu0 0
      %718 = vmatpush.bf16.xpose.msra.mxu0 0
      %719 = vmatpush.bf16.xpose.msra.mxu0 %v710
      %720 = vmatmul.bf16.gmra.mxu0 %v707
      %v721 = vpop.f32.mrf.mxu0
      %v722 = vadd.f32 %v557, %v721
      %v723 = vpop.f32.mrf.mxu0
      %v724 = vadd.f32 %v557, %v723
      %725 = vdwg.mxu0
      %v726 = vsel %vm591, %v722, -inf
      %727 = vmax.xlane.f32.xlu0 %v726
      %v728 = vpop.xlane.xlu0 %727
      %v729 = vsel %vm591, %v724, -inf
      %730 = vmax.xlane.f32.xlu0 %v729
      %v731 = vpop.xlane.xlu0 %730
      %v732 = vsub.f32 %v722, %v728
      %v733 = vsub.f32 %v724, %v731
      %v734 = vmul.f32 %v732, 1.442695
      %v735 = vpow.pop %v734
      %v736 = vmul.f32 %v733, 1.442695
      %v737 = vpow.pop %v736
      %v738 = vsel %vm591, %v735, 0.0
      %739 = vadd.xlane.f32.xlu0 %v738
      %v740 = vpop.xlane.xlu0 %739
      %v741 = vsel %vm591, %v737, 0.0
      %742 = vadd.xlane.f32.xlu0 %v741
      %v743 = vpop.xlane.xlu0 %742
      %v744 = vrcp.pop %v740
      %v745 = vrcp.pop %v743
      %v746 = vmul.f32 %v735, %v744
      %v747 = vmul.f32 %v737, %v745
      %v748 = vpack.c.bf16 %v747, %v746
      %749 = vrot.lane.b32.xlu0 %v567, 48
      %v750 = vpop.permute.xlu0 %749
      %v753 = vsel %vm591, %v748, 0
      %755 = vmatpush.bf16.msra.mxu0 0
      %756 = vmatpush.bf16.msra.mxu0 0
      %757 = vmatpush.bf16.msra.mxu0 0
      %758 = vmatpush.bf16.msra.mxu0 0
      %759 = vmatpush.bf16.msra.mxu0 0
      %760 = vmatpush.bf16.msra.mxu0 0
      %761 = vmatpush.bf16.msra.mxu0 0
      %762 = vmatpush.bf16.msra.mxu0 %v750
      %763 = vmatmul.bf16.gmra.mxu0 %v753
      %v764 = vpop.f32.mrf.mxu0
      %v765 = vadd.f32 0.0, %v764
      %v766 = vpop.f32.mrf.mxu0
      %v767 = vadd.f32 0.0, %v766
      %768 = vdwg.mxu0
      %769 = vrot.lane.b32.xlu0 %v562, 104
      %v770 = vpop.permute.xlu0 %769
      %771 = vrot.lane.b32.xlu0 %v567, 72
      %v772 = vpop.permute.xlu0 %771
      %v774 = vsel %vm570, %v770, 0
      %v777 = vsel %vm570, %v772, 0
      %779 = vmatpush.bf16.xpose.msra.mxu0 0
      %780 = vmatpush.bf16.xpose.msra.mxu0 0
      %781 = vmatpush.bf16.xpose.msra.mxu0 0
      %782 = vmatpush.bf16.xpose.msra.mxu0 0
      %783 = vmatpush.bf16.xpose.msra.mxu0 0
      %784 = vmatpush.bf16.xpose.msra.mxu0 0
      %785 = vmatpush.bf16.xpose.msra.mxu0 0
      %786 = vmatpush.bf16.xpose.msra.mxu0 %v777
      %787 = vmatmul.bf16.gmra.mxu0 %v774
      %v788 = vpop.f32.mrf.mxu0
      %v789 = vadd.f32 %v557, %v788
      %v790 = vpop.f32.mrf.mxu0
      %v791 = vadd.f32 %v557, %v790
      %792 = vdwg.mxu0
      %v793 = vsel %vm591, %v789, -inf
      %794 = vmax.xlane.f32.xlu0 %v793
      %v795 = vpop.xlane.xlu0 %794
      %v796 = vsel %vm591, %v791, -inf
      %797 = vmax.xlane.f32.xlu0 %v796
      %v798 = vpop.xlane.xlu0 %797
      %v799 = vsub.f32 %v789, %v795
      %v800 = vsub.f32 %v791, %v798
      %v801 = vmul.f32 %v799, 1.442695
      %v802 = vpow.pop %v801
      %v803 = vmul.f32 %v800, 1.442695
      %v804 = vpow.pop %v803
      %v805 = vsel %vm591, %v802, 0.0
      %806 = vadd.xlane.f32.xlu0 %v805
      %v807 = vpop.xlane.xlu0 %806
      %v808 = vsel %vm591, %v804, 0.0
      %809 = vadd.xlane.f32.xlu0 %v808
      %v810 = vpop.xlane.xlu0 %809
      %v811 = vrcp.pop %v807
      %v812 = vrcp.pop %v810
      %v813 = vmul.f32 %v802, %v811
      %v814 = vmul.f32 %v804, %v812
      %v815 = vpack.c.bf16 %v814, %v813
      %816 = vrot.lane.b32.xlu0 %v567, 40
      %v817 = vpop.permute.xlu0 %816
      %v820 = vsel %vm591, %v815, 0
      %822 = vmatpush.bf16.msra.mxu0 0
      %823 = vmatpush.bf16.msra.mxu0 0
      %824 = vmatpush.bf16.msra.mxu0 0
      %825 = vmatpush.bf16.msra.mxu0 0
      %826 = vmatpush.bf16.msra.mxu0 0
      %827 = vmatpush.bf16.msra.mxu0 0
      %828 = vmatpush.bf16.msra.mxu0 0
      %829 = vmatpush.bf16.msra.mxu0 %v817
      %830 = vmatmul.bf16.gmra.mxu0 %v820
      %v831 = vpop.f32.mrf.mxu0
      %v832 = vadd.f32 0.0, %v831
      %v833 = vpop.f32.mrf.mxu0
      %v834 = vadd.f32 0.0, %v833
      %835 = vdwg.mxu0
      %838 = vrot.lane.b32.xlu0 %v698, 8
      %v839 = vpop.permute.xlu0 %838
      %840 = vrot.lane.b32.xlu0 %v700, 8
      %v841 = vpop.permute.xlu0 %840
      %846 = vrot.lane.b32.xlu0 %v765, 16
      %v847 = vpop.permute.xlu0 %846
      %848 = vrot.lane.b32.xlu0 %v767, 16
      %v849 = vpop.permute.xlu0 %848
      %854 = vrot.lane.b32.xlu0 %v832, 24
      %v855 = vpop.permute.xlu0 %854
      %856 = vrot.lane.b32.xlu0 %v834, 24
      %v857 = vpop.permute.xlu0 %856
      %v860 = vsel %vm570, %v631, %v839
      %v861 = vsel %vm570, %v633, %v841
      %v862 = vsel %vm591, %v860, %v847
      %v863 = vsel %vm591, %v861, %v849
      %vm864 = vcmask 195584
      %v865 = vsel %vm864, %v862, %v855
      %v866 = vsel %vm864, %v863, %v857
      %v867 = vpack.c.bf16 %v866, %v865
      %v868 = vld [vmem:[%s5] sm:$0xf]
      %v869 = vld [vmem:[%s5 + $0x4] sm:$0xf]
      %v870 = vld [vmem:[%s5 + $0x8] sm:$0xf]
      %v871 = vld [vmem:[%s5 + $0xc] sm:$0xf]
      %v876 = vunpack.c.l.b16 %v868
      %v877 = vunpack.c.l.b16 %v869
      %v878 = vunpack.c.l.b16 %v870
      %v879 = vunpack.c.l.b16 %v871
      %v880 = vpack.c.b16 %v877, %v876
      %v881 = vpack.c.b16 %v879, %v878
      %v885 = vsel %vm448, %v867, 0
      %887 = vmatpush.bf16.msra.mxu0 0
      %888 = vmatpush.bf16.msra.mxu0 0
      %889 = vmatpush.bf16.msra.mxu0 0
      %890 = vmatpush.bf16.msra.mxu0 0
      %891 = vmatpush.bf16.msra.mxu0 0
      %892 = vmatpush.bf16.msra.mxu0 0
      %893 = vmatpush.bf16.msra.mxu0 %v881
      %894 = vmatpush.bf16.msra.mxu0 %v880
      %895 = vmatmul.bf16.gmra.mxu0 %v885
      %v896 = vpop.f32.mrf.mxu0
      %v897 = vadd.f32 0.0, %v896
      %v898 = vpop.f32.mrf.mxu0
      %v899 = vadd.f32 0.0, %v898
      %900 = vdwg.mxu0
      %v901 = vadd.f32 %v444, %v897
      %v902 = vadd.f32 %v445, %v899
      %v903 = vld [vmem:[%s6] sm:$0x1]
      %v905 = vperm.slane %v903, 0
      %v907 = vadd.f32 %v901, %v905
      %v908 = vadd.f32 %v902, %v905
      %v909 = vld [vmem:[%s7] sm:$0x1]
      %v910 = vld [vmem:[%s8] sm:$0x1]
      %v911 = vsel %vm448, %v907, 0.0
      %912 = vadd.xlane.f32.xlu0 %v911
      %v913 = vpop.xlane.xlu0 %912
      %v914 = vsel %vm448, %v908, 0.0
      %915 = vadd.xlane.f32.xlu0 %v914
      %v916 = vpop.xlane.xlu0 %915
      %v917 = vmul.f32 %v913, %v461
      %v918 = vmul.f32 %v916, %v461
      %v919 = vsub.f32 %v907, %v917
      %v920 = vsub.f32 %v908, %v918
      %v921 = vmul.f32 %v919, %v919
      %v922 = vmul.f32 %v920, %v920
      %v923 = vsel %vm448, %v921, 0.0
      %924 = vadd.xlane.f32.xlu0 %v923
      %v925 = vpop.xlane.xlu0 %924
      %v926 = vsel %vm448, %v922, 0.0
      %927 = vadd.xlane.f32.xlu0 %v926
      %v928 = vpop.xlane.xlu0 %927
      %v929 = vmul.f32 %v925, %v461
      %v930 = vmul.f32 %v928, %v461
      %v931 = vadd.f32 %v929, 1e-05
      %v932 = vadd.f32 %v930, 1e-05
      %v933 = vrsqrt.pop %v931
      %v934 = vmul.f32 %v933, %v931
      %v935 = vmul.f32 %v934, %v933
      %v936 = vmul.f32 0.5, %v935
      %v937 = vsub.f32 1.5, %v936
      %v938 = vmul.f32 %v933, %v937
      %vm939 = vweird.f32 %v931
      %vm940 = vweird.f32 %v933
      %vm941 = vmor %vm939, %vm940
      %v942 = vsel %vm941, %v933, %v938
      %v943 = vrsqrt.pop %v932
      %v944 = vmul.f32 %v943, %v932
      %v945 = vmul.f32 %v944, %v943
      %v946 = vmul.f32 0.5, %v945
      %v947 = vsub.f32 1.5, %v946
      %v948 = vmul.f32 %v943, %v947
      %vm949 = vweird.f32 %v932
      %vm950 = vweird.f32 %v943
      %vm951 = vmor %vm949, %vm950
      %v952 = vsel %vm951, %v943, %v948
      %v953 = vmul.f32 %v919, %v942
      %v954 = vmul.f32 %v920, %v952
      %v956 = vperm.slane %v909, 0
      %v958 = vmul.f32 %v953, %v956
      %v959 = vmul.f32 %v954, %v956
      %v961 = vperm.slane %v910, 0
      %v963 = vadd.f32 %v958, %v961
      %v964 = vadd.f32 %v959, %v961
      %v965 = vpack.c.bf16 %v964, %v963
      %v966 = vld [vmem:[%s9] sm:$0xf]
      %v967 = vld [vmem:[%s9 + $0x4] sm:$0xf]
      %v968 = vld [vmem:[%s9 + $0x8] sm:$0xf]
      %v969 = vld [vmem:[%s9 + $0xc] sm:$0xf]
      %v970 = vld [vmem:[%s10] sm:$0x1]
      %v972 = vperm.slane %v970, 0
      %v978 = vunpack.c.l.b16 %v966
      %v979 = vunpack.c.l.b16 %v967
      %v980 = vunpack.c.l.b16 %v968
      %v981 = vunpack.c.l.b16 %v969
      %v982 = vpack.c.b16 %v979, %v978
      %v983 = vpack.c.b16 %v981, %v980
      %v987 = vsel %vm448, %v965, 0
      %989 = vmatpush.bf16.msra.mxu0 0
      %990 = vmatpush.bf16.msra.mxu0 0
      %991 = vmatpush.bf16.msra.mxu0 0
      %992 = vmatpush.bf16.msra.mxu0 0
      %993 = vmatpush.bf16.msra.mxu0 0
      %994 = vmatpush.bf16.msra.mxu0 0
      %995 = vmatpush.bf16.msra.mxu0 %v983
      %996 = vmatpush.bf16.msra.mxu0 %v982
      %997 = vmatmul.bf16.gmra.mxu0 %v987
      %v998 = vpop.f32.mrf.mxu0
      %v999 = vadd.f32 %v972, %v998
      %v1000 = vpop.f32.mrf.mxu0
      %v1001 = vadd.f32 %v972, %v1000
      %1002 = vdwg.mxu0
      %v1003 = vmul.f32 %v999, 0.5
      %v1004 = vmul.f32 %v1001, 0.5
      %v1005 = vmul.f32 %v999, 0.70710677
      %v1006 = vmul.f32 %v1001, 0.70710677
      %v1007 = vmul.f32 %v1005, %v1005
      %v1008 = vmin.f32 16.0, %v1007
      %v1009 = vmul.f32 %v1008, 2.1237322e-06
      %v1010 = vadd.f32 %v1009, 0.00028619796
      %v1011 = vmul.f32 %v1008, %v1010
      %v1012 = vadd.f32 %v1011, 0.0036580483
      %v1013 = vmul.f32 %v1008, %v1012
      %v1014 = vadd.f32 %v1013, 0.05243302
      %v1015 = vmul.f32 %v1008, %v1014
      %v1016 = vadd.f32 %v1015, 0.18741608
      %v1017 = vmul.f32 %v1008, %v1016
      %v1018 = vadd.f32 %v1017, 1.1283791
      %v1019 = vmul.f32 %v1005, %v1018
      %v1020 = vmul.f32 %v1008, 3.8918573e-05
      %v1021 = vadd.f32 %v1020, 0.001143296
      %v1022 = vmul.f32 %v1008, %v1021
      %v1023 = vadd.f32 %v1022, 0.014752088
      %v1024 = vmul.f32 %v1008, %v1023
      %v1025 = vadd.f32 %v1024, 0.112945676
      %v1026 = vmul.f32 %v1008, %v1025
      %v1027 = vadd.f32 %v1026, 0.4994258
      %v1028 = vmul.f32 %v1008, %v1027
      %v1029 = vadd.f32 %v1028, 1.0
      %v1030 = vrcp.pop %v1029
      %v1031 = vmul.f32 %v1029, %v1030
      %v1032 = vsub.f32 1.0, %v1031
      %v1033 = vmul.f32 %v1030, %v1032
      %v1034 = vadd.f32 %v1030, %v1033
      %vm1035 = vweird.f32 %v1029
      %vm1036 = vweird.f32 %v1030
      %vm1037 = vmor %vm1035, %vm1036
      %v1038 = vsel %vm1037, %v1030, %v1034
      %v1039 = vand.u32 2147483647, %v1029
      %vm1040 = vcmp.eq.f32.partialorder %v1039, 8.507059e+37
      %v1041 = vand.u32 %v1029, 2147483648
      %v1042 = vor.u32 1.1754944e-38, %v1041
      %v1043 = vsel %vm1040, %v1042, %v1038
      %v1044 = vmul.f32 %v1019, %v1043
      %v1045 = vmin.f32 %v1044, 1.0
      %v1046 = vmax.f32 %v1045, -1.0
      %v1047 = vmul.f32 %v1006, %v1006
      %v1048 = vmin.f32 16.0, %v1047
      %v1049 = vmul.f32 %v1048, 2.1237322e-06
      %v1050 = vadd.f32 %v1049, 0.00028619796
      %v1051 = vmul.f32 %v1048, %v1050
      %v1052 = vadd.f32 %v1051, 0.0036580483
      %v1053 = vmul.f32 %v1048, %v1052
      %v1054 = vadd.f32 %v1053, 0.05243302
      %v1055 = vmul.f32 %v1048, %v1054
      %v1056 = vadd.f32 %v1055, 0.18741608
      %v1057 = vmul.f32 %v1048, %v1056
      %v1058 = vadd.f32 %v1057, 1.1283791
      %v1059 = vmul.f32 %v1006, %v1058
      %v1060 = vmul.f32 %v1048, 3.8918573e-05
      %v1061 = vadd.f32 %v1060, 0.001143296
      %v1062 = vmul.f32 %v1048, %v1061
      %v1063 = vadd.f32 %v1062, 0.014752088
      %v1064 = vmul.f32 %v1048, %v1063
      %v1065 = vadd.f32 %v1064, 0.112945676
      %v1066 = vmul.f32 %v1048, %v1065
      %v1067 = vadd.f32 %v1066, 0.4994258
      %v1068 = vmul.f32 %v1048, %v1067
      %v1069 = vadd.f32 %v1068, 1.0
      %v1070 = vrcp.pop %v1069
      %v1071 = vmul.f32 %v1069, %v1070
      %v1072 = vsub.f32 1.0, %v1071
      %v1073 = vmul.f32 %v1070, %v1072
      %v1074 = vadd.f32 %v1070, %v1073
      %vm1075 = vweird.f32 %v1069
      %vm1076 = vweird.f32 %v1070
      %vm1077 = vmor %vm1075, %vm1076
      %v1078 = vsel %vm1077, %v1070, %v1074
      %v1079 = vand.u32 2147483647, %v1069
      %vm1080 = vcmp.eq.f32.partialorder %v1079, 8.507059e+37
      %v1081 = vand.u32 %v1069, 2147483648
      %v1082 = vor.u32 1.1754944e-38, %v1081
      %v1083 = vsel %vm1080, %v1082, %v1078
      %v1084 = vmul.f32 %v1059, %v1083
      %v1085 = vmin.f32 %v1084, 1.0
      %v1086 = vmax.f32 %v1085, -1.0
      %v1087 = vadd.f32 %v1046, 1.0
      %v1088 = vadd.f32 %v1086, 1.0
      %v1089 = vmul.f32 %v1003, %v1087
      %v1090 = vmul.f32 %v1004, %v1088
      %v1091 = vpack.c.bf16 %v1090, %v1089
      %v1092 = vld [vmem:[%s11] sm:$0xf]
      %v1093 = vld [vmem:[%s11 + $0x4] sm:$0xf]
      %v1094 = vld [vmem:[%s11 + $0x8] sm:$0xf]
      %v1095 = vld [vmem:[%s11 + $0xc] sm:$0xf]
      %v1096 = vld [vmem:[%s11 + $0x10] sm:$0xf]
      %v1097 = vld [vmem:[%s11 + $0x14] sm:$0xf]
      %v1098 = vld [vmem:[%s11 + $0x18] sm:$0xf]
      %v1099 = vld [vmem:[%s11 + $0x1c] sm:$0xf]
      %v1100 = vld [vmem:[%s11 + $0x20] sm:$0xf]
      %v1101 = vld [vmem:[%s11 + $0x24] sm:$0xf]
      %v1102 = vld [vmem:[%s11 + $0x28] sm:$0xf]
      %v1103 = vld [vmem:[%s11 + $0x2c] sm:$0xf]
      %v1104 = vld [vmem:[%s11 + $0x30] sm:$0xf]
      %v1105 = vld [vmem:[%s11 + $0x34] sm:$0xf]
      %v1106 = vld [vmem:[%s11 + $0x38] sm:$0xf]
      %v1107 = vld [vmem:[%s11 + $0x3c] sm:$0xf]
      %v1124 = vunpack.c.l.b16 %v1092
      %v1125 = vunpack.c.l.b16 %v1093
      %v1126 = vunpack.c.l.b16 %v1094
      %v1127 = vunpack.c.l.b16 %v1095
      %v1128 = vunpack.c.l.b16 %v1096
      %v1129 = vunpack.c.l.b16 %v1097
      %v1130 = vunpack.c.l.b16 %v1098
      %v1131 = vunpack.c.l.b16 %v1099
      %v1132 = vunpack.c.l.b16 %v1100
      %v1133 = vunpack.c.l.b16 %v1101
      %v1134 = vunpack.c.l.b16 %v1102
      %v1135 = vunpack.c.l.b16 %v1103
      %v1136 = vunpack.c.l.b16 %v1104
      %v1137 = vunpack.c.l.b16 %v1105
      %v1138 = vunpack.c.l.b16 %v1106
      %v1139 = vunpack.c.l.b16 %v1107
      %v1140 = vpack.c.b16 %v1125, %v1124
      %v1141 = vpack.c.b16 %v1127, %v1126
      %v1142 = vpack.c.b16 %v1129, %v1128
      %v1143 = vpack.c.b16 %v1131, %v1130
      %v1144 = vpack.c.b16 %v1133, %v1132
      %v1145 = vpack.c.b16 %v1135, %v1134
      %v1146 = vpack.c.b16 %v1137, %v1136
      %v1147 = vpack.c.b16 %v1139, %v1138
      %1156 = vmatpush.bf16.msra.mxu0 %v1147
      %1157 = vmatpush.bf16.msra.mxu0 %v1146
      %1158 = vmatpush.bf16.msra.mxu0 %v1145
      %1159 = vmatpush.bf16.msra.mxu0 %v1144
      %1160 = vmatpush.bf16.msra.mxu0 %v1143
      %1161 = vmatpush.bf16.msra.mxu0 %v1142
      %1162 = vmatpush.bf16.msra.mxu0 %v1141
      %1163 = vmatpush.bf16.msra.mxu0 %v1140
      %1164 = vmatmul.bf16.gmra.mxu0 %v1091
      %v1165 = vpop.f32.mrf.mxu0
      %v1166 = vadd.f32 0.0, %v1165
      %v1167 = vpop.f32.mrf.mxu0
      %v1168 = vadd.f32 0.0, %v1167
      %1169 = vdwg.mxu0
      %v1170 = vadd.f32 %v907, %v1166
      %v1171 = vadd.f32 %v908, %v1168
      %v1172 = vld [vmem:[%s12] sm:$0x1]
      %v1174 = vperm.slane %v1172, 0
      %v1176 = vadd.f32 %v1170, %v1174
      %v1177 = vadd.f32 %v1171, %v1174
      %v1178 = vpack.c.bf16 %v1176, %v1176
      %v1179 = vpack.c.bf16 %v1177, %v1177
      %vm1180 = vcmask 257024
      %1181 = vst.msk [vmem:[%s440] sm:$0xf] %vm1180, %v1178
      %1182 = vst.msk [vmem:[%s440 + $0x4] sm:$0xf] %vm1180, %v1179
      %p1183 = scmp.lt.s32.totalorder %s24, 1
      %s1184 = scalar_select %p1183, %s24, 1
      %s1185 = smul.addr %s1184, 2
      %s1186 = smul.addr %s1185, 4
      %s1187 = scalar_lea.vmem %s13, %s1186
      // Predicated region
      $region73: #{m2d_forward.14} parent=71 // pred_check
        %p1188 = pneg %p320
      $region74: #{m2d_forward.14} parent=71 // pred_check_branch
        %1190 = sbr.rel (%p1188) target = $region76
      $region75: #{m2d_forward.14} parent=71 // pred_region
        _
      $region76: #{m2d_forward.14} parent=71 // pred_fallthru
        _
    $region72: #{m2d_forward.14} parent=5 // pred_fallthru
      _
    %p1191 = scmp.le.s32.totalorder 2, %s19
    // Predicated region
    $region77: #{m2d_forward.14} parent=5 // pred_check
      %p1192 = pneg %p1191
    $region78: #{m2d_forward.14} parent=5 // pred_check_branch
      %1194 = sbr.rel (%p1192) target = $region80
    $region79: #{m2d_forward.14} parent=5 // pred_region
      %s1195 = ssub.s32 %s19, 2
      // Predicated region
      $region81: #{m2d_forward.14} parent=79 // pred_check
        %p1196 = pneg %p326
      $region82: #{m2d_forward.14} parent=79 // pred_check_branch
        %1198 = sbr.rel (%p1196) target = $region84
      $region83: #{m2d_forward.14} parent=79 // pred_region
        %p1199 = scmp.lt.s32.totalorder %s25, 1
        %s1200 = scalar_select %p1199, %s25, 1
        %s1201 = smul.addr %s1200, 2
        %s1202 = smul.addr %s1201, 4
        %s1203 = scalar_lea.vmem %s13, %s1202
      $region84: #{m2d_forward.14} parent=79 // pred_fallthru
        _
    $region80: #{m2d_forward.14} parent=5 // pred_fallthru
      _
  $region6: #{m2d_forward.14} parent=0 // loop_footer
    %s23 = sadd.s32 1, %s19
  $region7: #{m2d_forward.14} parent=0 // loop_footer_branch
    %18 = sbr.rel target = $region3
  $region8: #{m2d_forward.14} parent=0 // loop_exit
    _

</llo_original>
